<compile_context>
chip_gen: v7x
topology: tpu7x:2x2x1
jax: 0.10.0
libtpu: 0.0.40
codegen_flags: <defaults>
</compile_context>

<pallas_src>
import functools
import math

import jax
import jax.numpy as jnp
from jax.experimental import pallas as pl
from jax.experimental.pallas import tpu as pltpu


# ----------------------------- device-dependent knobs -----------------------------

def _pick_vmem_limit():
    try:
        kind = jax.devices()[0].device_kind.lower()
    except Exception:
        kind = ""
    if ("v5" in kind) or ("v6" in kind):
        return 100 * 1024 * 1024          # 128 MiB physical -> generous limit
    return 48 * 1024 * 1024               # v7x (64 MiB physical) / unknown: headroom


def _pick_batch_block(B):
    # Bigger Bb amortizes per-step overhead and raises matmul M, but keep
    # B//Bb >= 2 so the "parallel" batch axis can feed both TCs on v7x.
    for bb in (4, 2):
        if B % bb == 0 and B // bb >= 2:
            return bb
    return 1


# ----------------------------- patch-embed matmul -----------------------------

def _linear_kernel(x_ref, w_ref, b_ref, o_ref):
    x = x_ref[...].astype(jnp.bfloat16)
    y = jnp.dot(x, w_ref[...], preferred_element_type=jnp.float32)
    o_ref[...] = (y + b_ref[...].astype(jnp.float32)).astype(o_ref.dtype)


def linear(x2d, w, b):
    """x2d: (M, K) bf16/f32, w: (K, N) bf16, b: (N,) f32 -> (M, N) f32."""
    M, K = x2d.shape
    N = w.shape[1]
    tm = 256
    Mp = ((M + tm - 1) // tm) * tm
    if Mp != M:
        x2d = jnp.pad(x2d, ((0, Mp - M), (0, 0)))
    out = pl.pallas_call(
        _linear_kernel,
        out_shape=jax.ShapeDtypeStruct((Mp, N), jnp.float32),
        grid=(Mp // tm,),
        in_specs=[pl.BlockSpec((tm, K), lambda i: (i, 0)),
                  pl.BlockSpec((K, N), lambda i: (0, 0)),
                  pl.BlockSpec((1, N), lambda i: (0, 0))],
        out_specs=pl.BlockSpec((tm, N), lambda i: (i, 0)),
        compiler_params=pltpu.CompilerParams(
            dimension_semantics=("parallel",)),
    )(x2d, w, b.reshape(1, N))
    return out[:M] if Mp != M else out


# ----------------------------- final LN + classifier head -----------------------------

def _head_kernel(x_ref, g_ref, b_ref, w_ref, hb_ref, o_ref, *, eps):
    x = x_ref[...].astype(jnp.float32)
    mu = jnp.mean(x, axis=-1, keepdims=True)
    xc = x - mu
    var = jnp.mean(xc * xc, axis=-1, keepdims=True)
    y = xc * jax.lax.rsqrt(var + eps)
    y = y * g_ref[...].astype(jnp.float32) + b_ref[...].astype(jnp.float32)
    logits = jnp.dot(y.astype(jnp.bfloat16), w_ref[...],
                     preferred_element_type=jnp.float32)
    o_ref[...] = (logits + hb_ref[...].astype(jnp.float32)).astype(o_ref.dtype)


def head_forward(cls_out, params, eps=1e-6):
    B, D = cls_out.shape
    num_classes = params["head_w"].shape[1]
    Np = ((num_classes + 127) // 128) * 128     # lane-dense logits store
    w = params["head_w"]
    hb = params["head_b"].reshape(1, num_classes)
    if Np != num_classes:
        w = jnp.pad(w, ((0, 0), (0, Np - num_classes)))
        hb = jnp.pad(hb, ((0, 0), (0, Np - num_classes)))
    kern = functools.partial(_head_kernel, eps=eps)
    logits = pl.pallas_call(
        kern,
        out_shape=jax.ShapeDtypeStruct((B, Np), jnp.float32),
        grid=(1,),
        in_specs=[pl.BlockSpec((B, D), lambda i: (0, 0)),
                  pl.BlockSpec((1, D), lambda i: (0, 0)),
                  pl.BlockSpec((1, D), lambda i: (0, 0)),
                  pl.BlockSpec((D, Np), lambda i: (0, 0)),
                  pl.BlockSpec((1, Np), lambda i: (0, 0))],
        out_specs=pl.BlockSpec((B, Np), lambda i: (0, 0)),
    )(cls_out, params["norm_g"].reshape(1, D), params["norm_b"].reshape(1, D),
      w, hb)
    return logits[:, :num_classes]


# ----------------------------- fused transformer kernel -----------------------------

def _fused_blocks_kernel(x_in_ref, lnp_ref, qkv_w_ref, qkv_b_ref, proj_w_ref,
                         fc1_w_ref, fc1_b_ref, fc2_w_ref, out_ref,
                         *, Bb, S_pad, S, num_heads, eps):
    """One program = Bb batch elements, one transformer block (depth iterated
    by the inner grid axis).  Weights are resident in VMEM (constant block
    index) and sliced per layer with l = program_id(1).  The residual stream
    lives in out_ref (VMEM) for the whole depth loop."""
    l = pl.program_id(1)

    @pl.when(l == 0)
    def _init():
        out_ref[...] = x_in_ref[...]

    M, D = out_ref.shape                       # (Bb*S_pad, D)
    Dh = D // num_heads
    scale = Dh ** -0.5

    x = out_ref[...]                           # (Bb*S_pad, D) f32

    lnp = lnp_ref[l].astype(jnp.float32)       # (8, D) packed per-layer params
    ln1_g, ln1_b = lnp[0:1], lnp[1:2]
    ln2_g, ln2_b = lnp[2:3], lnp[3:4]
    proj_b, fc2_b = lnp[4:5], lnp[5:6]

    def ln(z, g, b):
        mu = jnp.mean(z, axis=-1, keepdims=True)
        zc = z - mu
        var = jnp.mean(zc * zc, axis=-1, keepdims=True)
        return zc * jax.lax.rsqrt(var + eps) * g + b

    # ---------------- attention branch: x += proj(attn(LN1(x))) ----------------
    h = ln(x, ln1_g, ln1_b)
    qkv = jnp.dot(h.astype(jnp.bfloat16), qkv_w_ref[l],
                  preferred_element_type=jnp.float32)
    qkv = qkv + qkv_b_ref[l].astype(jnp.float32)            # (M, 3D)

    # (1, S_pad) additive key mask for zero-padded sequence positions.
    col = jax.lax.broadcasted_iota(jnp.int32, (1, S_pad), 1)
    kmask = jnp.where(col < S, 0.0, -1e30).astype(jnp.float32)

    contract_last = (((1,), (1,)), ((), ()))                 # q.k on last dims, no k.T
    # TODO(synk): restructure per-head Dh-wide slices into one head-batched
    # dot_general (pltpu.einshape layout) to avoid lane-misaligned slices.
    rows = []
    for bi in range(Bb):
        r0 = bi * S_pad
        heads = []
        for hh in range(num_heads):
            q = qkv[r0:r0 + S_pad, hh * Dh:(hh + 1) * Dh].astype(jnp.bfloat16)
            k = qkv[r0:r0 + S_pad, D + hh * Dh:D + (hh + 1) * Dh].astype(jnp.bfloat16)
            v = qkv[r0:r0 + S_pad, 2 * D + hh * Dh:2 * D + (hh + 1) * Dh].astype(jnp.bfloat16)
            s = jax.lax.dot_general(q, k, contract_last,
                                    preferred_element_type=jnp.float32) * scale
            s = s + kmask
            s = s - jnp.max(s, axis=-1, keepdims=True)
            p = jnp.exp(s)
            p = p * pl.reciprocal(jnp.sum(p, axis=-1, keepdims=True), approx=True)
            heads.append(jnp.dot(p.astype(jnp.bfloat16), v,
                                 preferred_element_type=jnp.float32))
        rows.append(jnp.concatenate(heads, axis=-1))
    a = jnp.concatenate(rows, axis=0) if Bb > 1 else rows[0]   # (M, D) f32

    x = x + jnp.dot(a.astype(jnp.bfloat16), proj_w_ref[l],
                    preferred_element_type=jnp.float32) + proj_b

    # ---------------- MLP branch: x += fc2(GELU(fc1(LN2(x)))) ----------------
    h = ln(x, ln2_g, ln2_b)
    h = jnp.dot(h.astype(jnp.bfloat16), fc1_w_ref[l],
                preferred_element_type=jnp.float32) + fc1_b_ref[l].astype(jnp.float32)
    h = 0.5 * h * (1.0 + jax.lax.erf(h * (1.0 / math.sqrt(2.0))))   # exact GELU (timm)
    h = jnp.dot(h.astype(jnp.bfloat16), fc2_w_ref[l],
                preferred_element_type=jnp.float32) + fc2_b

    out_ref[...] = x + h


def fused_transformer(params, xs_flat, *, B, Bb, S_pad, S, num_heads, depth,
                      vmem_limit):
    M, D = xs_flat.shape
    hidden = params["fc1_w"].shape[-1]
    kern = functools.partial(_fused_blocks_kernel, Bb=Bb, S_pad=S_pad, S=S,
                             num_heads=num_heads, eps=1e-6)

    def resident(shape):
        nd = len(shape)
        # Full-array block, constant index -> fetched once, stays in VMEM.
        return pl.BlockSpec(shape, lambda b, l, _nd=nd: (0,) * _nd)

    x_spec = pl.BlockSpec((Bb * S_pad, D), lambda b, l: (b, 0))

    return pl.pallas_call(
        kern,
        out_shape=jax.ShapeDtypeStruct((M, D), jnp.float32),
        grid=(B // Bb, depth),
        in_specs=[
            x_spec,
            resident((depth, 8, D)),               # packed LN g/b + proj/fc2 bias
            resident((depth, D, 3 * D)),           # qkv w
            resident((depth, 1, 3 * D)),           # qkv b
            resident((depth, D, D)),               # proj w
            resident((depth, D, hidden)),          # fc1 w
            resident((depth, 1, hidden)),          # fc1 b
            resident((depth, hidden, D)),          # fc2 w
        ],
        out_specs=x_spec,
        compiler_params=pltpu.CompilerParams(
            dimension_semantics=("parallel", "arbitrary"),
            vmem_limit_bytes=vmem_limit),
    )(xs_flat,
      params["ln_pack"], params["qkv_w"], params["qkv_b"], params["proj_w"],
      params["fc1_w"], params["fc1_b"], params["fc2_w"])


# ----------------------------- parameter init -----------------------------

def init_vit_params(key, *, patch_size, in_chans, embed_dim, depth, num_heads,
                    mlp_ratio, num_classes, num_patches):
    del num_heads  # shapes only depend on embed_dim
    hidden = int(embed_dim * mlp_ratio)
    D = embed_dim
    keys = iter(jax.random.split(key, 16))

    def wbf16(k, shape, scale=0.02):
        return (scale * jax.random.normal(k, shape, dtype=jnp.float32)).astype(jnp.bfloat16)

    def wf32(k, shape, scale=0.02):
        return scale * jax.random.normal(k, shape, dtype=jnp.float32)

    # Packed per-layer small params, rows:
    #   0: ln1_gamma, 1: ln1_beta, 2: ln2_gamma, 3: ln2_beta,
    #   4: attn-proj bias, 5: mlp-fc2 bias, 6-7: padding (sublane alignment).
    ln_pack = jnp.zeros((depth, 8, D), jnp.float32)
    ln_pack = ln_pack.at[:, 0, :].set(1.0).at[:, 2, :].set(1.0)

    params = {
        # PatchEmbed conv (D, C, p, p) flattened to (C*p*p, D), weight in bf16
        "patch_w": wbf16(next(keys), (in_chans * patch_size * patch_size, D)),
        "patch_b": jnp.zeros((D,), jnp.float32),
        "cls_token": wf32(next(keys), (1, 1, D)),
        "pos_embed": wf32(next(keys), (1, num_patches + 1, D)),
        "norm_g": jnp.ones((D,), jnp.float32),
        "norm_b": jnp.zeros((D,), jnp.float32),
        "head_w": wbf16(next(keys), (D, num_classes)),
        "head_b": jnp.zeros((num_classes,), jnp.float32),
        # stacked per-block parameters (leading depth axis, VMEM-resident)
        "ln_pack": ln_pack,
        "qkv_w": wbf16(next(keys), (depth, D, 3 * D)),
        "qkv_b": jnp.zeros((depth, 1, 3 * D), jnp.float32),
        "proj_w": wbf16(next(keys), (depth, D, D)),
        "fc1_w": wbf16(next(keys), (depth, D, hidden)),
        "fc1_b": jnp.zeros((depth, 1, hidden), jnp.float32),
        "fc2_w": wbf16(next(keys), (depth, hidden, D)),
    }
    return params


# ------------------------------ forward pass -------------------------------

def vit_forward(params, x, *, patch_size, num_heads):
    B, C, H, W = x.shape
    p = patch_size
    gh, gw = H // p, W // p
    N = gh * gw
    D = params["patch_w"].shape[1]
    depth = params["qkv_w"].shape[0]
    S = N + 1
    S_pad = ((S + 127) // 128) * 128     # lane-aligned seq padding (577 -> 640)

    # --- PatchEmbed: Conv2d(k=p, s=p) as a matmul over flattened patches ---
    patches = x.reshape(B, C, gh, p, gw, p).transpose(0, 2, 4, 1, 3, 5)
    patches = patches.reshape(B * N, C * p * p).astype(jnp.bfloat16)
    tok = linear(patches, params["patch_w"], params["patch_b"]).reshape(B, N, D)

    # --- cls token + position embedding (dropouts are identity at eval) ---
    cls = jnp.broadcast_to(params["cls_token"], (B, 1, D)).astype(tok.dtype)
    xs = jnp.concatenate([cls, tok], axis=1) + params["pos_embed"]    # (B, S, D)
    xs = jnp.pad(xs, ((0, 0), (0, S_pad - S), (0, 0)))                # zero pad seq
    xs_flat = xs.reshape(B * S_pad, D).astype(jnp.float32)

    # --- entire transformer stack in one fused Pallas kernel ---
    Bb = _pick_batch_block(B)
    out = fused_transformer(params, xs_flat, B=B, Bb=Bb, S_pad=S_pad, S=S,
                            num_heads=num_heads, depth=depth,
                            vmem_limit=_pick_vmem_limit())

    # --- final LN + cls pooling + head (one small fused kernel) ---
    cls_out = out.reshape(B, S_pad, D)[:, 0, :]                       # (B, D)
    return head_forward(cls_out, params)


# ---------------------------------- main ------------------------------------

if __name__ == "__main__":
    # Small config consistent with the ViT-Tiny structure (real model:
    # img=384, patch=16, embed=192, heads=3, depth=12, classes=1000).
    cfg = dict(
        img_size=64,
        patch_size=16,
        in_chans=3,
        embed_dim=48,      # divisible by 3 heads, like ViT-Tiny's 192
        depth=2,
        num_heads=3,
        mlp_ratio=4.0,
        num_classes=10,
    )
    num_patches = (cfg["img_size"] // cfg["patch_size"]) ** 2

    key = jax.random.PRNGKey(0)
    pkey, xkey = jax.random.split(key)
    params = init_vit_params(
        pkey,
        patch_size=cfg["patch_size"],
        in_chans=cfg["in_chans"],
        embed_dim=cfg["embed_dim"],
        depth=cfg["depth"],
        num_heads=cfg["num_heads"],
        mlp_ratio=cfg["mlp_ratio"],
        num_classes=cfg["num_classes"],
        num_patches=num_patches,
    )

    x = jax.random.normal(
        xkey, (2, cfg["in_chans"], cfg["img_size"], cfg["img_size"]),
        dtype=jnp.float32)  # NCHW, like the PyTorch module

    fwd = jax.jit(functools.partial(vit_forward,
                                    patch_size=cfg["patch_size"],
                                    num_heads=cfg["num_heads"]))
    logits = fwd(params, x)
    logits = jax.block_until_ready(logits)
    assert logits.shape == (2, cfg["num_classes"])
    assert bool(jnp.all(jnp.isfinite(logits)))
    print("KERNEL_OK")
</pallas_src>

<mosaic_0001>
module attributes {stable_mosaic.version = 11 : i64} {
  func.func @_linear_kernel(%arg0: i32, %arg1: memref<256x768xbf16, #tpu.memory_space<vmem>>, %arg2: memref<768x48xbf16, #tpu.memory_space<vmem>>, %arg3: memref<1x48xf32, #tpu.memory_space<vmem>>, %arg4: memref<256x48xf32, #tpu.memory_space<vmem>>) attributes {dimension_semantics = [#tpu.dimension_semantics<parallel>], iteration_bounds = array<i64: 1>, scalar_prefetch = 0 : i64, scratch_operands = 0 : i64, tpu.core_type = #tpu.core_type<tc>, window_params = [{transform_indices = @transform_0, window_bounds = array<i64: 256, 768>}, {pipeline_mode = #tpu.pipeline_mode<synchronous>, transform_indices = @transform_1, window_bounds = array<i64: 768, 48>}, {pipeline_mode = #tpu.pipeline_mode<synchronous>, transform_indices = @transform_2, window_bounds = array<i64: 1, 48>}, {transform_indices = @transform_3, window_bounds = array<i64: 256, 48>}]} {
    %c0 = arith.constant 0 : index
    %c0_0 = arith.constant 0 : index
    %0 = vector.load %arg1[%c0, %c0_0] : memref<256x768xbf16, #tpu.memory_space<vmem>>, vector<256x768xbf16>
    %c0_1 = arith.constant 0 : index
    %c0_2 = arith.constant 0 : index
    %1 = vector.load %arg2[%c0_1, %c0_2] : memref<768x48xbf16, #tpu.memory_space<vmem>>, vector<768x48xbf16>
    %cst = arith.constant dense<0.000000e+00> : vector<256x48xf32>
    %2 = tpu.matmul %0, %1, %cst {dimension_numbers = #tpu.dot_dimension_numbers<[1], [0], [0], [1], [0, 0, 1, 1], [], []>} : vector<256x768xbf16>, vector<768x48xbf16>, vector<256x48xf32> -> vector<256x48xf32>
    %c0_3 = arith.constant 0 : index
    %c0_4 = arith.constant 0 : index
    %3 = vector.load %arg3[%c0_3, %c0_4] : memref<1x48xf32, #tpu.memory_space<vmem>>, vector<1x48xf32>
    %4 = vector.broadcast %3 : vector<1x48xf32> to vector<256x48xf32>
    %5 = arith.addf %2, %4 : vector<256x48xf32>
    %c0_5 = arith.constant 0 : index
    %c0_6 = arith.constant 0 : index
    %6 = vector.load %arg4[%c0_5, %c0_6] : memref<256x48xf32, #tpu.memory_space<vmem>>, vector<256x48xf32>
    tpu.vector_store %arg4[%c0_5, %c0_6], %5 {strides = array<i32>} : memref<256x48xf32, #tpu.memory_space<vmem>>, vector<256x48xf32>,
    return
  }
  func.func @transform_0(%arg0: i32) -> (i32, i32) {
    %c0_i32 = arith.constant 0 : i32
    %c0_i32_0 = arith.constant 0 : i32
    return %arg0, %c0_i32 : i32, i32
  }
  func.func @transform_1(%arg0: i32) -> (i32, i32) {
    %c0_i32 = arith.constant 0 : i32
    %c0_i32_0 = arith.constant 0 : i32
    %c0_i32_1 = arith.constant 0 : i32
    return %c0_i32, %c0_i32_0 : i32, i32
  }
  func.func @transform_2(%arg0: i32) -> (i32, i32) {
    %c0_i32 = arith.constant 0 : i32
    %c0_i32_0 = arith.constant 0 : i32
    %c0_i32_1 = arith.constant 0 : i32
    return %c0_i32, %c0_i32_0 : i32, i32
  }
  func.func @transform_3(%arg0: i32) -> (i32, i32) {
    %c0_i32 = arith.constant 0 : i32
    %c0_i32_0 = arith.constant 0 : i32
    return %arg0, %c0_i32 : i32, i32
  }
}

module attributes {stable_mosaic.version = 11 : i64} {
  func.func @_head_kernel(%arg0: i32, %arg1: memref<2x48xf32, #tpu.memory_space<vmem>>, %arg2: memref<1x48xf32, #tpu.memory_space<vmem>>, %arg3: memref<1x48xf32, #tpu.memory_space<vmem>>, %arg4: memref<48x128xbf16, #tpu.memory_space<vmem>>, %arg5: memref<1x128xf32, #tpu.memory_space<vmem>>, %arg6: memref<2x128xf32, #tpu.memory_space<vmem>>) attributes {dimension_semantics = [#tpu.dimension_semantics<arbitrary>], iteration_bounds = array<i64: 1>, scalar_prefetch = 0 : i64, scratch_operands = 0 : i64, tpu.core_type = #tpu.core_type<tc>, window_params = [{pipeline_mode = #tpu.pipeline_mode<synchronous>, transform_indices = @transform_0, window_bounds = array<i64: 2, 48>}, {pipeline_mode = #tpu.pipeline_mode<synchronous>, transform_indices = @transform_1, window_bounds = array<i64: 1, 48>}, {pipeline_mode = #tpu.pipeline_mode<synchronous>, transform_indices = @transform_2, window_bounds = array<i64: 1, 48>}, {pipeline_mode = #tpu.pipeline_mode<synchronous>, transform_indices = @transform_3, window_bounds = array<i64: 48, 128>}, {pipeline_mode = #tpu.pipeline_mode<synchronous>, transform_indices = @transform_4, window_bounds = array<i64: 1, 128>}, {pipeline_mode = #tpu.pipeline_mode<synchronous>, transform_indices = @transform_5, window_bounds = array<i64: 2, 128>}]} {
    %c0 = arith.constant 0 : index
    %c0_0 = arith.constant 0 : index
    %0 = vector.load %arg1[%c0, %c0_0] : memref<2x48xf32, #tpu.memory_space<vmem>>, vector<2x48xf32>
    %cst = arith.constant dense<0.000000e+00> : vector<2xf32>
    %1 = vector.multi_reduction <add>, %0, %cst [1] : vector<2x48xf32> to vector<2xf32>
    %2 = vector.shape_cast %1 : vector<2xf32> to vector<2x1xf32>
    %cst_1 = arith.constant 4.800000e+01 : f32
    %3 = vector.broadcast %cst_1 : f32 to vector<2x1xf32>
    %4 = arith.divf %2, %3 : vector<2x1xf32>
    %5 = vector.broadcast %4 : vector<2x1xf32> to vector<2x48xf32>
    %6 = arith.subf %0, %5 : vector<2x48xf32>
    %7 = arith.mulf %6, %6 : vector<2x48xf32>
    %cst_2 = arith.constant dense<0.000000e+00> : vector<2xf32>
    %8 = vector.multi_reduction <add>, %7, %cst_2 [1] : vector<2x48xf32> to vector<2xf32>
    %9 = vector.shape_cast %8 : vector<2xf32> to vector<2x1xf32>
    %cst_3 = arith.constant 4.800000e+01 : f32
    %10 = vector.broadcast %cst_3 : f32 to vector<2x1xf32>
    %11 = arith.divf %9, %10 : vector<2x1xf32>
    %cst_4 = arith.constant 9.99999997E-7 : f32
    %12 = vector.broadcast %cst_4 : f32 to vector<2x1xf32>
    %13 = arith.addf %11, %12 : vector<2x1xf32>
    %14 = math.rsqrt %13 : vector<2x1xf32>
    %15 = vector.broadcast %14 : vector<2x1xf32> to vector<2x48xf32>
    %16 = arith.mulf %6, %15 : vector<2x48xf32>
    %c0_5 = arith.constant 0 : index
    %c0_6 = arith.constant 0 : index
    %17 = vector.load %arg2[%c0_5, %c0_6] : memref<1x48xf32, #tpu.memory_space<vmem>>, vector<1x48xf32>
    %18 = vector.broadcast %17 : vector<1x48xf32> to vector<2x48xf32>
    %19 = arith.mulf %16, %18 : vector<2x48xf32>
    %c0_7 = arith.constant 0 : index
    %c0_8 = arith.constant 0 : index
    %20 = vector.load %arg3[%c0_7, %c0_8] : memref<1x48xf32, #tpu.memory_space<vmem>>, vector<1x48xf32>
    %21 = vector.broadcast %20 : vector<1x48xf32> to vector<2x48xf32>
    %22 = arith.addf %19, %21 : vector<2x48xf32>
    %23 = arith.truncf %22 : vector<2x48xf32> to vector<2x48xbf16>
    %c0_9 = arith.constant 0 : index
    %c0_10 = arith.constant 0 : index
    %24 = vector.load %arg4[%c0_9, %c0_10] : memref<48x128xbf16, #tpu.memory_space<vmem>>, vector<48x128xbf16>
    %cst_11 = arith.constant dense<0.000000e+00> : vector<2x128xf32>
    %25 = tpu.matmul %23, %24, %cst_11 {dimension_numbers = #tpu.dot_dimension_numbers<[1], [0], [0], [1], [0, 0, 1, 1], [], []>} : vector<2x48xbf16>, vector<48x128xbf16>, vector<2x128xf32> -> vector<2x128xf32>
    %c0_12 = arith.constant 0 : index
    %c0_13 = arith.constant 0 : index
    %26 = vector.load %arg5[%c0_12, %c0_13] : memref<1x128xf32, #tpu.memory_space<vmem>>, vector<1x128xf32>
    %27 = vector.broadcast %26 : vector<1x128xf32> to vector<2x128xf32>
    %28 = arith.addf %25, %27 : vector<2x128xf32>
    %c0_14 = arith.constant 0 : index
    %c0_15 = arith.constant 0 : index
    %29 = vector.load %arg6[%c0_14, %c0_15] : memref<2x128xf32, #tpu.memory_space<vmem>>, vector<2x128xf32>
    tpu.vector_store %arg6[%c0_14, %c0_15], %28 {strides = array<i32>} : memref<2x128xf32, #tpu.memory_space<vmem>>, vector<2x128xf32>,
    return
  }
  func.func @transform_0(%arg0: i32) -> (i32, i32) {
    %c0_i32 = arith.constant 0 : i32
    %c0_i32_0 = arith.constant 0 : i32
    %c0_i32_1 = arith.constant 0 : i32
    return %c0_i32, %c0_i32_0 : i32, i32
  }
  func.func @transform_1(%arg0: i32) -> (i32, i32) {
    %c0_i32 = arith.constant 0 : i32
    %c0_i32_0 = arith.constant 0 : i32
    %c0_i32_1 = arith.constant 0 : i32
    return %c0_i32, %c0_i32_0 : i32, i32
  }
  func.func @transform_2(%arg0: i32) -> (i32, i32) {
    %c0_i32 = arith.constant 0 : i32
    %c0_i32_0 = arith.constant 0 : i32
    %c0_i32_1 = arith.constant 0 : i32
    return %c0_i32, %c0_i32_0 : i32, i32
  }
  func.func @transform_3(%arg0: i32) -> (i32, i32) {
    %c0_i32 = arith.constant 0 : i32
    %c0_i32_0 = arith.constant 0 : i32
    %c0_i32_1 = arith.constant 0 : i32
    return %c0_i32, %c0_i32_0 : i32, i32
  }
  func.func @transform_4(%arg0: i32) -> (i32, i32) {
    %c0_i32 = arith.constant 0 : i32
    %c0_i32_0 = arith.constant 0 : i32
    %c0_i32_1 = arith.constant 0 : i32
    return %c0_i32, %c0_i32_0 : i32, i32
  }
  func.func @transform_5(%arg0: i32) -> (i32, i32) {
    %c0_i32 = arith.constant 0 : i32
    %c0_i32_0 = arith.constant 0 : i32
    %c0_i32_1 = arith.constant 0 : i32
    return %c0_i32, %c0_i32_0 : i32, i32
  }
}

module attributes {stable_mosaic.version = 11 : i64} {
  func.func @_fused_blocks_kernel(%arg0: i32, %arg1: i32, %arg2: memref<128x48xf32, #tpu.memory_space<vmem>>, %arg3: memref<2x8x48xf32, #tpu.memory_space<vmem>>, %arg4: memref<2x48x144xbf16, #tpu.memory_space<vmem>>, %arg5: memref<2x1x144xf32, #tpu.memory_space<vmem>>, %arg6: memref<2x48x48xbf16, #tpu.memory_space<vmem>>, %arg7: memref<2x48x192xbf16, #tpu.memory_space<vmem>>, %arg8: memref<2x1x192xf32, #tpu.memory_space<vmem>>, %arg9: memref<2x192x48xbf16, #tpu.memory_space<vmem>>, %arg10: memref<128x48xf32, #tpu.memory_space<vmem>>) attributes {dimension_semantics = [#tpu.dimension_semantics<parallel>, #tpu.dimension_semantics<arbitrary>], iteration_bounds = array<i64: 2, 2>, scalar_prefetch = 0 : i64, scratch_operands = 0 : i64, tpu.core_type = #tpu.core_type<tc>, window_params = [{transform_indices = @transform_0, window_bounds = array<i64: 128, 48>}, {pipeline_mode = #tpu.pipeline_mode<synchronous>, transform_indices = @transform_1, window_bounds = array<i64: 2, 8, 48>}, {pipeline_mode = #tpu.pipeline_mode<synchronous>, transform_indices = @transform_2, window_bounds = array<i64: 2, 48, 144>}, {pipeline_mode = #tpu.pipeline_mode<synchronous>, transform_indices = @transform_3, window_bounds = array<i64: 2, 1, 144>}, {pipeline_mode = #tpu.pipeline_mode<synchronous>, transform_indices = @transform_4, window_bounds = array<i64: 2, 48, 48>}, {pipeline_mode = #tpu.pipeline_mode<synchronous>, transform_indices = @transform_5, window_bounds = array<i64: 2, 48, 192>}, {pipeline_mode = #tpu.pipeline_mode<synchronous>, transform_indices = @transform_6, window_bounds = array<i64: 2, 1, 192>}, {pipeline_mode = #tpu.pipeline_mode<synchronous>, transform_indices = @transform_7, window_bounds = array<i64: 2, 192, 48>}, {transform_indices = @transform_8, window_bounds = array<i64: 128, 48>}]} {
    %c0_i32 = arith.constant 0 : i32
    %0 = arith.cmpi eq, %arg1, %c0_i32 : i32
    %1 = arith.extui %0 : i1 to i32
    %c0_i32_0 = arith.constant 0 : i32
    %2 = arith.cmpi ne, %1, %c0_i32_0 : i32
    scf.if %2 {
      %c0_51 = arith.constant 0 : index
      %c0_52 = arith.constant 0 : index
      %174 = vector.load %arg2[%c0_51, %c0_52] : memref<128x48xf32, #tpu.memory_space<vmem>>, vector<128x48xf32>
      %c0_53 = arith.constant 0 : index
      %c0_54 = arith.constant 0 : index
      %175 = vector.load %arg10[%c0_53, %c0_54] : memref<128x48xf32, #tpu.memory_space<vmem>>, vector<128x48xf32>
      tpu.vector_store %arg10[%c0_53, %c0_54], %174 {strides = array<i32>} : memref<128x48xf32, #tpu.memory_space<vmem>>, vector<128x48xf32>,
    } else {
    }
    %c0 = arith.constant 0 : index
    %c0_1 = arith.constant 0 : index
    %3 = vector.load %arg10[%c0, %c0_1] : memref<128x48xf32, #tpu.memory_space<vmem>>, vector<128x48xf32>
    %4 = arith.index_cast %arg1 : i32 to index
    %c0_2 = arith.constant 0 : index
    %c0_3 = arith.constant 0 : index
    %5 = vector.load %arg3[%4, %c0_2, %c0_3] : memref<2x8x48xf32, #tpu.memory_space<vmem>>, vector<1x8x48xf32>
    %6 = vector.shape_cast %5 : vector<1x8x48xf32> to vector<8x48xf32>
    %7 = vector.extract_strided_slice %6 {offsets = [0, 0], sizes = [1, 48], strides = [1, 1]} : vector<8x48xf32> to vector<1x48xf32>
    %8 = vector.extract_strided_slice %6 {offsets = [1, 0], sizes = [1, 48], strides = [1, 1]} : vector<8x48xf32> to vector<1x48xf32>
    %9 = vector.extract_strided_slice %6 {offsets = [2, 0], sizes = [1, 48], strides = [1, 1]} : vector<8x48xf32> to vector<1x48xf32>
    %10 = vector.extract_strided_slice %6 {offsets = [3, 0], sizes = [1, 48], strides = [1, 1]} : vector<8x48xf32> to vector<1x48xf32>
    %11 = vector.extract_strided_slice %6 {offsets = [4, 0], sizes = [1, 48], strides = [1, 1]} : vector<8x48xf32> to vector<1x48xf32>
    %12 = vector.extract_strided_slice %6 {offsets = [5, 0], sizes = [1, 48], strides = [1, 1]} : vector<8x48xf32> to vector<1x48xf32>
    %cst = arith.constant dense<0.000000e+00> : vector<128xf32>
    %13 = vector.multi_reduction <add>, %3, %cst [1] : vector<128x48xf32> to vector<128xf32>
    %14 = vector.shape_cast %13 : vector<128xf32> to vector<128x1xf32>
    %cst_4 = arith.constant 4.800000e+01 : f32
    %15 = vector.broadcast %cst_4 : f32 to vector<128x1xf32>
    %16 = arith.divf %14, %15 : vector<128x1xf32>
    %17 = vector.broadcast %16 : vector<128x1xf32> to vector<128x48xf32>
    %18 = arith.subf %3, %17 : vector<128x48xf32>
    %19 = arith.mulf %18, %18 : vector<128x48xf32>
    %cst_5 = arith.constant dense<0.000000e+00> : vector<128xf32>
    %20 = vector.multi_reduction <add>, %19, %cst_5 [1] : vector<128x48xf32> to vector<128xf32>
    %21 = vector.shape_cast %20 : vector<128xf32> to vector<128x1xf32>
    %cst_6 = arith.constant 4.800000e+01 : f32
    %22 = vector.broadcast %cst_6 : f32 to vector<128x1xf32>
    %23 = arith.divf %21, %22 : vector<128x1xf32>
    %cst_7 = arith.constant 9.99999997E-7 : f32
    %24 = vector.broadcast %cst_7 : f32 to vector<128x1xf32>
    %25 = arith.addf %23, %24 : vector<128x1xf32>
    %26 = math.rsqrt %25 : vector<128x1xf32>
    %27 = vector.broadcast %26 : vector<128x1xf32> to vector<128x48xf32>
    %28 = arith.mulf %18, %27 : vector<128x48xf32>
    %29 = vector.broadcast %7 : vector<1x48xf32> to vector<128x48xf32>
    %30 = arith.mulf %28, %29 : vector<128x48xf32>
    %31 = vector.broadcast %8 : vector<1x48xf32> to vector<128x48xf32>
    %32 = arith.addf %30, %31 : vector<128x48xf32>
    %33 = arith.truncf %32 : vector<128x48xf32> to vector<128x48xbf16>
    %34 = arith.index_cast %arg1 : i32 to index
    %c0_8 = arith.constant 0 : index
    %c0_9 = arith.constant 0 : index
    %35 = vector.load %arg4[%34, %c0_8, %c0_9] : memref<2x48x144xbf16, #tpu.memory_space<vmem>>, vector<1x48x144xbf16>
    %36 = vector.shape_cast %35 : vector<1x48x144xbf16> to vector<48x144xbf16>
    %cst_10 = arith.constant dense<0.000000e+00> : vector<128x144xf32>
    %37 = tpu.matmul %33, %36, %cst_10 {dimension_numbers = #tpu.dot_dimension_numbers<[1], [0], [0], [1], [0, 0, 1, 1], [], []>} : vector<128x48xbf16>, vector<48x144xbf16>, vector<128x144xf32> -> vector<128x144xf32>
    %38 = arith.index_cast %arg1 : i32 to index
    %c0_11 = arith.constant 0 : index
    %c0_12 = arith.constant 0 : index
    %39 = vector.load %arg5[%38, %c0_11, %c0_12] : memref<2x1x144xf32, #tpu.memory_space<vmem>>, vector<1x1x144xf32>
    %40 = vector.shape_cast %39 : vector<1x1x144xf32> to vector<1x144xf32>
    %41 = vector.broadcast %40 : vector<1x144xf32> to vector<128x144xf32>
    %42 = arith.addf %37, %41 : vector<128x144xf32>
    %43 = tpu.iota {dimensions = array<i32: 1>} : vector<1x128xi32>
    %c17_i32 = arith.constant 17 : i32
    %44 = vector.broadcast %c17_i32 : i32 to vector<1x128xi32>
    %45 = arith.cmpi slt, %43, %44 : vector<1x128xi32>
    %cst_13 = arith.constant 0.000000e+00 : f32
    %cst_14 = arith.constant -1.000000e+30 : f32
    %46 = vector.broadcast %cst_13 : f32 to vector<1x128xf32>
    %47 = vector.broadcast %cst_14 : f32 to vector<1x128xf32>
    %48 = arith.select %45, %46, %47 : vector<1x128xi1>, vector<1x128xf32>
    %49 = vector.extract_strided_slice %42 {offsets = [0, 0], sizes = [128, 16], strides = [1, 1]} : vector<128x144xf32> to vector<128x16xf32>
    %50 = arith.truncf %49 : vector<128x16xf32> to vector<128x16xbf16>
    %51 = vector.extract_strided_slice %42 {offsets = [0, 48], sizes = [128, 16], strides = [1, 1]} : vector<128x144xf32> to vector<128x16xf32>
    %52 = arith.truncf %51 : vector<128x16xf32> to vector<128x16xbf16>
    %53 = vector.extract_strided_slice %42 {offsets = [0, 96], sizes = [128, 16], strides = [1, 1]} : vector<128x144xf32> to vector<128x16xf32>
    %54 = arith.truncf %53 : vector<128x16xf32> to vector<128x16xbf16>
    %cst_15 = arith.constant dense<0.000000e+00> : vector<128x128xf32>
    %55 = tpu.matmul %50, %52, %cst_15 {dimension_numbers = #tpu.dot_dimension_numbers<[1], [1], [0], [0], [0, 0, 1, 0], [], []>} : vector<128x16xbf16>, vector<128x16xbf16>, vector<128x128xf32> -> vector<128x128xf32>
    %cst_16 = arith.constant 2.500000e-01 : f32
    %56 = vector.broadcast %cst_16 : f32 to vector<128x128xf32>
    %57 = arith.mulf %55, %56 : vector<128x128xf32>
    %58 = vector.broadcast %48 : vector<1x128xf32> to vector<128x128xf32>
    %59 = arith.addf %57, %58 : vector<128x128xf32>
    %cst_17 = arith.constant dense<0xFF800000> : vector<128xf32>
    %60 = vector.multi_reduction <maximumf>, %59, %cst_17 [1] : vector<128x128xf32> to vector<128xf32>
    %61 = vector.shape_cast %60 : vector<128xf32> to vector<128x1xf32>
    %62 = vector.broadcast %61 : vector<128x1xf32> to vector<128x128xf32>
    %63 = arith.subf %59, %62 : vector<128x128xf32>
    %64 = math.exp %63 : vector<128x128xf32>
    %cst_18 = arith.constant dense<0.000000e+00> : vector<128xf32>
    %65 = vector.multi_reduction <add>, %64, %cst_18 [1] : vector<128x128xf32> to vector<128xf32>
    %66 = vector.shape_cast %65 : vector<128xf32> to vector<128x1xf32>
    %67 = tpu.reciprocal %66 {approx = true} : vector<128x1xf32> -> vector<128x1xf32>
    %68 = vector.broadcast %67 : vector<128x1xf32> to vector<128x128xf32>
    %69 = arith.mulf %64, %68 : vector<128x128xf32>
    %70 = arith.truncf %69 : vector<128x128xf32> to vector<128x128xbf16>
    %cst_19 = arith.constant dense<0.000000e+00> : vector<128x16xf32>
    %71 = tpu.matmul %70, %54, %cst_19 {dimension_numbers = #tpu.dot_dimension_numbers<[1], [0], [0], [1], [0, 0, 1, 1], [], []>} : vector<128x128xbf16>, vector<128x16xbf16>, vector<128x16xf32> -> vector<128x16xf32>
    %72 = vector.extract_strided_slice %42 {offsets = [0, 16], sizes = [128, 16], strides = [1, 1]} : vector<128x144xf32> to vector<128x16xf32>
    %73 = arith.truncf %72 : vector<128x16xf32> to vector<128x16xbf16>
    %74 = vector.extract_strided_slice %42 {offsets = [0, 64], sizes = [128, 16], strides = [1, 1]} : vector<128x144xf32> to vector<128x16xf32>
    %75 = arith.truncf %74 : vector<128x16xf32> to vector<128x16xbf16>
    %76 = vector.extract_strided_slice %42 {offsets = [0, 112], sizes = [128, 16], strides = [1, 1]} : vector<128x144xf32> to vector<128x16xf32>
    %77 = arith.truncf %76 : vector<128x16xf32> to vector<128x16xbf16>
    %cst_20 = arith.constant dense<0.000000e+00> : vector<128x128xf32>
    %78 = tpu.matmul %73, %75, %cst_20 {dimension_numbers = #tpu.dot_dimension_numbers<[1], [1], [0], [0], [0, 0, 1, 0], [], []>} : vector<128x16xbf16>, vector<128x16xbf16>, vector<128x128xf32> -> vector<128x128xf32>
    %cst_21 = arith.constant 2.500000e-01 : f32
    %79 = vector.broadcast %cst_21 : f32 to vector<128x128xf32>
    %80 = arith.mulf %78, %79 : vector<128x128xf32>
    %81 = vector.broadcast %48 : vector<1x128xf32> to vector<128x128xf32>
    %82 = arith.addf %80, %81 : vector<128x128xf32>
    %cst_22 = arith.constant dense<0xFF800000> : vector<128xf32>
    %83 = vector.multi_reduction <maximumf>, %82, %cst_22 [1] : vector<128x128xf32> to vector<128xf32>
    %84 = vector.shape_cast %83 : vector<128xf32> to vector<128x1xf32>
    %85 = vector.broadcast %84 : vector<128x1xf32> to vector<128x128xf32>
    %86 = arith.subf %82, %85 : vector<128x128xf32>
    %87 = math.exp %86 : vector<128x128xf32>
    %cst_23 = arith.constant dense<0.000000e+00> : vector<128xf32>
    %88 = vector.multi_reduction <add>, %87, %cst_23 [1] : vector<128x128xf32> to vector<128xf32>
    %89 = vector.shape_cast %88 : vector<128xf32> to vector<128x1xf32>
    %90 = tpu.reciprocal %89 {approx = true} : vector<128x1xf32> -> vector<128x1xf32>
    %91 = vector.broadcast %90 : vector<128x1xf32> to vector<128x128xf32>
    %92 = arith.mulf %87, %91 : vector<128x128xf32>
    %93 = arith.truncf %92 : vector<128x128xf32> to vector<128x128xbf16>
    %cst_24 = arith.constant dense<0.000000e+00> : vector<128x16xf32>
    %94 = tpu.matmul %93, %77, %cst_24 {dimension_numbers = #tpu.dot_dimension_numbers<[1], [0], [0], [1], [0, 0, 1, 1], [], []>} : vector<128x128xbf16>, vector<128x16xbf16>, vector<128x16xf32> -> vector<128x16xf32>
    %95 = vector.extract_strided_slice %42 {offsets = [0, 32], sizes = [128, 16], strides = [1, 1]} : vector<128x144xf32> to vector<128x16xf32>
    %96 = arith.truncf %95 : vector<128x16xf32> to vector<128x16xbf16>
    %97 = vector.extract_strided_slice %42 {offsets = [0, 80], sizes = [128, 16], strides = [1, 1]} : vector<128x144xf32> to vector<128x16xf32>
    %98 = arith.truncf %97 : vector<128x16xf32> to vector<128x16xbf16>
    %99 = vector.extract_strided_slice %42 {offsets = [0, 128], sizes = [128, 16], strides = [1, 1]} : vector<128x144xf32> to vector<128x16xf32>
    %100 = arith.truncf %99 : vector<128x16xf32> to vector<128x16xbf16>
    %cst_25 = arith.constant dense<0.000000e+00> : vector<128x128xf32>
    %101 = tpu.matmul %96, %98, %cst_25 {dimension_numbers = #tpu.dot_dimension_numbers<[1], [1], [0], [0], [0, 0, 1, 0], [], []>} : vector<128x16xbf16>, vector<128x16xbf16>, vector<128x128xf32> -> vector<128x128xf32>
    %cst_26 = arith.constant 2.500000e-01 : f32
    %102 = vector.broadcast %cst_26 : f32 to vector<128x128xf32>
    %103 = arith.mulf %101, %102 : vector<128x128xf32>
    %104 = vector.broadcast %48 : vector<1x128xf32> to vector<128x128xf32>
    %105 = arith.addf %103, %104 : vector<128x128xf32>
    %cst_27 = arith.constant dense<0xFF800000> : vector<128xf32>
    %106 = vector.multi_reduction <maximumf>, %105, %cst_27 [1] : vector<128x128xf32> to vector<128xf32>
    %107 = vector.shape_cast %106 : vector<128xf32> to vector<128x1xf32>
    %108 = vector.broadcast %107 : vector<128x1xf32> to vector<128x128xf32>
    %109 = arith.subf %105, %108 : vector<128x128xf32>
    %110 = math.exp %109 : vector<128x128xf32>
    %cst_28 = arith.constant dense<0.000000e+00> : vector<128xf32>
    %111 = vector.multi_reduction <add>, %110, %cst_28 [1] : vector<128x128xf32> to vector<128xf32>
    %112 = vector.shape_cast %111 : vector<128xf32> to vector<128x1xf32>
    %113 = tpu.reciprocal %112 {approx = true} : vector<128x1xf32> -> vector<128x1xf32>
    %114 = vector.broadcast %113 : vector<128x1xf32> to vector<128x128xf32>
    %115 = arith.mulf %110, %114 : vector<128x128xf32>
    %116 = arith.truncf %115 : vector<128x128xf32> to vector<128x128xbf16>
    %cst_29 = arith.constant dense<0.000000e+00> : vector<128x16xf32>
    %117 = tpu.matmul %116, %100, %cst_29 {dimension_numbers = #tpu.dot_dimension_numbers<[1], [0], [0], [1], [0, 0, 1, 1], [], []>} : vector<128x128xbf16>, vector<128x16xbf16>, vector<128x16xf32> -> vector<128x16xf32>
    %118 = tpu.concatenate %71, %94, %117 in 1 : vector<128x16xf32>, vector<128x16xf32>, vector<128x16xf32> -> vector<128x48xf32>
    %119 = arith.truncf %118 : vector<128x48xf32> to vector<128x48xbf16>
    %120 = arith.index_cast %arg1 : i32 to index
    %c0_30 = arith.constant 0 : index
    %c0_31 = arith.constant 0 : index
    %121 = vector.load %arg6[%120, %c0_30, %c0_31] : memref<2x48x48xbf16, #tpu.memory_space<vmem>>, vector<1x48x48xbf16>
    %122 = vector.shape_cast %121 : vector<1x48x48xbf16> to vector<48x48xbf16>
    %cst_32 = arith.constant dense<0.000000e+00> : vector<128x48xf32>
    %123 = tpu.matmul %119, %122, %cst_32 {dimension_numbers = #tpu.dot_dimension_numbers<[1], [0], [0], [1], [0, 0, 1, 1], [], []>} : vector<128x48xbf16>, vector<48x48xbf16>, vector<128x48xf32> -> vector<128x48xf32>
    %124 = arith.addf %3, %123 : vector<128x48xf32>
    %125 = vector.broadcast %11 : vector<1x48xf32> to vector<128x48xf32>
    %126 = arith.addf %124, %125 : vector<128x48xf32>
    %cst_33 = arith.constant dense<0.000000e+00> : vector<128xf32>
    %127 = vector.multi_reduction <add>, %126, %cst_33 [1] : vector<128x48xf32> to vector<128xf32>
    %128 = vector.shape_cast %127 : vector<128xf32> to vector<128x1xf32>
    %cst_34 = arith.constant 4.800000e+01 : f32
    %129 = vector.broadcast %cst_34 : f32 to vector<128x1xf32>
    %130 = arith.divf %128, %129 : vector<128x1xf32>
    %131 = vector.broadcast %130 : vector<128x1xf32> to vector<128x48xf32>
    %132 = arith.subf %126, %131 : vector<128x48xf32>
    %133 = arith.mulf %132, %132 : vector<128x48xf32>
    %cst_35 = arith.constant dense<0.000000e+00> : vector<128xf32>
    %134 = vector.multi_reduction <add>, %133, %cst_35 [1] : vector<128x48xf32> to vector<128xf32>
    %135 = vector.shape_cast %134 : vector<128xf32> to vector<128x1xf32>
    %cst_36 = arith.constant 4.800000e+01 : f32
    %136 = vector.broadcast %cst_36 : f32 to vector<128x1xf32>
    %137 = arith.divf %135, %136 : vector<128x1xf32>
    %cst_37 = arith.constant 9.99999997E-7 : f32
    %138 = vector.broadcast %cst_37 : f32 to vector<128x1xf32>
    %139 = arith.addf %137, %138 : vector<128x1xf32>
    %140 = math.rsqrt %139 : vector<128x1xf32>
    %141 = vector.broadcast %140 : vector<128x1xf32> to vector<128x48xf32>
    %142 = arith.mulf %132, %141 : vector<128x48xf32>
    %143 = vector.broadcast %9 : vector<1x48xf32> to vector<128x48xf32>
    %144 = arith.mulf %142, %143 : vector<128x48xf32>
    %145 = vector.broadcast %10 : vector<1x48xf32> to vector<128x48xf32>
    %146 = arith.addf %144, %145 : vector<128x48xf32>
    %147 = arith.truncf %146 : vector<128x48xf32> to vector<128x48xbf16>
    %148 = arith.index_cast %arg1 : i32 to index
    %c0_38 = arith.constant 0 : index
    %c0_39 = arith.constant 0 : index
    %149 = vector.load %arg7[%148, %c0_38, %c0_39] : memref<2x48x192xbf16, #tpu.memory_space<vmem>>, vector<1x48x192xbf16>
    %150 = vector.shape_cast %149 : vector<1x48x192xbf16> to vector<48x192xbf16>
    %cst_40 = arith.constant dense<0.000000e+00> : vector<128x192xf32>
    %151 = tpu.matmul %147, %150, %cst_40 {dimension_numbers = #tpu.dot_dimension_numbers<[1], [0], [0], [1], [0, 0, 1, 1], [], []>} : vector<128x48xbf16>, vector<48x192xbf16>, vector<128x192xf32> -> vector<128x192xf32>
    %152 = arith.index_cast %arg1 : i32 to index
    %c0_41 = arith.constant 0 : index
    %c0_42 = arith.constant 0 : index
    %153 = vector.load %arg8[%152, %c0_41, %c0_42] : memref<2x1x192xf32, #tpu.memory_space<vmem>>, vector<1x1x192xf32>
    %154 = vector.shape_cast %153 : vector<1x1x192xf32> to vector<1x192xf32>
    %155 = vector.broadcast %154 : vector<1x192xf32> to vector<128x192xf32>
    %156 = arith.addf %151, %155 : vector<128x192xf32>
    %cst_43 = arith.constant 5.000000e-01 : f32
    %157 = vector.broadcast %cst_43 : f32 to vector<128x192xf32>
    %158 = arith.mulf %157, %156 : vector<128x192xf32>
    %cst_44 = arith.constant 0.707106769 : f32
    %159 = vector.broadcast %cst_44 : f32 to vector<128x192xf32>
    %160 = arith.mulf %156, %159 : vector<128x192xf32>
    %161 = math.erf %160 : vector<128x192xf32>
    %cst_45 = arith.constant 1.000000e+00 : f32
    %162 = vector.broadcast %cst_45 : f32 to vector<128x192xf32>
    %163 = arith.addf %162, %161 : vector<128x192xf32>
    %164 = arith.mulf %158, %163 : vector<128x192xf32>
    %165 = arith.truncf %164 : vector<128x192xf32> to vector<128x192xbf16>
    %166 = arith.index_cast %arg1 : i32 to index
    %c0_46 = arith.constant 0 : index
    %c0_47 = arith.constant 0 : index
    %167 = vector.load %arg9[%166, %c0_46, %c0_47] : memref<2x192x48xbf16, #tpu.memory_space<vmem>>, vector<1x192x48xbf16>
    %168 = vector.shape_cast %167 : vector<1x192x48xbf16> to vector<192x48xbf16>
    %cst_48 = arith.constant dense<0.000000e+00> : vector<128x48xf32>
    %169 = tpu.matmul %165, %168, %cst_48 {dimension_numbers = #tpu.dot_dimension_numbers<[1], [0], [0], [1], [0, 0, 1, 1], [], []>} : vector<128x192xbf16>, vector<192x48xbf16>, vector<128x48xf32> -> vector<128x48xf32>
    %170 = vector.broadcast %12 : vector<1x48xf32> to vector<128x48xf32>
    %171 = arith.addf %169, %170 : vector<128x48xf32>
    %172 = arith.addf %126, %171 : vector<128x48xf32>
    %c0_49 = arith.constant 0 : index
    %c0_50 = arith.constant 0 : index
    %173 = vector.load %arg10[%c0_49, %c0_50] : memref<128x48xf32, #tpu.memory_space<vmem>>, vector<128x48xf32>
    tpu.vector_store %arg10[%c0_49, %c0_50], %172 {strides = array<i32>} : memref<128x48xf32, #tpu.memory_space<vmem>>, vector<128x48xf32>,
    return
  }
  func.func @transform_0(%arg0: i32, %arg1: i32) -> (i32, i32) {
    %c0_i32 = arith.constant 0 : i32
    %c0_i32_0 = arith.constant 0 : i32
    return %arg0, %c0_i32 : i32, i32
  }
  func.func @transform_1(%arg0: i32, %arg1: i32) -> (i32, i32, i32) {
    %c0_i32 = arith.constant 0 : i32
    %c0_i32_0 = arith.constant 0 : i32
    %c0_i32_1 = arith.constant 0 : i32
    %c0_i32_2 = arith.constant 0 : i32
    return %c0_i32, %c0_i32_0, %c0_i32_1 : i32, i32, i32
  }
  func.func @transform_2(%arg0: i32, %arg1: i32) -> (i32, i32, i32) {
    %c0_i32 = arith.constant 0 : i32
    %c0_i32_0 = arith.constant 0 : i32
    %c0_i32_1 = arith.constant 0 : i32
    %c0_i32_2 = arith.constant 0 : i32
    return %c0_i32, %c0_i32_0, %c0_i32_1 : i32, i32, i32
  }
  func.func @transform_3(%arg0: i32, %arg1: i32) -> (i32, i32, i32) {
    %c0_i32 = arith.constant 0 : i32
    %c0_i32_0 = arith.constant 0 : i32
    %c0_i32_1 = arith.constant 0 : i32
    %c0_i32_2 = arith.constant 0 : i32
    return %c0_i32, %c0_i32_0, %c0_i32_1 : i32, i32, i32
  }
  func.func @transform_4(%arg0: i32, %arg1: i32) -> (i32, i32, i32) {
    %c0_i32 = arith.constant 0 : i32
    %c0_i32_0 = arith.constant 0 : i32
    %c0_i32_1 = arith.constant 0 : i32
    %c0_i32_2 = arith.constant 0 : i32
    return %c0_i32, %c0_i32_0, %c0_i32_1 : i32, i32, i32
  }
  func.func @transform_5(%arg0: i32, %arg1: i32) -> (i32, i32, i32) {
    %c0_i32 = arith.constant 0 : i32
    %c0_i32_0 = arith.constant 0 : i32
    %c0_i32_1 = arith.constant 0 : i32
    %c0_i32_2 = arith.constant 0 : i32
    return %c0_i32, %c0_i32_0, %c0_i32_1 : i32, i32, i32
  }
  func.func @transform_6(%arg0: i32, %arg1: i32) -> (i32, i32, i32) {
    %c0_i32 = arith.constant 0 : i32
    %c0_i32_0 = arith.constant 0 : i32
    %c0_i32_1 = arith.constant 0 : i32
    %c0_i32_2 = arith.constant 0 : i32
    return %c0_i32, %c0_i32_0, %c0_i32_1 : i32, i32, i32
  }
  func.func @transform_7(%arg0: i32, %arg1: i32) -> (i32, i32, i32) {
    %c0_i32 = arith.constant 0 : i32
    %c0_i32_0 = arith.constant 0 : i32
    %c0_i32_1 = arith.constant 0 : i32
    %c0_i32_2 = arith.constant 0 : i32
    return %c0_i32, %c0_i32_0, %c0_i32_1 : i32, i32, i32
  }
  func.func @transform_8(%arg0: i32, %arg1: i32) -> (i32, i32) {
    %c0_i32 = arith.constant 0 : i32
    %c0_i32_0 = arith.constant 0 : i32
    return %arg0, %c0_i32 : i32, i32
  }
}

</mosaic_0001>

<llo_original>
// kernel: vit_forward.5
$region0: #{vit_forward.5}
  #allocation0 [shape = 'u32[]', space=smem, size = 0x4, offset = 0x4, fixed_abs, tag = 'smem constant byte address 0x4 - core index']
  #allocation1 [shape = 'u32[144,128]{1,0:T(1,128)}', space=vmem, size = 0x12000, scoped, tag = 'internal scratch']
  %s0 = inlined_call_operand.vmem [shape: f32[2,48], index: 0, kind: input, shape index: {}]
  %s1 = inlined_call_operand.vmem [shape: f32[1,48], index: 1, kind: input, shape index: {}]
  %s2 = inlined_call_operand.vmem [shape: f32[1,48], index: 2, kind: input, shape index: {}]
  %s3 = inlined_call_operand.vmem [shape: bf16[48,128], index: 3, kind: input, shape index: {}]
  %s4 = inlined_call_operand.vmem [shape: f32[1,128], index: 4, kind: input, shape index: {}]
  %s5 = inlined_call_operand.hbm [shape: f32[2,128], index: 5, kind: output, shape index: {}]
  %s6 = sld [smem:[#allocation0]]
  $region30: #{vit_forward.5} parent=0
    _
  %s8 = ssub.s32 1, %s6
  %s9 = scalar_select 0, %s8, %s6
  $region1: #{vit_forward.5} parent=0
    #allocation2 [shape = 'u8[1024]{0}', space=vmem, size = 0x400, scoped, tag = 'output window, operand 0, single buffered']
    #allocation3 [shape = 's32[1]{0}', space=sflag, size = 0x4, scoped, tag = 'scoped memory for vit_forward.5']
    %10 = vsyncpa [#allocation3], 0
    // Predicated region
    $region2: #{vit_forward.5} parent=1 // pred_check
      _
    $region3: #{vit_forward.5} parent=1 // pred_check_branch
      %12 = sbr.rel (0) target = $region5
    $region4: #{vit_forward.5} parent=1 // pred_region
      _
    $region5: #{vit_forward.5} parent=1 // pred_fallthru
      _
    // Predicated region
    $region6: #{vit_forward.5} parent=1 // pred_check
      _
    $region7: #{vit_forward.5} parent=1 // pred_check_branch
      %14 = sbr.rel (0) target = $region9
    $region8: #{vit_forward.5} parent=1 // pred_region
      _
    $region9: #{vit_forward.5} parent=1 // pred_fallthru
      _
    // Predicated region
    $region10: #{vit_forward.5} parent=1 // pred_check
      _
    $region11: #{vit_forward.5} parent=1 // pred_check_branch
      %16 = sbr.rel (0) target = $region13
    $region12: #{vit_forward.5} parent=1 // pred_region
      _
    $region13: #{vit_forward.5} parent=1 // pred_fallthru
      _
    // Predicated region
    $region14: #{vit_forward.5} parent=1 // pred_check
      _
    $region15: #{vit_forward.5} parent=1 // pred_check_branch
      %18 = sbr.rel (0) target = $region17
    $region16: #{vit_forward.5} parent=1 // pred_region
      _
    $region17: #{vit_forward.5} parent=1 // pred_fallthru
      _
    // Predicated region
    $region18: #{vit_forward.5} parent=1 // pred_check
      _
    $region19: #{vit_forward.5} parent=1 // pred_check_branch
      %20 = sbr.rel (0) target = $region21
    $region20: #{vit_forward.5} parent=1 // pred_region
      _
    $region21: #{vit_forward.5} parent=1 // pred_fallthru
      _
    %v22 = vld [vmem:[%s0] sm:$0x3]
    %vm23 = vcmask 386048
    %v24 = vsel %vm23, %v22, 0.0
    %25 = vadd.xlane.f32.xlu0 %v24
    %v26 = vpop.xlane.xlu0 %25
    %v27 = vrcp.pop 48.0
    %v28 = vmul.f32 %v26, %v27
    %v29 = vsub.f32 %v22, %v28
    %v30 = vmul.f32 %v29, %v29
    %v31 = vsel %vm23, %v30, 0.0
    %32 = vadd.xlane.f32.xlu0 %v31
    %v33 = vpop.xlane.xlu0 %32
    %v34 = vmul.f32 %v33, %v27
    %v35 = vadd.f32 %v34, 1e-06
    %v36 = vrsqrt.pop %v35
    %v37 = vmul.f32 %v29, %v36
    %v38 = vld [vmem:[%s1] sm:$0x1]
    %v40 = vlaneseq
    %v41 = vshrl.u32 %v40, 7
    %v42 = vsub.s32 0, %v41
    %v43 = vrot.slane %v38, %v42
    %v45 = vmul.f32 %v37, %v43
    %v46 = vld [vmem:[%s2] sm:$0x1]
    %v48 = vlaneseq
    %v49 = vshrl.u32 %v48, 7
    %v50 = vsub.s32 0, %v49
    %v51 = vrot.slane %v46, %v50
    %v53 = vadd.f32 %v45, %v51
    %v54 = vpack.c.bf16 %v53, %v53
    %v55 = vld [vmem:[%s3] sm:$0xf]
    %v56 = vld [vmem:[%s3 + $0x4] sm:$0xf]
    %v57 = vld [vmem:[%s3 + $0x8] sm:$0xf]
    %v58 = vld [vmem:[%s3 + $0xc] sm:$0xf]
    %v59 = vld [vmem:[%s3 + $0x10] sm:$0xf]
    %v60 = vld [vmem:[%s3 + $0x14] sm:$0xf]
    %v61 = vld [vmem:[%s4] sm:$0x1]
    %v63 = vlaneseq
    %v64 = vshrl.u32 %v63, 7
    %v65 = vsub.s32 0, %v64
    %v66 = vrot.slane %v61, %v65
    %v74 = vunpack.c.l.b16 %v55
    %v75 = vunpack.c.l.b16 %v56
    %v76 = vunpack.c.l.b16 %v57
    %v77 = vunpack.c.l.b16 %v58
    %v78 = vunpack.c.l.b16 %v59
    %v79 = vunpack.c.l.b16 %v60
    %v80 = vpack.c.b16 %v75, %v74
    %v81 = vpack.c.b16 %v77, %v76
    %v82 = vpack.c.b16 %v79, %v78
    %vm86 = vcmask 392192
    %v88 = vsel %vm86, %v54, 0
    %90 = vmatprep.subr.bf16.mxu0 0
    %91 = vmatpush1.bf16.msra.mxu0 %v80
    %92 = vmatprep.subr.bf16.mxu0 0
    %93 = vmatpush1.bf16.msra.mxu0 %v81
    %94 = vmatprep.subr.bf16.mxu0 0
    %95 = vmatpush1.bf16.msra.mxu0 %v82
    %96 = vmatprep.subr.bf16.mxu0 0
    %97 = vmatpush1.bf16.msra.mxu0 0
    %98 = vmatprep.subr.bf16.mxu0 0
    %99 = vmatpush1.bf16.msra.mxu0 0
    %100 = vmatprep.subr.bf16.mxu0 0
    %101 = vmatpush1.bf16.msra.mxu0 0
    %102 = vmatprep.subr.bf16.mxu0 0
    %103 = vmatpush1.bf16.msra.mxu0 0
    %104 = vmatprep.subr.bf16.mxu0 0
    %105 = vmatpush1.bf16.msra.mxu0 0
    %106 = vmatprep.subr.bf16.mxu0 0
    %107 = vmatpush1.bf16.msra.mxu0 0
    %108 = vmatprep.subr.bf16.mxu0 0
    %109 = vmatpush1.bf16.msra.mxu0 0
    %110 = vmatprep.subr.bf16.mxu0 0
    %111 = vmatpush1.bf16.msra.mxu0 0
    %112 = vmatprep.subr.bf16.mxu0 0
    %113 = vmatpush1.bf16.msra.mxu0 0
    %114 = vmatprep.subr.bf16.mxu0 0
    %115 = vmatpush1.bf16.msra.mxu0 0
    %116 = vmatprep.subr.bf16.mxu0 0
    %117 = vmatpush1.bf16.msra.mxu0 0
    %118 = vmatprep.subr.bf16.mxu0 0
    %119 = vmatpush1.bf16.msra.mxu0 0
    %120 = vmatprep.subr.bf16.mxu0 0
    %121 = vmatpush1.bf16.msra.mxu0 0
    %122 = vmatprep.mubr.bf16.mxu0 0
    %123 = vmatmul.mubr.bf16.gmra.mrb[0].mxu0 %v88
    %v124 = vpop.f32.mrb[0].mxu0
    %v125 = vadd.f32 %v66, %v124
    %v126 = vpop.f32.mrb[0].mxu0
    %v127 = vpop.f32.mrb[0].mxu0
    %v128 = vpop.f32.mrb[0].mxu0
    %129 = vdwg.mxu0
    %130 = vst [vmem:[#allocation2] sm:$0x3] %v125
    // Predicated region
    $region22: #{vit_forward.5} parent=1 // pred_check
      _
    $region23: #{vit_forward.5} parent=1 // pred_check_branch
      %132 = sbr.rel (0) target = $region25
    $region24: #{vit_forward.5} parent=1 // pred_region
      %s134 = ssub.s32 32, 32
      %135 = vsyncadd [#allocation3], %s134
      %s137 = sshll.u32 [#allocation2], 4
      %s138 = int_to_ptr.vmem [resolvable:$true] %s137
      %140 = dma.vmem_to_hbm [thread:$0]  %s138, 32, %s5, [#allocation3]
    $region25: #{vit_forward.5} parent=1 // pred_fallthru
      _
    // Predicated region
    $region26: #{vit_forward.5} parent=1 // pred_check
      _
    $region27: #{vit_forward.5} parent=1 // pred_check_branch
      %142 = sbr.rel (0) target = $region29
    $region28: #{vit_forward.5} parent=1 // pred_region
      %143 = dma.done [#allocation3], 32
    $region29: #{vit_forward.5} parent=1 // pred_fallthru
      _
    %144 = vsyncpa [#allocation3], 1

// kernel: vit_forward.3
$region0: #{vit_forward.3}
  #allocation0 [shape = 'u32[]', space=smem, size = 0x4, offset = 0x4, fixed_abs, tag = 'smem constant byte address 0x4 - core index']
  #allocation1 [shape = 'u32[144,128]{1,0:T(1,128)}', space=vmem, size = 0x12000, scoped, tag = 'internal scratch']
  %s0 = inlined_call_operand.vmem [shape: bf16[256,768], index: 0, kind: input, shape index: {}]
  %s1 = inlined_call_operand.vmem [shape: bf16[768,48], index: 1, kind: input, shape index: {}]
  %s2 = inlined_call_operand.vmem [shape: f32[1,48], index: 2, kind: input, shape index: {}]
  %s3 = inlined_call_operand.vmem [shape: f32[256,48], index: 3, kind: output, shape index: {}]
  %s4 = sld [smem:[#allocation0]]
  $region22: #{vit_forward.3} parent=0
    _
  %s6 = ssub.s32 1, %s4
  %s7 = scalar_select 0, %s6, %s4
  // Predicated region
  $region2: #{vit_forward.3} parent=0 // pred_check
    _
  $region3: #{vit_forward.3} parent=0 // pred_check_branch
    %9 = sbr.rel (0) target = $region5
  $region4: #{vit_forward.3} parent=0 // pred_region
    _
  $region5: #{vit_forward.3} parent=0 // pred_fallthru
    _
  // Predicated region
  $region6: #{vit_forward.3} parent=0 // pred_check
    _
  $region7: #{vit_forward.3} parent=0 // pred_check_branch
    %11 = sbr.rel (0) target = $region9
  $region8: #{vit_forward.3} parent=0 // pred_region
    _
  $region9: #{vit_forward.3} parent=0 // pred_fallthru
    _
  // Predicated region
  $region10: #{vit_forward.3} parent=0 // pred_check
    _
  $region11: #{vit_forward.3} parent=0 // pred_check_branch
    %13 = sbr.rel (0) target = $region13
  $region12: #{vit_forward.3} parent=0 // pred_region
    _
  $region13: #{vit_forward.3} parent=0 // pred_fallthru
    _
  %v15 = vld [vmem:[%s0] sm:$0xff]
  %v16 = vld [vmem:[%s0 + $0x8] sm:$0xff]
  %v17 = vld [vmem:[%s0 + $0x10] sm:$0xff]
  %v18 = vld [vmem:[%s0 + $0x18] sm:$0xff]
  %v19 = vld [vmem:[%s0 + $0x20] sm:$0xff]
  %v20 = vld [vmem:[%s0 + $0x28] sm:$0xff]
  %v21 = vld [vmem:[%s0 + $0x30] sm:$0xff]
  %v22 = vld [vmem:[%s0 + $0x38] sm:$0xff]
  %v23 = vld [vmem:[%s0 + $0x40] sm:$0xff]
  %v24 = vld [vmem:[%s0 + $0x48] sm:$0xff]
  %v25 = vld [vmem:[%s0 + $0x50] sm:$0xff]
  %v26 = vld [vmem:[%s0 + $0x58] sm:$0xff]
  %v27 = vld [vmem:[%s0 + $0x60] sm:$0xff]
  %v28 = vld [vmem:[%s0 + $0x68] sm:$0xff]
  %v29 = vld [vmem:[%s0 + $0x70] sm:$0xff]
  %v30 = vld [vmem:[%s0 + $0x78] sm:$0xff]
  %v31 = vld [vmem:[%s0 + $0x80] sm:$0xff]
  %v32 = vld [vmem:[%s0 + $0x88] sm:$0xff]
  %v33 = vld [vmem:[%s0 + $0x90] sm:$0xff]
  %v34 = vld [vmem:[%s0 + $0x98] sm:$0xff]
  %v35 = vld [vmem:[%s0 + $0xa0] sm:$0xff]
  %v36 = vld [vmem:[%s0 + $0xa8] sm:$0xff]
  %v37 = vld [vmem:[%s0 + $0xb0] sm:$0xff]
  %v38 = vld [vmem:[%s0 + $0xb8] sm:$0xff]
  %v39 = vld [vmem:[%s0 + $0xc0] sm:$0xff]
  %v40 = vld [vmem:[%s0 + $0xc8] sm:$0xff]
  %v41 = vld [vmem:[%s0 + $0xd0] sm:$0xff]
  %v42 = vld [vmem:[%s0 + $0xd8] sm:$0xff]
  %v43 = vld [vmem:[%s0 + $0xe0] sm:$0xff]
  %v44 = vld [vmem:[%s0 + $0xe8] sm:$0xff]
  %v45 = vld [vmem:[%s0 + $0xf0] sm:$0xff]
  %v46 = vld [vmem:[%s0 + $0xf8] sm:$0xff]
  %v47 = vld [vmem:[%s0 + $0x100] sm:$0xff]
  %v48 = vld [vmem:[%s0 + $0x108] sm:$0xff]
  %v49 = vld [vmem:[%s0 + $0x110] sm:$0xff]
  %v50 = vld [vmem:[%s0 + $0x118] sm:$0xff]
  %v51 = vld [vmem:[%s0 + $0x120] sm:$0xff]
  %v52 = vld [vmem:[%s0 + $0x128] sm:$0xff]
  %v53 = vld [vmem:[%s0 + $0x130] sm:$0xff]
  %v54 = vld [vmem:[%s0 + $0x138] sm:$0xff]
  %v55 = vld [vmem:[%s0 + $0x140] sm:$0xff]
  %v56 = vld [vmem:[%s0 + $0x148] sm:$0xff]
  %v57 = vld [vmem:[%s0 + $0x150] sm:$0xff]
  %v58 = vld [vmem:[%s0 + $0x158] sm:$0xff]
  %v59 = vld [vmem:[%s0 + $0x160] sm:$0xff]
  %v60 = vld [vmem:[%s0 + $0x168] sm:$0xff]
  %v61 = vld [vmem:[%s0 + $0x170] sm:$0xff]
  %v62 = vld [vmem:[%s0 + $0x178] sm:$0xff]
  %v63 = vld [vmem:[%s0 + $0x180] sm:$0xff]
  %v64 = vld [vmem:[%s0 + $0x188] sm:$0xff]
  %v65 = vld [vmem:[%s0 + $0x190] sm:$0xff]
  %v66 = vld [vmem:[%s0 + $0x198] sm:$0xff]
  %v67 = vld [vmem:[%s0 + $0x1a0] sm:$0xff]
  %v68 = vld [vmem:[%s0 + $0x1a8] sm:$0xff]
  %v69 = vld [vmem:[%s0 + $0x1b0] sm:$0xff]
  %v70 = vld [vmem:[%s0 + $0x1b8] sm:$0xff]
  %v71 = vld [vmem:[%s0 + $0x1c0] sm:$0xff]
  %v72 = vld [vmem:[%s0 + $0x1c8] sm:$0xff]
  %v73 = vld [vmem:[%s0 + $0x1d0] sm:$0xff]
  %v74 = vld [vmem:[%s0 + $0x1d8] sm:$0xff]
  %v75 = vld [vmem:[%s0 + $0x1e0] sm:$0xff]
  %v76 = vld [vmem:[%s0 + $0x1e8] sm:$0xff]
  %v77 = vld [vmem:[%s0 + $0x1f0] sm:$0xff]
  %v78 = vld [vmem:[%s0 + $0x1f8] sm:$0xff]
  %v79 = vld [vmem:[%s0 + $0x200] sm:$0xff]
  %v80 = vld [vmem:[%s0 + $0x208] sm:$0xff]
  %v81 = vld [vmem:[%s0 + $0x210] sm:$0xff]
  %v82 = vld [vmem:[%s0 + $0x218] sm:$0xff]
  %v83 = vld [vmem:[%s0 + $0x220] sm:$0xff]
  %v84 = vld [vmem:[%s0 + $0x228] sm:$0xff]
  %v85 = vld [vmem:[%s0 + $0x230] sm:$0xff]
  %v86 = vld [vmem:[%s0 + $0x238] sm:$0xff]
  %v87 = vld [vmem:[%s0 + $0x240] sm:$0xff]
  %v88 = vld [vmem:[%s0 + $0x248] sm:$0xff]
  %v89 = vld [vmem:[%s0 + $0x250] sm:$0xff]
  %v90 = vld [vmem:[%s0 + $0x258] sm:$0xff]
  %v91 = vld [vmem:[%s0 + $0x260] sm:$0xff]
  %v92 = vld [vmem:[%s0 + $0x268] sm:$0xff]
  %v93 = vld [vmem:[%s0 + $0x270] sm:$0xff]
  %v94 = vld [vmem:[%s0 + $0x278] sm:$0xff]
  %v95 = vld [vmem:[%s0 + $0x280] sm:$0xff]
  %v96 = vld [vmem:[%s0 + $0x288] sm:$0xff]
  %v97 = vld [vmem:[%s0 + $0x290] sm:$0xff]
  %v98 = vld [vmem:[%s0 + $0x298] sm:$0xff]
  %v99 = vld [vmem:[%s0 + $0x2a0] sm:$0xff]
  %v100 = vld [vmem:[%s0 + $0x2a8] sm:$0xff]
  %v101 = vld [vmem:[%s0 + $0x2b0] sm:$0xff]
  %v102 = vld [vmem:[%s0 + $0x2b8] sm:$0xff]
  %v103 = vld [vmem:[%s0 + $0x2c0] sm:$0xff]
  %v104 = vld [vmem:[%s0 + $0x2c8] sm:$0xff]
  %v105 = vld [vmem:[%s0 + $0x2d0] sm:$0xff]
  %v106 = vld [vmem:[%s0 + $0x2d8] sm:$0xff]
  %v107 = vld [vmem:[%s0 + $0x2e0] sm:$0xff]
  %v108 = vld [vmem:[%s0 + $0x2e8] sm:$0xff]
  %v109 = vld [vmem:[%s0 + $0x2f0] sm:$0xff]
  %v110 = vld [vmem:[%s0 + $0x2f8] sm:$0xff]
  %v111 = vld [vmem:[%s1] sm:$0xf]
  %v112 = vld [vmem:[%s1 + $0x4] sm:$0xf]
  %v113 = vld [vmem:[%s1 + $0x8] sm:$0xf]
  %v114 = vld [vmem:[%s1 + $0xc] sm:$0xf]
  %v115 = vld [vmem:[%s1 + $0x10] sm:$0xf]
  %v116 = vld [vmem:[%s1 + $0x14] sm:$0xf]
  %v117 = vld [vmem:[%s1 + $0x18] sm:$0xf]
  %v118 = vld [vmem:[%s1 + $0x1c] sm:$0xf]
  %v119 = vld [vmem:[%s1 + $0x20] sm:$0xf]
  %v120 = vld [vmem:[%s1 + $0x24] sm:$0xf]
  %v121 = vld [vmem:[%s1 + $0x28] sm:$0xf]
  %v122 = vld [vmem:[%s1 + $0x2c] sm:$0xf]
  %v123 = vld [vmem:[%s1 + $0x30] sm:$0xf]
  %v124 = vld [vmem:[%s1 + $0x34] sm:$0xf]
  %v125 = vld [vmem:[%s1 + $0x38] sm:$0xf]
  %v126 = vld [vmem:[%s1 + $0x3c] sm:$0xf]
  %v127 = vld [vmem:[%s1 + $0x40] sm:$0xf]
  %v128 = vld [vmem:[%s1 + $0x44] sm:$0xf]
  %v129 = vld [vmem:[%s1 + $0x48] sm:$0xf]
  %v130 = vld [vmem:[%s1 + $0x4c] sm:$0xf]
  %v131 = vld [vmem:[%s1 + $0x50] sm:$0xf]
  %v132 = vld [vmem:[%s1 + $0x54] sm:$0xf]
  %v133 = vld [vmem:[%s1 + $0x58] sm:$0xf]
  %v134 = vld [vmem:[%s1 + $0x5c] sm:$0xf]
  %v135 = vld [vmem:[%s1 + $0x60] sm:$0xf]
  %v136 = vld [vmem:[%s1 + $0x64] sm:$0xf]
  %v137 = vld [vmem:[%s1 + $0x68] sm:$0xf]
  %v138 = vld [vmem:[%s1 + $0x6c] sm:$0xf]
  %v139 = vld [vmem:[%s1 + $0x70] sm:$0xf]
  %v140 = vld [vmem:[%s1 + $0x74] sm:$0xf]
  %v141 = vld [vmem:[%s1 + $0x78] sm:$0xf]
  %v142 = vld [vmem:[%s1 + $0x7c] sm:$0xf]
  %v143 = vld [vmem:[%s1 + $0x80] sm:$0xf]
  %v144 = vld [vmem:[%s1 + $0x84] sm:$0xf]
  %v145 = vld [vmem:[%s1 + $0x88] sm:$0xf]
  %v146 = vld [vmem:[%s1 + $0x8c] sm:$0xf]
  %v147 = vld [vmem:[%s1 + $0x90] sm:$0xf]
  %v148 = vld [vmem:[%s1 + $0x94] sm:$0xf]
  %v149 = vld [vmem:[%s1 + $0x98] sm:$0xf]
  %v150 = vld [vmem:[%s1 + $0x9c] sm:$0xf]
  %v151 = vld [vmem:[%s1 + $0xa0] sm:$0xf]
  %v152 = vld [vmem:[%s1 + $0xa4] sm:$0xf]
  %v153 = vld [vmem:[%s1 + $0xa8] sm:$0xf]
  %v154 = vld [vmem:[%s1 + $0xac] sm:$0xf]
  %v155 = vld [vmem:[%s1 + $0xb0] sm:$0xf]
  %v156 = vld [vmem:[%s1 + $0xb4] sm:$0xf]
  %v157 = vld [vmem:[%s1 + $0xb8] sm:$0xf]
  %v158 = vld [vmem:[%s1 + $0xbc] sm:$0xf]
  %v159 = vld [vmem:[%s1 + $0xc0] sm:$0xf]
  %v160 = vld [vmem:[%s1 + $0xc4] sm:$0xf]
  %v161 = vld [vmem:[%s1 + $0xc8] sm:$0xf]
  %v162 = vld [vmem:[%s1 + $0xcc] sm:$0xf]
  %v163 = vld [vmem:[%s1 + $0xd0] sm:$0xf]
  %v164 = vld [vmem:[%s1 + $0xd4] sm:$0xf]
  %v165 = vld [vmem:[%s1 + $0xd8] sm:$0xf]
  %v166 = vld [vmem:[%s1 + $0xdc] sm:$0xf]
  %v167 = vld [vmem:[%s1 + $0xe0] sm:$0xf]
  %v168 = vld [vmem:[%s1 + $0xe4] sm:$0xf]
  %v169 = vld [vmem:[%s1 + $0xe8] sm:$0xf]
  %v170 = vld [vmem:[%s1 + $0xec] sm:$0xf]
  %v171 = vld [vmem:[%s1 + $0xf0] sm:$0xf]
  %v172 = vld [vmem:[%s1 + $0xf4] sm:$0xf]
  %v173 = vld [vmem:[%s1 + $0xf8] sm:$0xf]
  %v174 = vld [vmem:[%s1 + $0xfc] sm:$0xf]
  %v175 = vld [vmem:[%s1 + $0x100] sm:$0xf]
  %v176 = vld [vmem:[%s1 + $0x104] sm:$0xf]
  %v177 = vld [vmem:[%s1 + $0x108] sm:$0xf]
  %v178 = vld [vmem:[%s1 + $0x10c] sm:$0xf]
  %v179 = vld [vmem:[%s1 + $0x110] sm:$0xf]
  %v180 = vld [vmem:[%s1 + $0x114] sm:$0xf]
  %v181 = vld [vmem:[%s1 + $0x118] sm:$0xf]
  %v182 = vld [vmem:[%s1 + $0x11c] sm:$0xf]
  %v183 = vld [vmem:[%s1 + $0x120] sm:$0xf]
  %v184 = vld [vmem:[%s1 + $0x124] sm:$0xf]
  %v185 = vld [vmem:[%s1 + $0x128] sm:$0xf]
  %v186 = vld [vmem:[%s1 + $0x12c] sm:$0xf]
  %v187 = vld [vmem:[%s1 + $0x130] sm:$0xf]
  %v188 = vld [vmem:[%s1 + $0x134] sm:$0xf]
  %v189 = vld [vmem:[%s1 + $0x138] sm:$0xf]
  %v190 = vld [vmem:[%s1 + $0x13c] sm:$0xf]
  %v191 = vld [vmem:[%s1 + $0x140] sm:$0xf]
  %v192 = vld [vmem:[%s1 + $0x144] sm:$0xf]
  %v193 = vld [vmem:[%s1 + $0x148] sm:$0xf]
  %v194 = vld [vmem:[%s1 + $0x14c] sm:$0xf]
  %v195 = vld [vmem:[%s1 + $0x150] sm:$0xf]
  %v196 = vld [vmem:[%s1 + $0x154] sm:$0xf]
  %v197 = vld [vmem:[%s1 + $0x158] sm:$0xf]
  %v198 = vld [vmem:[%s1 + $0x15c] sm:$0xf]
  %v199 = vld [vmem:[%s1 + $0x160] sm:$0xf]
  %v200 = vld [vmem:[%s1 + $0x164] sm:$0xf]
  %v201 = vld [vmem:[%s1 + $0x168] sm:$0xf]
  %v202 = vld [vmem:[%s1 + $0x16c] sm:$0xf]
  %v203 = vld [vmem:[%s1 + $0x170] sm:$0xf]
  %v204 = vld [vmem:[%s1 + $0x174] sm:$0xf]
  %v205 = vld [vmem:[%s1 + $0x178] sm:$0xf]
  %v206 = vld [vmem:[%s1 + $0x17c] sm:$0xf]
  %v207 = vld [vmem:[%s2] sm:$0x1]
  %v209 = vlaneseq
  %v210 = vshrl.u32 %v209, 7
  %v211 = vsub.s32 0, %v210
  %v212 = vrot.slane %v207, %v211
  %v310 = vunpack.c.l.b16 %v15
  %v311 = vunpack.c.h.b16 %v15
  %v312 = vunpack.c.l.b16 %v16
  %v313 = vunpack.c.h.b16 %v16
  %v314 = vunpack.c.l.b16 %v17
  %v315 = vunpack.c.h.b16 %v17
  %v316 = vunpack.c.l.b16 %v18
  %v317 = vunpack.c.h.b16 %v18
  %v318 = vunpack.c.l.b16 %v19
  %v319 = vunpack.c.h.b16 %v19
  %v320 = vunpack.c.l.b16 %v20
  %v321 = vunpack.c.h.b16 %v20
  %v322 = vunpack.c.l.b16 %v21
  %v323 = vunpack.c.h.b16 %v21
  %v324 = vunpack.c.l.b16 %v22
  %v325 = vunpack.c.h.b16 %v22
  %v326 = vunpack.c.l.b16 %v23
  %v327 = vunpack.c.h.b16 %v23
  %v328 = vunpack.c.l.b16 %v24
  %v329 = vunpack.c.h.b16 %v24
  %v330 = vunpack.c.l.b16 %v25
  %v331 = vunpack.c.h.b16 %v25
  %v332 = vunpack.c.l.b16 %v26
  %v333 = vunpack.c.h.b16 %v26
  %v334 = vunpack.c.l.b16 %v27
  %v335 = vunpack.c.h.b16 %v27
  %v336 = vunpack.c.l.b16 %v28
  %v337 = vunpack.c.h.b16 %v28
  %v338 = vunpack.c.l.b16 %v29
  %v339 = vunpack.c.h.b16 %v29
  %v340 = vunpack.c.l.b16 %v30
  %v341 = vunpack.c.h.b16 %v30
  %v342 = vunpack.c.l.b16 %v31
  %v343 = vunpack.c.h.b16 %v31
  %v344 = vunpack.c.l.b16 %v32
  %v345 = vunpack.c.h.b16 %v32
  %v346 = vunpack.c.l.b16 %v33
  %v347 = vunpack.c.h.b16 %v33
  %v348 = vunpack.c.l.b16 %v34
  %v349 = vunpack.c.h.b16 %v34
  %v350 = vunpack.c.l.b16 %v35
  %v351 = vunpack.c.h.b16 %v35
  %v352 = vunpack.c.l.b16 %v36
  %v353 = vunpack.c.h.b16 %v36
  %v354 = vunpack.c.l.b16 %v37
  %v355 = vunpack.c.h.b16 %v37
  %v356 = vunpack.c.l.b16 %v38
  %v357 = vunpack.c.h.b16 %v38
  %v358 = vunpack.c.l.b16 %v39
  %v359 = vunpack.c.h.b16 %v39
  %v360 = vunpack.c.l.b16 %v40
  %v361 = vunpack.c.h.b16 %v40
  %v362 = vunpack.c.l.b16 %v41
  %v363 = vunpack.c.h.b16 %v41
  %v364 = vunpack.c.l.b16 %v42
  %v365 = vunpack.c.h.b16 %v42
  %v366 = vunpack.c.l.b16 %v43
  %v367 = vunpack.c.h.b16 %v43
  %v368 = vunpack.c.l.b16 %v44
  %v369 = vunpack.c.h.b16 %v44
  %v370 = vunpack.c.l.b16 %v45
  %v371 = vunpack.c.h.b16 %v45
  %v372 = vunpack.c.l.b16 %v46
  %v373 = vunpack.c.h.b16 %v46
  %v374 = vunpack.c.l.b16 %v47
  %v375 = vunpack.c.h.b16 %v47
  %v376 = vunpack.c.l.b16 %v48
  %v377 = vunpack.c.h.b16 %v48
  %v378 = vunpack.c.l.b16 %v49
  %v379 = vunpack.c.h.b16 %v49
  %v380 = vunpack.c.l.b16 %v50
  %v381 = vunpack.c.h.b16 %v50
  %v382 = vunpack.c.l.b16 %v51
  %v383 = vunpack.c.h.b16 %v51
  %v384 = vunpack.c.l.b16 %v52
  %v385 = vunpack.c.h.b16 %v52
  %v386 = vunpack.c.l.b16 %v53
  %v387 = vunpack.c.h.b16 %v53
  %v388 = vunpack.c.l.b16 %v54
  %v389 = vunpack.c.h.b16 %v54
  %v390 = vunpack.c.l.b16 %v55
  %v391 = vunpack.c.h.b16 %v55
  %v392 = vunpack.c.l.b16 %v56
  %v393 = vunpack.c.h.b16 %v56
  %v394 = vunpack.c.l.b16 %v57
  %v395 = vunpack.c.h.b16 %v57
  %v396 = vunpack.c.l.b16 %v58
  %v397 = vunpack.c.h.b16 %v58
  %v398 = vunpack.c.l.b16 %v59
  %v399 = vunpack.c.h.b16 %v59
  %v400 = vunpack.c.l.b16 %v60
  %v401 = vunpack.c.h.b16 %v60
  %v402 = vunpack.c.l.b16 %v61
  %v403 = vunpack.c.h.b16 %v61
  %v404 = vunpack.c.l.b16 %v62
  %v405 = vunpack.c.h.b16 %v62
  %v406 = vunpack.c.l.b16 %v63
  %v407 = vunpack.c.h.b16 %v63
  %v408 = vunpack.c.l.b16 %v64
  %v409 = vunpack.c.h.b16 %v64
  %v410 = vunpack.c.l.b16 %v65
  %v411 = vunpack.c.h.b16 %v65
  %v412 = vunpack.c.l.b16 %v66
  %v413 = vunpack.c.h.b16 %v66
  %v414 = vunpack.c.l.b16 %v67
  %v415 = vunpack.c.h.b16 %v67
  %v416 = vunpack.c.l.b16 %v68
  %v417 = vunpack.c.h.b16 %v68
  %v418 = vunpack.c.l.b16 %v69
  %v419 = vunpack.c.h.b16 %v69
  %v420 = vunpack.c.l.b16 %v70
  %v421 = vunpack.c.h.b16 %v70
  %v422 = vunpack.c.l.b16 %v71
  %v423 = vunpack.c.h.b16 %v71
  %v424 = vunpack.c.l.b16 %v72
  %v425 = vunpack.c.h.b16 %v72
  %v426 = vunpack.c.l.b16 %v73
  %v427 = vunpack.c.h.b16 %v73
  %v428 = vunpack.c.l.b16 %v74
  %v429 = vunpack.c.h.b16 %v74
  %v430 = vunpack.c.l.b16 %v75
  %v431 = vunpack.c.h.b16 %v75
  %v432 = vunpack.c.l.b16 %v76
  %v433 = vunpack.c.h.b16 %v76
  %v434 = vunpack.c.l.b16 %v77
  %v435 = vunpack.c.h.b16 %v77
  %v436 = vunpack.c.l.b16 %v78
  %v437 = vunpack.c.h.b16 %v78
  %v438 = vunpack.c.l.b16 %v79
  %v439 = vunpack.c.h.b16 %v79
  %v440 = vunpack.c.l.b16 %v80
  %v441 = vunpack.c.h.b16 %v80
  %v442 = vunpack.c.l.b16 %v81
  %v443 = vunpack.c.h.b16 %v81
  %v444 = vunpack.c.l.b16 %v82
  %v445 = vunpack.c.h.b16 %v82
  %v446 = vunpack.c.l.b16 %v83
  %v447 = vunpack.c.h.b16 %v83
  %v448 = vunpack.c.l.b16 %v84
  %v449 = vunpack.c.h.b16 %v84
  %v450 = vunpack.c.l.b16 %v85
  %v451 = vunpack.c.h.b16 %v85
  %v452 = vunpack.c.l.b16 %v86
  %v453 = vunpack.c.h.b16 %v86
  %v454 = vunpack.c.l.b16 %v87
  %v455 = vunpack.c.h.b16 %v87
  %v456 = vunpack.c.l.b16 %v88
  %v457 = vunpack.c.h.b16 %v88
  %v458 = vunpack.c.l.b16 %v89
  %v459 = vunpack.c.h.b16 %v89
  %v460 = vunpack.c.l.b16 %v90
  %v461 = vunpack.c.h.b16 %v90
  %v462 = vunpack.c.l.b16 %v91
  %v463 = vunpack.c.h.b16 %v91
  %v464 = vunpack.c.l.b16 %v92
  %v465 = vunpack.c.h.b16 %v92
  %v466 = vunpack.c.l.b16 %v93
  %v467 = vunpack.c.h.b16 %v93
  %v468 = vunpack.c.l.b16 %v94
  %v469 = vunpack.c.h.b16 %v94
  %v470 = vunpack.c.l.b16 %v95
  %v471 = vunpack.c.h.b16 %v95
  %v472 = vunpack.c.l.b16 %v96
  %v473 = vunpack.c.h.b16 %v96
  %v474 = vunpack.c.l.b16 %v97
  %v475 = vunpack.c.h.b16 %v97
  %v476 = vunpack.c.l.b16 %v98
  %v477 = vunpack.c.h.b16 %v98
  %v478 = vunpack.c.l.b16 %v99
  %v479 = vunpack.c.h.b16 %v99
  %v480 = vunpack.c.l.b16 %v100
  %v481 = vunpack.c.h.b16 %v100
  %v482 = vunpack.c.l.b16 %v101
  %v483 = vunpack.c.h.b16 %v101
  %v484 = vunpack.c.l.b16 %v102
  %v485 = vunpack.c.h.b16 %v102
  %v486 = vunpack.c.l.b16 %v103
  %v487 = vunpack.c.h.b16 %v103
  %v488 = vunpack.c.l.b16 %v104
  %v489 = vunpack.c.h.b16 %v104
  %v490 = vunpack.c.l.b16 %v105
  %v491 = vunpack.c.h.b16 %v105
  %v492 = vunpack.c.l.b16 %v106
  %v493 = vunpack.c.h.b16 %v106
  %v494 = vunpack.c.l.b16 %v107
  %v495 = vunpack.c.h.b16 %v107
  %v496 = vunpack.c.l.b16 %v108
  %v497 = vunpack.c.h.b16 %v108
  %v498 = vunpack.c.l.b16 %v109
  %v499 = vunpack.c.h.b16 %v109
  %v500 = vunpack.c.l.b16 %v110
  %v501 = vunpack.c.h.b16 %v110
  %v502 = vpack.c.b16 %v316, %v310
  %v503 = vpack.c.b16 %v317, %v311
  %v504 = vpack.c.b16 %v318, %v312
  %v505 = vpack.c.b16 %v319, %v313
  %v506 = vpack.c.b16 %v320, %v314
  %v507 = vpack.c.b16 %v321, %v315
  %v508 = vpack.c.b16 %v328, %v322
  %v509 = vpack.c.b16 %v329, %v323
  %v510 = vpack.c.b16 %v330, %v324
  %v511 = vpack.c.b16 %v331, %v325
  %v512 = vpack.c.b16 %v332, %v326
  %v513 = vpack.c.b16 %v333, %v327
  %v514 = vpack.c.b16 %v340, %v334
  %v515 = vpack.c.b16 %v341, %v335
  %v516 = vpack.c.b16 %v342, %v336
  %v517 = vpack.c.b16 %v343, %v337
  %v518 = vpack.c.b16 %v344, %v338
  %v519 = vpack.c.b16 %v345, %v339
  %v520 = vpack.c.b16 %v352, %v346
  %v521 = vpack.c.b16 %v353, %v347
  %v522 = vpack.c.b16 %v354, %v348
  %v523 = vpack.c.b16 %v355, %v349
  %v524 = vpack.c.b16 %v356, %v350
  %v525 = vpack.c.b16 %v357, %v351
  %v526 = vpack.c.b16 %v364, %v358
  %v527 = vpack.c.b16 %v365, %v359
  %v528 = vpack.c.b16 %v366, %v360
  %v529 = vpack.c.b16 %v367, %v361
  %v530 = vpack.c.b16 %v368, %v362
  %v531 = vpack.c.b16 %v369, %v363
  %v532 = vpack.c.b16 %v376, %v370
  %v533 = vpack.c.b16 %v377, %v371
  %v534 = vpack.c.b16 %v378, %v372
  %v535 = vpack.c.b16 %v379, %v373
  %v536 = vpack.c.b16 %v380, %v374
  %v537 = vpack.c.b16 %v381, %v375
  %v538 = vpack.c.b16 %v388, %v382
  %v539 = vpack.c.b16 %v389, %v383
  %v540 = vpack.c.b16 %v390, %v384
  %v541 = vpack.c.b16 %v391, %v385
  %v542 = vpack.c.b16 %v392, %v386
  %v543 = vpack.c.b16 %v393, %v387
  %v544 = vpack.c.b16 %v400, %v394
  %v545 = vpack.c.b16 %v401, %v395
  %v546 = vpack.c.b16 %v402, %v396
  %v547 = vpack.c.b16 %v403, %v397
  %v548 = vpack.c.b16 %v404, %v398
  %v549 = vpack.c.b16 %v405, %v399
  %v550 = vpack.c.b16 %v412, %v406
  %v551 = vpack.c.b16 %v413, %v407
  %v552 = vpack.c.b16 %v414, %v408
  %v553 = vpack.c.b16 %v415, %v409
  %v554 = vpack.c.b16 %v416, %v410
  %v555 = vpack.c.b16 %v417, %v411
  %v556 = vpack.c.b16 %v424, %v418
  %v557 = vpack.c.b16 %v425, %v419
  %v558 = vpack.c.b16 %v426, %v420
  %v559 = vpack.c.b16 %v427, %v421
  %v560 = vpack.c.b16 %v428, %v422
  %v561 = vpack.c.b16 %v429, %v423
  %v562 = vpack.c.b16 %v436, %v430
  %v563 = vpack.c.b16 %v437, %v431
  %v564 = vpack.c.b16 %v438, %v432
  %v565 = vpack.c.b16 %v439, %v433
  %v566 = vpack.c.b16 %v440, %v434
  %v567 = vpack.c.b16 %v441, %v435
  %v568 = vpack.c.b16 %v448, %v442
  %v569 = vpack.c.b16 %v449, %v443
  %v570 = vpack.c.b16 %v450, %v444
  %v571 = vpack.c.b16 %v451, %v445
  %v572 = vpack.c.b16 %v452, %v446
  %v573 = vpack.c.b16 %v453, %v447
  %v574 = vpack.c.b16 %v460, %v454
  %v575 = vpack.c.b16 %v461, %v455
  %v576 = vpack.c.b16 %v462, %v456
  %v577 = vpack.c.b16 %v463, %v457
  %v578 = vpack.c.b16 %v464, %v458
  %v579 = vpack.c.b16 %v465, %v459
  %v580 = vpack.c.b16 %v472, %v466
  %v581 = vpack.c.b16 %v473, %v467
  %v582 = vpack.c.b16 %v474, %v468
  %v583 = vpack.c.b16 %v475, %v469
  %v584 = vpack.c.b16 %v476, %v470
  %v585 = vpack.c.b16 %v477, %v471
  %v586 = vpack.c.b16 %v484, %v478
  %v587 = vpack.c.b16 %v485, %v479
  %v588 = vpack.c.b16 %v486, %v480
  %v589 = vpack.c.b16 %v487, %v481
  %v590 = vpack.c.b16 %v488, %v482
  %v591 = vpack.c.b16 %v489, %v483
  %v592 = vpack.c.b16 %v496, %v490
  %v593 = vpack.c.b16 %v497, %v491
  %v594 = vpack.c.b16 %v498, %v492
  %v595 = vpack.c.b16 %v499, %v493
  %v596 = vpack.c.b16 %v500, %v494
  %v597 = vpack.c.b16 %v501, %v495
  %v790 = vunpack.c.l.b16 %v111
  %v791 = vunpack.c.l.b16 %v112
  %v792 = vunpack.c.l.b16 %v113
  %v793 = vunpack.c.l.b16 %v114
  %v794 = vunpack.c.l.b16 %v115
  %v795 = vunpack.c.l.b16 %v116
  %v796 = vunpack.c.l.b16 %v117
  %v797 = vunpack.c.l.b16 %v118
  %v798 = vunpack.c.l.b16 %v119
  %v799 = vunpack.c.l.b16 %v120
  %v800 = vunpack.c.l.b16 %v121
  %v801 = vunpack.c.l.b16 %v122
  %v802 = vunpack.c.l.b16 %v123
  %v803 = vunpack.c.l.b16 %v124
  %v804 = vunpack.c.l.b16 %v125
  %v805 = vunpack.c.l.b16 %v126
  %v806 = vunpack.c.l.b16 %v127
  %v807 = vunpack.c.l.b16 %v128
  %v808 = vunpack.c.l.b16 %v129
  %v809 = vunpack.c.l.b16 %v130
  %v810 = vunpack.c.l.b16 %v131
  %v811 = vunpack.c.l.b16 %v132
  %v812 = vunpack.c.l.b16 %v133
  %v813 = vunpack.c.l.b16 %v134
  %v814 = vunpack.c.l.b16 %v135
  %v815 = vunpack.c.l.b16 %v136
  %v816 = vunpack.c.l.b16 %v137
  %v817 = vunpack.c.l.b16 %v138
  %v818 = vunpack.c.l.b16 %v139
  %v819 = vunpack.c.l.b16 %v140
  %v820 = vunpack.c.l.b16 %v141
  %v821 = vunpack.c.l.b16 %v142
  %v822 = vunpack.c.l.b16 %v143
  %v823 = vunpack.c.l.b16 %v144
  %v824 = vunpack.c.l.b16 %v145
  %v825 = vunpack.c.l.b16 %v146
  %v826 = vunpack.c.l.b16 %v147
  %v827 = vunpack.c.l.b16 %v148
  %v828 = vunpack.c.l.b16 %v149
  %v829 = vunpack.c.l.b16 %v150
  %v830 = vunpack.c.l.b16 %v151
  %v831 = vunpack.c.l.b16 %v152
  %v832 = vunpack.c.l.b16 %v153
  %v833 = vunpack.c.l.b16 %v154
  %v834 = vunpack.c.l.b16 %v155
  %v835 = vunpack.c.l.b16 %v156
  %v836 = vunpack.c.l.b16 %v157
  %v837 = vunpack.c.l.b16 %v158
  %v838 = vunpack.c.l.b16 %v159
  %v839 = vunpack.c.l.b16 %v160
  %v840 = vunpack.c.l.b16 %v161
  %v841 = vunpack.c.l.b16 %v162
  %v842 = vunpack.c.l.b16 %v163
  %v843 = vunpack.c.l.b16 %v164
  %v844 = vunpack.c.l.b16 %v165
  %v845 = vunpack.c.l.b16 %v166
  %v846 = vunpack.c.l.b16 %v167
  %v847 = vunpack.c.l.b16 %v168
  %v848 = vunpack.c.l.b16 %v169
  %v849 = vunpack.c.l.b16 %v170
  %v850 = vunpack.c.l.b16 %v171
  %v851 = vunpack.c.l.b16 %v172
  %v852 = vunpack.c.l.b16 %v173
  %v853 = vunpack.c.l.b16 %v174
  %v854 = vunpack.c.l.b16 %v175
  %v855 = vunpack.c.l.b16 %v176
  %v856 = vunpack.c.l.b16 %v177
  %v857 = vunpack.c.l.b16 %v178
  %v858 = vunpack.c.l.b16 %v179
  %v859 = vunpack.c.l.b16 %v180
  %v860 = vunpack.c.l.b16 %v181
  %v861 = vunpack.c.l.b16 %v182
  %v862 = vunpack.c.l.b16 %v183
  %v863 = vunpack.c.l.b16 %v184
  %v864 = vunpack.c.l.b16 %v185
  %v865 = vunpack.c.l.b16 %v186
  %v866 = vunpack.c.l.b16 %v187
  %v867 = vunpack.c.l.b16 %v188
  %v868 = vunpack.c.l.b16 %v189
  %v869 = vunpack.c.l.b16 %v190
  %v870 = vunpack.c.l.b16 %v191
  %v871 = vunpack.c.l.b16 %v192
  %v872 = vunpack.c.l.b16 %v193
  %v873 = vunpack.c.l.b16 %v194
  %v874 = vunpack.c.l.b16 %v195
  %v875 = vunpack.c.l.b16 %v196
  %v876 = vunpack.c.l.b16 %v197
  %v877 = vunpack.c.l.b16 %v198
  %v878 = vunpack.c.l.b16 %v199
  %v879 = vunpack.c.l.b16 %v200
  %v880 = vunpack.c.l.b16 %v201
  %v881 = vunpack.c.l.b16 %v202
  %v882 = vunpack.c.l.b16 %v203
  %v883 = vunpack.c.l.b16 %v204
  %v884 = vunpack.c.l.b16 %v205
  %v885 = vunpack.c.l.b16 %v206
  %v886 = vpack.c.b16 %v791, %v790
  %v887 = vpack.c.b16 %v793, %v792
  %v888 = vpack.c.b16 %v795, %v794
  %v889 = vpack.c.b16 %v797, %v796
  %v890 = vpack.c.b16 %v799, %v798
  %v891 = vpack.c.b16 %v801, %v800
  %v892 = vpack.c.b16 %v803, %v802
  %v893 = vpack.c.b16 %v805, %v804
  %v894 = vpack.c.b16 %v807, %v806
  %v895 = vpack.c.b16 %v809, %v808
  %v896 = vpack.c.b16 %v811, %v810
  %v897 = vpack.c.b16 %v813, %v812
  %v898 = vpack.c.b16 %v815, %v814
  %v899 = vpack.c.b16 %v817, %v816
  %v900 = vpack.c.b16 %v819, %v818
  %v901 = vpack.c.b16 %v821, %v820
  %v902 = vpack.c.b16 %v823, %v822
  %v903 = vpack.c.b16 %v825, %v824
  %v904 = vpack.c.b16 %v827, %v826
  %v905 = vpack.c.b16 %v829, %v828
  %v906 = vpack.c.b16 %v831, %v830
  %v907 = vpack.c.b16 %v833, %v832
  %v908 = vpack.c.b16 %v835, %v834
  %v909 = vpack.c.b16 %v837, %v836
  %v910 = vpack.c.b16 %v839, %v838
  %v911 = vpack.c.b16 %v841, %v840
  %v912 = vpack.c.b16 %v843, %v842
  %v913 = vpack.c.b16 %v845, %v844
  %v914 = vpack.c.b16 %v847, %v846
  %v915 = vpack.c.b16 %v849, %v848
  %v916 = vpack.c.b16 %v851, %v850
  %v917 = vpack.c.b16 %v853, %v852
  %v918 = vpack.c.b16 %v855, %v854
  %v919 = vpack.c.b16 %v857, %v856
  %v920 = vpack.c.b16 %v859, %v858
  %v921 = vpack.c.b16 %v861, %v860
  %v922 = vpack.c.b16 %v863, %v862
  %v923 = vpack.c.b16 %v865, %v864
  %v924 = vpack.c.b16 %v867, %v866
  %v925 = vpack.c.b16 %v869, %v868
  %v926 = vpack.c.b16 %v871, %v870
  %v927 = vpack.c.b16 %v873, %v872
  %v928 = vpack.c.b16 %v875, %v874
  %v929 = vpack.c.b16 %v877, %v876
  %v930 = vpack.c.b16 %v879, %v878
  %v931 = vpack.c.b16 %v881, %v880
  %v932 = vpack.c.b16 %v883, %v882
  %v933 = vpack.c.b16 %v885, %v884
  %982 = vmatprep.subr.bf16.mxu0 0
  %983 = vmatpush1.bf16.msra.mxu0 %v886
  %984 = vmatprep.subr.bf16.mxu0 0
  %985 = vmatpush1.bf16.msra.mxu0 %v887
  %986 = vmatprep.subr.bf16.mxu0 0
  %987 = vmatpush1.bf16.msra.mxu0 %v888
  %988 = vmatprep.subr.bf16.mxu0 0
  %989 = vmatpush1.bf16.msra.mxu0 %v889
  %990 = vmatprep.subr.bf16.mxu0 0
  %991 = vmatpush1.bf16.msra.mxu0 %v890
  %992 = vmatprep.subr.bf16.mxu0 0
  %993 = vmatpush1.bf16.msra.mxu0 %v891
  %994 = vmatprep.subr.bf16.mxu0 0
  %995 = vmatpush1.bf16.msra.mxu0 %v892
  %996 = vmatprep.subr.bf16.mxu0 0
  %997 = vmatpush1.bf16.msra.mxu0 %v893
  %998 = vmatprep.subr.bf16.mxu0 0
  %999 = vmatpush1.bf16.msra.mxu0 %v894
  %1000 = vmatprep.subr.bf16.mxu0 0
  %1001 = vmatpush1.bf16.msra.mxu0 %v895
  %1002 = vmatprep.subr.bf16.mxu0 0
  %1003 = vmatpush1.bf16.msra.mxu0 %v896
  %1004 = vmatprep.subr.bf16.mxu0 0
  %1005 = vmatpush1.bf16.msra.mxu0 %v897
  %1006 = vmatprep.subr.bf16.mxu0 0
  %1007 = vmatpush1.bf16.msra.mxu0 %v898
  %1008 = vmatprep.subr.bf16.mxu0 0
  %1009 = vmatpush1.bf16.msra.mxu0 %v899
  %1010 = vmatprep.subr.bf16.mxu0 0
  %1011 = vmatpush1.bf16.msra.mxu0 %v900
  %1012 = vmatprep.subr.bf16.mxu0 0
  %1013 = vmatpush1.bf16.msra.mxu0 %v901
  %1014 = vmatprep.mubr.bf16.mxu0 %v503
  %1015 = vmatmul.mubr.bf16.gmra.mrb[0].mxu0 %v502
  %v1016 = vpop.f32.mrb[0].mxu0
  %v1017 = vadd.f32 %v212, %v1016
  %v1018 = vpop.f32.mrb[0].mxu0
  %v1019 = vpop.f32.mrb[0].mxu0
  %v1020 = vadd.f32 %v212, %v1019
  %v1021 = vpop.f32.mrb[0].mxu0
  %1022 = vmatprep.mubr.bf16.mxu0 %v509
  %1023 = vmatmul.mubr.bf16.gmra.mrb[0].mxu0 %v508
  %v1024 = vpop.f32.mrb[0].mxu0
  %v1025 = vadd.f32 %v212, %v1024
  %v1026 = vpop.f32.mrb[0].mxu0
  %v1027 = vpop.f32.mrb[0].mxu0
  %v1028 = vadd.f32 %v212, %v1027
  %v1029 = vpop.f32.mrb[0].mxu0
  %1030 = vmatprep.mubr.bf16.mxu0 %v515
  %1031 = vmatmul.mubr.bf16.gmra.mrb[0].mxu0 %v514
  %v1032 = vpop.f32.mrb[0].mxu0
  %v1033 = vadd.f32 %v212, %v1032
  %v1034 = vpop.f32.mrb[0].mxu0
  %v1035 = vpop.f32.mrb[0].mxu0
  %v1036 = vadd.f32 %v212, %v1035
  %v1037 = vpop.f32.mrb[0].mxu0
  %1038 = vmatprep.mubr.bf16.mxu0 %v521
  %1039 = vmatmul.mubr.bf16.gmra.mrb[0].mxu0 %v520
  %v1040 = vpop.f32.mrb[0].mxu0
  %v1041 = vadd.f32 %v212, %v1040
  %v1042 = vpop.f32.mrb[0].mxu0
  %v1043 = vpop.f32.mrb[0].mxu0
  %v1044 = vadd.f32 %v212, %v1043
  %v1045 = vpop.f32.mrb[0].mxu0
  %1046 = vmatprep.mubr.bf16.mxu0 %v527
  %1047 = vmatmul.mubr.bf16.gmra.mrb[0].mxu0 %v526
  %v1048 = vpop.f32.mrb[0].mxu0
  %v1049 = vadd.f32 %v212, %v1048
  %v1050 = vpop.f32.mrb[0].mxu0
  %v1051 = vpop.f32.mrb[0].mxu0
  %v1052 = vadd.f32 %v212, %v1051
  %v1053 = vpop.f32.mrb[0].mxu0
  %1054 = vmatprep.mubr.bf16.mxu0 %v533
  %1055 = vmatmul.mubr.bf16.gmra.mrb[0].mxu0 %v532
  %v1056 = vpop.f32.mrb[0].mxu0
  %v1057 = vadd.f32 %v212, %v1056
  %v1058 = vpop.f32.mrb[0].mxu0
  %v1059 = vpop.f32.mrb[0].mxu0
  %v1060 = vadd.f32 %v212, %v1059
  %v1061 = vpop.f32.mrb[0].mxu0
  %1062 = vmatprep.mubr.bf16.mxu0 %v539
  %1063 = vmatmul.mubr.bf16.gmra.mrb[0].mxu0 %v538
  %v1064 = vpop.f32.mrb[0].mxu0
  %v1065 = vadd.f32 %v212, %v1064
  %v1066 = vpop.f32.mrb[0].mxu0
  %v1067 = vpop.f32.mrb[0].mxu0
  %v1068 = vadd.f32 %v212, %v1067
  %v1069 = vpop.f32.mrb[0].mxu0
  %1070 = vmatprep.mubr.bf16.mxu0 %v545
  %1071 = vmatmul.mubr.bf16.gmra.mrb[0].mxu0 %v544
  %v1072 = vpop.f32.mrb[0].mxu0
  %v1073 = vadd.f32 %v212, %v1072
  %v1074 = vpop.f32.mrb[0].mxu0
  %v1075 = vpop.f32.mrb[0].mxu0
  %v1076 = vadd.f32 %v212, %v1075
  %v1077 = vpop.f32.mrb[0].mxu0
  %1078 = vmatprep.mubr.bf16.mxu0 %v551
  %1079 = vmatmul.mubr.bf16.gmra.mrb[0].mxu0 %v550
  %v1080 = vpop.f32.mrb[0].mxu0
  %v1081 = vadd.f32 %v212, %v1080
  %v1082 = vpop.f32.mrb[0].mxu0
  %v1083 = vpop.f32.mrb[0].mxu0
  %v1084 = vadd.f32 %v212, %v1083
  %v1085 = vpop.f32.mrb[0].mxu0
  %1086 = vmatprep.mubr.bf16.mxu0 %v557
  %1087 = vmatmul.mubr.bf16.gmra.mrb[0].mxu0 %v556
  %v1088 = vpop.f32.mrb[0].mxu0
  %v1089 = vadd.f32 %v212, %v1088
  %v1090 = vpop.f32.mrb[0].mxu0
  %v1091 = vpop.f32.mrb[0].mxu0
  %v1092 = vadd.f32 %v212, %v1091
  %v1093 = vpop.f32.mrb[0].mxu0
  %1094 = vmatprep.mubr.bf16.mxu0 %v563
  %1095 = vmatmul.mubr.bf16.gmra.mrb[0].mxu0 %v562
  %v1096 = vpop.f32.mrb[0].mxu0
  %v1097 = vadd.f32 %v212, %v1096
  %v1098 = vpop.f32.mrb[0].mxu0
  %v1099 = vpop.f32.mrb[0].mxu0
  %v1100 = vadd.f32 %v212, %v1099
  %v1101 = vpop.f32.mrb[0].mxu0
  %1102 = vmatprep.mubr.bf16.mxu0 %v569
  %1103 = vmatmul.mubr.bf16.gmra.mrb[0].mxu0 %v568
  %v1104 = vpop.f32.mrb[0].mxu0
  %v1105 = vadd.f32 %v212, %v1104
  %v1106 = vpop.f32.mrb[0].mxu0
  %v1107 = vpop.f32.mrb[0].mxu0
  %v1108 = vadd.f32 %v212, %v1107
  %v1109 = vpop.f32.mrb[0].mxu0
  %1110 = vmatprep.mubr.bf16.mxu0 %v575
  %1111 = vmatmul.mubr.bf16.gmra.mrb[0].mxu0 %v574
  %v1112 = vpop.f32.mrb[0].mxu0
  %v1113 = vadd.f32 %v212, %v1112
  %v1114 = vpop.f32.mrb[0].mxu0
  %v1115 = vpop.f32.mrb[0].mxu0
  %v1116 = vadd.f32 %v212, %v1115
  %v1117 = vpop.f32.mrb[0].mxu0
  %1118 = vmatprep.mubr.bf16.mxu0 %v581
  %1119 = vmatmul.mubr.bf16.gmra.mrb[0].mxu0 %v580
  %v1120 = vpop.f32.mrb[0].mxu0
  %v1121 = vadd.f32 %v212, %v1120
  %v1122 = vpop.f32.mrb[0].mxu0
  %v1123 = vpop.f32.mrb[0].mxu0
  %v1124 = vadd.f32 %v212, %v1123
  %v1125 = vpop.f32.mrb[0].mxu0
  %1126 = vmatprep.mubr.bf16.mxu0 %v587
  %1127 = vmatmul.mubr.bf16.gmra.mrb[0].mxu0 %v586
  %v1128 = vpop.f32.mrb[0].mxu0
  %v1129 = vadd.f32 %v212, %v1128
  %v1130 = vpop.f32.mrb[0].mxu0
  %v1131 = vpop.f32.mrb[0].mxu0
  %v1132 = vadd.f32 %v212, %v1131
  %v1133 = vpop.f32.mrb[0].mxu0
  %1134 = vmatprep.mubr.bf16.mxu0 %v593
  %1135 = vmatmul.mubr.bf16.gmra.mrb[0].mxu0 %v592
  %v1136 = vpop.f32.mrb[0].mxu0
  %v1137 = vadd.f32 %v212, %v1136
  %v1138 = vpop.f32.mrb[0].mxu0
  %v1139 = vpop.f32.mrb[0].mxu0
  %v1140 = vadd.f32 %v212, %v1139
  %v1141 = vpop.f32.mrb[0].mxu0
  %1142 = vdwg.mxu0
  %1143 = vmatprep.subr.bf16.mxu0 0
  %1144 = vmatpush1.bf16.msra.mxu0 %v902
  %1145 = vmatprep.subr.bf16.mxu0 0
  %1146 = vmatpush1.bf16.msra.mxu0 %v903
  %1147 = vmatprep.subr.bf16.mxu0 0
  %1148 = vmatpush1.bf16.msra.mxu0 %v904
  %1149 = vmatprep.subr.bf16.mxu0 0
  %1150 = vmatpush1.bf16.msra.mxu0 %v905
  %1151 = vmatprep.subr.bf16.mxu0 0
  %1152 = vmatpush1.bf16.msra.mxu0 %v906
  %1153 = vmatprep.subr.bf16.mxu0 0
  %1154 = vmatpush1.bf16.msra.mxu0 %v907
  %1155 = vmatprep.subr.bf16.mxu0 0
  %1156 = vmatpush1.bf16.msra.mxu0 %v908
  %1157 = vmatprep.subr.bf16.mxu0 0
  %1158 = vmatpush1.bf16.msra.mxu0 %v909
  %1159 = vmatprep.subr.bf16.mxu0 0
  %1160 = vmatpush1.bf16.msra.mxu0 %v910
  %1161 = vmatprep.subr.bf16.mxu0 0
  %1162 = vmatpush1.bf16.msra.mxu0 %v911
  %1163 = vmatprep.subr.bf16.mxu0 0
  %1164 = vmatpush1.bf16.msra.mxu0 %v912
  %1165 = vmatprep.subr.bf16.mxu0 0
  %1166 = vmatpush1.bf16.msra.mxu0 %v913
  %1167 = vmatprep.subr.bf16.mxu0 0
  %1168 = vmatpush1.bf16.msra.mxu0 %v914
  %1169 = vmatprep.subr.bf16.mxu0 0
  %1170 = vmatpush1.bf16.msra.mxu0 %v915
  %1171 = vmatprep.subr.bf16.mxu0 0
  %1172 = vmatpush1.bf16.msra.mxu0 %v916
  %1173 = vmatprep.subr.bf16.mxu0 0
  %1174 = vmatpush1.bf16.msra.mxu0 %v917
  %1175 = vmatprep.mubr.bf16.mxu0 %v505
  %1176 = vmatmul.mubr.bf16.gmra.mrb[0].mxu0 %v504
  %v1177 = vpop.f32.mrb[0].mxu0
  %v1178 = vadd.f32 %v1017, %v1177
  %v1179 = vpop.f32.mrb[0].mxu0
  %v1180 = vpop.f32.mrb[0].mxu0
  %v1181 = vadd.f32 %v1020, %v1180
  %v1182 = vpop.f32.mrb[0].mxu0
  %1183 = vmatprep.mubr.bf16.mxu0 %v511
  %1184 = vmatmul.mubr.bf16.gmra.mrb[0].mxu0 %v510
  %v1185 = vpop.f32.mrb[0].mxu0
  %v1186 = vadd.f32 %v1025, %v1185
  %v1187 = vpop.f32.mrb[0].mxu0
  %v1188 = vpop.f32.mrb[0].mxu0
  %v1189 = vadd.f32 %v1028, %v1188
  %v1190 = vpop.f32.mrb[0].mxu0
  %1191 = vmatprep.mubr.bf16.mxu0 %v517
  %1192 = vmatmul.mubr.bf16.gmra.mrb[0].mxu0 %v516
  %v1193 = vpop.f32.mrb[0].mxu0
  %v1194 = vadd.f32 %v1033, %v1193
  %v1195 = vpop.f32.mrb[0].mxu0
  %v1196 = vpop.f32.mrb[0].mxu0
  %v1197 = vadd.f32 %v1036, %v1196
  %v1198 = vpop.f32.mrb[0].mxu0
  %1199 = vmatprep.mubr.bf16.mxu0 %v523
  %1200 = vmatmul.mubr.bf16.gmra.mrb[0].mxu0 %v522
  %v1201 = vpop.f32.mrb[0].mxu0
  %v1202 = vadd.f32 %v1041, %v1201
  %v1203 = vpop.f32.mrb[0].mxu0
  %v1204 = vpop.f32.mrb[0].mxu0
  %v1205 = vadd.f32 %v1044, %v1204
  %v1206 = vpop.f32.mrb[0].mxu0
  %1207 = vmatprep.mubr.bf16.mxu0 %v529
  %1208 = vmatmul.mubr.bf16.gmra.mrb[0].mxu0 %v528
  %v1209 = vpop.f32.mrb[0].mxu0
  %v1210 = vadd.f32 %v1049, %v1209
  %v1211 = vpop.f32.mrb[0].mxu0
  %v1212 = vpop.f32.mrb[0].mxu0
  %v1213 = vadd.f32 %v1052, %v1212
  %v1214 = vpop.f32.mrb[0].mxu0
  %1215 = vmatprep.mubr.bf16.mxu0 %v535
  %1216 = vmatmul.mubr.bf16.gmra.mrb[0].mxu0 %v534
  %v1217 = vpop.f32.mrb[0].mxu0
  %v1218 = vadd.f32 %v1057, %v1217
  %v1219 = vpop.f32.mrb[0].mxu0
  %v1220 = vpop.f32.mrb[0].mxu0
  %v1221 = vadd.f32 %v1060, %v1220
  %v1222 = vpop.f32.mrb[0].mxu0
  %1223 = vmatprep.mubr.bf16.mxu0 %v541
  %1224 = vmatmul.mubr.bf16.gmra.mrb[0].mxu0 %v540
  %v1225 = vpop.f32.mrb[0].mxu0
  %v1226 = vadd.f32 %v1065, %v1225
  %v1227 = vpop.f32.mrb[0].mxu0
  %v1228 = vpop.f32.mrb[0].mxu0
  %v1229 = vadd.f32 %v1068, %v1228
  %v1230 = vpop.f32.mrb[0].mxu0
  %1231 = vmatprep.mubr.bf16.mxu0 %v547
  %1232 = vmatmul.mubr.bf16.gmra.mrb[0].mxu0 %v546
  %v1233 = vpop.f32.mrb[0].mxu0
  %v1234 = vadd.f32 %v1073, %v1233
  %v1235 = vpop.f32.mrb[0].mxu0
  %v1236 = vpop.f32.mrb[0].mxu0
  %v1237 = vadd.f32 %v1076, %v1236
  %v1238 = vpop.f32.mrb[0].mxu0
  %1239 = vmatprep.mubr.bf16.mxu0 %v553
  %1240 = vmatmul.mubr.bf16.gmra.mrb[0].mxu0 %v552
  %v1241 = vpop.f32.mrb[0].mxu0
  %v1242 = vadd.f32 %v1081, %v1241
  %v1243 = vpop.f32.mrb[0].mxu0
  %v1244 = vpop.f32.mrb[0].mxu0
  %v1245 = vadd.f32 %v1084, %v1244
  %v1246 = vpop.f32.mrb[0].mxu0
  %1247 = vmatprep.mubr.bf16.mxu0 %v559
  %1248 = vmatmul.mubr.bf16.gmra.mrb[0].mxu0 %v558
  %v1249 = vpop.f32.mrb[0].mxu0
  %v1250 = vadd.f32 %v1089, %v1249
  %v1251 = vpop.f32.mrb[0].mxu0
  %v1252 = vpop.f32.mrb[0].mxu0
  %v1253 = vadd.f32 %v1092, %v1252
  %v1254 = vpop.f32.mrb[0].mxu0
  %1255 = vmatprep.mubr.bf16.mxu0 %v565
  %1256 = vmatmul.mubr.bf16.gmra.mrb[0].mxu0 %v564
  %v1257 = vpop.f32.mrb[0].mxu0
  %v1258 = vadd.f32 %v1097, %v1257
  %v1259 = vpop.f32.mrb[0].mxu0
  %v1260 = vpop.f32.mrb[0].mxu0
  %v1261 = vadd.f32 %v1100, %v1260
  %v1262 = vpop.f32.mrb[0].mxu0
  %1263 = vmatprep.mubr.bf16.mxu0 %v571
  %1264 = vmatmul.mubr.bf16.gmra.mrb[0].mxu0 %v570
  %v1265 = vpop.f32.mrb[0].mxu0
  %v1266 = vadd.f32 %v1105, %v1265
  %v1267 = vpop.f32.mrb[0].mxu0
  %v1268 = vpop.f32.mrb[0].mxu0
  %v1269 = vadd.f32 %v1108, %v1268
  %v1270 = vpop.f32.mrb[0].mxu0
  %1271 = vmatprep.mubr.bf16.mxu0 %v577
  %1272 = vmatmul.mubr.bf16.gmra.mrb[0].mxu0 %v576
  %v1273 = vpop.f32.mrb[0].mxu0
  %v1274 = vadd.f32 %v1113, %v1273
  %v1275 = vpop.f32.mrb[0].mxu0
  %v1276 = vpop.f32.mrb[0].mxu0
  %v1277 = vadd.f32 %v1116, %v1276
  %v1278 = vpop.f32.mrb[0].mxu0
  %1279 = vmatprep.mubr.bf16.mxu0 %v583
  %1280 = vmatmul.mubr.bf16.gmra.mrb[0].mxu0 %v582
  %v1281 = vpop.f32.mrb[0].mxu0
  %v1282 = vadd.f32 %v1121, %v1281
  %v1283 = vpop.f32.mrb[0].mxu0
  %v1284 = vpop.f32.mrb[0].mxu0
  %v1285 = vadd.f32 %v1124, %v1284
  %v1286 = vpop.f32.mrb[0].mxu0
  %1287 = vmatprep.mubr.bf16.mxu0 %v589
  %1288 = vmatmul.mubr.bf16.gmra.mrb[0].mxu0 %v588
  %v1289 = vpop.f32.mrb[0].mxu0
  %v1290 = vadd.f32 %v1129, %v1289
  %v1291 = vpop.f32.mrb[0].mxu0
  %v1292 = vpop.f32.mrb[0].mxu0
  %v1293 = vadd.f32 %v1132, %v1292
  %v1294 = vpop.f32.mrb[0].mxu0
  %1295 = vmatprep.mubr.bf16.mxu0 %v595
  %1296 = vmatmul.mubr.bf16.gmra.mrb[0].mxu0 %v594
  %v1297 = vpop.f32.mrb[0].mxu0
  %v1298 = vadd.f32 %v1137, %v1297
  %v1299 = vpop.f32.mrb[0].mxu0
  %v1300 = vpop.f32.mrb[0].mxu0
  %v1301 = vadd.f32 %v1140, %v1300
  %v1302 = vpop.f32.mrb[0].mxu0
  %1303 = vdwg.mxu0
  %1304 = vmatprep.subr.bf16.mxu0 0
  %1305 = vmatpush1.bf16.msra.mxu0 %v918
  %1306 = vmatprep.subr.bf16.mxu0 0
  %1307 = vmatpush1.bf16.msra.mxu0 %v919
  %1308 = vmatprep.subr.bf16.mxu0 0
  %1309 = vmatpush1.bf16.msra.mxu0 %v920
  %1310 = vmatprep.subr.bf16.mxu0 0
  %1311 = vmatpush1.bf16.msra.mxu0 %v921
  %1312 = vmatprep.subr.bf16.mxu0 0
  %1313 = vmatpush1.bf16.msra.mxu0 %v922
  %1314 = vmatprep.subr.bf16.mxu0 0
  %1315 = vmatpush1.bf16.msra.mxu0 %v923
  %1316 = vmatprep.subr.bf16.mxu0 0
  %1317 = vmatpush1.bf16.msra.mxu0 %v924
  %1318 = vmatprep.subr.bf16.mxu0 0
  %1319 = vmatpush1.bf16.msra.mxu0 %v925
  %1320 = vmatprep.subr.bf16.mxu0 0
  %1321 = vmatpush1.bf16.msra.mxu0 %v926
  %1322 = vmatprep.subr.bf16.mxu0 0
  %1323 = vmatpush1.bf16.msra.mxu0 %v927
  %1324 = vmatprep.subr.bf16.mxu0 0
  %1325 = vmatpush1.bf16.msra.mxu0 %v928
  %1326 = vmatprep.subr.bf16.mxu0 0
  %1327 = vmatpush1.bf16.msra.mxu0 %v929
  %1328 = vmatprep.subr.bf16.mxu0 0
  %1329 = vmatpush1.bf16.msra.mxu0 %v930
  %1330 = vmatprep.subr.bf16.mxu0 0
  %1331 = vmatpush1.bf16.msra.mxu0 %v931
  %1332 = vmatprep.subr.bf16.mxu0 0
  %1333 = vmatpush1.bf16.msra.mxu0 %v932
  %1334 = vmatprep.subr.bf16.mxu0 0
  %1335 = vmatpush1.bf16.msra.mxu0 %v933
  %1336 = vmatprep.mubr.bf16.mxu0 %v507
  %1337 = vmatmul.mubr.bf16.gmra.mrb[0].mxu0 %v506
  %v1338 = vpop.f32.mrb[0].mxu0
  %v1339 = vadd.f32 %v1178, %v1338
  %v1340 = vpop.f32.mrb[0].mxu0
  %v1341 = vpop.f32.mrb[0].mxu0
  %v1342 = vadd.f32 %v1181, %v1341
  %v1343 = vpop.f32.mrb[0].mxu0
  %1344 = vmatprep.mubr.bf16.mxu0 %v513
  %1345 = vmatmul.mubr.bf16.gmra.mrb[0].mxu0 %v512
  %v1346 = vpop.f32.mrb[0].mxu0
  %v1347 = vadd.f32 %v1186, %v1346
  %v1348 = vpop.f32.mrb[0].mxu0
  %v1349 = vpop.f32.mrb[0].mxu0
  %v1350 = vadd.f32 %v1189, %v1349
  %v1351 = vpop.f32.mrb[0].mxu0
  %1352 = vmatprep.mubr.bf16.mxu0 %v519
  %1353 = vmatmul.mubr.bf16.gmra.mrb[0].mxu0 %v518
  %v1354 = vpop.f32.mrb[0].mxu0
  %v1355 = vadd.f32 %v1194, %v1354
  %v1356 = vpop.f32.mrb[0].mxu0
  %v1357 = vpop.f32.mrb[0].mxu0
  %v1358 = vadd.f32 %v1197, %v1357
  %v1359 = vpop.f32.mrb[0].mxu0
  %1360 = vmatprep.mubr.bf16.mxu0 %v525
  %1361 = vmatmul.mubr.bf16.gmra.mrb[0].mxu0 %v524
  %v1362 = vpop.f32.mrb[0].mxu0
  %v1363 = vadd.f32 %v1202, %v1362
  %v1364 = vpop.f32.mrb[0].mxu0
  %v1365 = vpop.f32.mrb[0].mxu0
  %v1366 = vadd.f32 %v1205, %v1365
  %v1367 = vpop.f32.mrb[0].mxu0
  %1368 = vmatprep.mubr.bf16.mxu0 %v531
  %1369 = vmatmul.mubr.bf16.gmra.mrb[0].mxu0 %v530
  %v1370 = vpop.f32.mrb[0].mxu0
  %v1371 = vadd.f32 %v1210, %v1370
  %v1372 = vpop.f32.mrb[0].mxu0
  %v1373 = vpop.f32.mrb[0].mxu0
  %v1374 = vadd.f32 %v1213, %v1373
  %v1375 = vpop.f32.mrb[0].mxu0
  %1376 = vmatprep.mubr.bf16.mxu0 %v537
  %1377 = vmatmul.mubr.bf16.gmra.mrb[0].mxu0 %v536
  %v1378 = vpop.f32.mrb[0].mxu0
  %v1379 = vadd.f32 %v1218, %v1378
  %v1380 = vpop.f32.mrb[0].mxu0
  %v1381 = vpop.f32.mrb[0].mxu0
  %v1382 = vadd.f32 %v1221, %v1381
  %v1383 = vpop.f32.mrb[0].mxu0
  %1384 = vmatprep.mubr.bf16.mxu0 %v543
  %1385 = vmatmul.mubr.bf16.gmra.mrb[0].mxu0 %v542
  %v1386 = vpop.f32.mrb[0].mxu0
  %v1387 = vadd.f32 %v1226, %v1386
  %v1388 = vpop.f32.mrb[0].mxu0
  %v1389 = vpop.f32.mrb[0].mxu0
  %v1390 = vadd.f32 %v1229, %v1389
  %v1391 = vpop.f32.mrb[0].mxu0
  %1392 = vmatprep.mubr.bf16.mxu0 %v549
  %1393 = vmatmul.mubr.bf16.gmra.mrb[0].mxu0 %v548
  %v1394 = vpop.f32.mrb[0].mxu0
  %v1395 = vadd.f32 %v1234, %v1394
  %v1396 = vpop.f32.mrb[0].mxu0
  %v1397 = vpop.f32.mrb[0].mxu0
  %v1398 = vadd.f32 %v1237, %v1397
  %v1399 = vpop.f32.mrb[0].mxu0
  %1400 = vmatprep.mubr.bf16.mxu0 %v555
  %1401 = vmatmul.mubr.bf16.gmra.mrb[0].mxu0 %v554
  %v1402 = vpop.f32.mrb[0].mxu0
  %v1403 = vadd.f32 %v1242, %v1402
  %v1404 = vpop.f32.mrb[0].mxu0
  %v1405 = vpop.f32.mrb[0].mxu0
  %v1406 = vadd.f32 %v1245, %v1405
  %v1407 = vpop.f32.mrb[0].mxu0
  %1408 = vmatprep.mubr.bf16.mxu0 %v561
  %1409 = vmatmul.mubr.bf16.gmra.mrb[0].mxu0 %v560
  %v1410 = vpop.f32.mrb[0].mxu0
  %v1411 = vadd.f32 %v1250, %v1410
  %v1412 = vpop.f32.mrb[0].mxu0
  %v1413 = vpop.f32.mrb[0].mxu0
  %v1414 = vadd.f32 %v1253, %v1413
  %v1415 = vpop.f32.mrb[0].mxu0
  %1416 = vmatprep.mubr.bf16.mxu0 %v567
  %1417 = vmatmul.mubr.bf16.gmra.mrb[0].mxu0 %v566
  %v1418 = vpop.f32.mrb[0].mxu0
  %v1419 = vadd.f32 %v1258, %v1418
  %v1420 = vpop.f32.mrb[0].mxu0
  %v1421 = vpop.f32.mrb[0].mxu0
  %v1422 = vadd.f32 %v1261, %v1421
  %v1423 = vpop.f32.mrb[0].mxu0
  %1424 = vmatprep.mubr.bf16.mxu0 %v573
  %1425 = vmatmul.mubr.bf16.gmra.mrb[0].mxu0 %v572
  %v1426 = vpop.f32.mrb[0].mxu0
  %v1427 = vadd.f32 %v1266, %v1426
  %v1428 = vpop.f32.mrb[0].mxu0
  %v1429 = vpop.f32.mrb[0].mxu0
  %v1430 = vadd.f32 %v1269, %v1429
  %v1431 = vpop.f32.mrb[0].mxu0
  %1432 = vmatprep.mubr.bf16.mxu0 %v579
  %1433 = vmatmul.mubr.bf16.gmra.mrb[0].mxu0 %v578
  %v1434 = vpop.f32.mrb[0].mxu0
  %v1435 = vadd.f32 %v1274, %v1434
  %v1436 = vpop.f32.mrb[0].mxu0
  %v1437 = vpop.f32.mrb[0].mxu0
  %v1438 = vadd.f32 %v1277, %v1437
  %v1439 = vpop.f32.mrb[0].mxu0
  %1440 = vmatprep.mubr.bf16.mxu0 %v585
  %1441 = vmatmul.mubr.bf16.gmra.mrb[0].mxu0 %v584
  %v1442 = vpop.f32.mrb[0].mxu0
  %v1443 = vadd.f32 %v1282, %v1442
  %v1444 = vpop.f32.mrb[0].mxu0
  %v1445 = vpop.f32.mrb[0].mxu0
  %v1446 = vadd.f32 %v1285, %v1445
  %v1447 = vpop.f32.mrb[0].mxu0
  %1448 = vmatprep.mubr.bf16.mxu0 %v591
  %1449 = vmatmul.mubr.bf16.gmra.mrb[0].mxu0 %v590
  %v1450 = vpop.f32.mrb[0].mxu0
  %v1451 = vadd.f32 %v1290, %v1450
  %v1452 = vpop.f32.mrb[0].mxu0
  %v1453 = vpop.f32.mrb[0].mxu0
  %v1454 = vadd.f32 %v1293, %v1453
  %v1455 = vpop.f32.mrb[0].mxu0
  %1456 = vmatprep.mubr.bf16.mxu0 %v597
  %1457 = vmatmul.mubr.bf16.gmra.mrb[0].mxu0 %v596
  %v1458 = vpop.f32.mrb[0].mxu0
  %v1459 = vadd.f32 %v1298, %v1458
  %v1460 = vpop.f32.mrb[0].mxu0
  %v1461 = vpop.f32.mrb[0].mxu0
  %v1462 = vadd.f32 %v1301, %v1461
  %v1463 = vpop.f32.mrb[0].mxu0
  %1464 = vdwg.mxu0
  %vm1465 = vcmask 392192
  %1466 = vst.msk [vmem:[%s3] sm:$0xff] %vm1465, %v1339
  %1467 = vst.msk [vmem:[%s3 + $0x8] sm:$0xff] %vm1465, %v1342
  %1468 = vst.msk [vmem:[%s3 + $0x10] sm:$0xff] %vm1465, %v1347
  %1469 = vst.msk [vmem:[%s3 + $0x18] sm:$0xff] %vm1465, %v1350
  %1470 = vst.msk [vmem:[%s3 + $0x20] sm:$0xff] %vm1465, %v1355
  %1471 = vst.msk [vmem:[%s3 + $0x28] sm:$0xff] %vm1465, %v1358
  %1472 = vst.msk [vmem:[%s3 + $0x30] sm:$0xff] %vm1465, %v1363
  %1473 = vst.msk [vmem:[%s3 + $0x38] sm:$0xff] %vm1465, %v1366
  %1474 = vst.msk [vmem:[%s3 + $0x40] sm:$0xff] %vm1465, %v1371
  %1475 = vst.msk [vmem:[%s3 + $0x48] sm:$0xff] %vm1465, %v1374
  %1476 = vst.msk [vmem:[%s3 + $0x50] sm:$0xff] %vm1465, %v1379
  %1477 = vst.msk [vmem:[%s3 + $0x58] sm:$0xff] %vm1465, %v1382
  %1478 = vst.msk [vmem:[%s3 + $0x60] sm:$0xff] %vm1465, %v1387
  %1479 = vst.msk [vmem:[%s3 + $0x68] sm:$0xff] %vm1465, %v1390
  %1480 = vst.msk [vmem:[%s3 + $0x70] sm:$0xff] %vm1465, %v1395
  %1481 = vst.msk [vmem:[%s3 + $0x78] sm:$0xff] %vm1465, %v1398
  %1482 = vst.msk [vmem:[%s3 + $0x80] sm:$0xff] %vm1465, %v1403
  %1483 = vst.msk [vmem:[%s3 + $0x88] sm:$0xff] %vm1465, %v1406
  %1484 = vst.msk [vmem:[%s3 + $0x90] sm:$0xff] %vm1465, %v1411
  %1485 = vst.msk [vmem:[%s3 + $0x98] sm:$0xff] %vm1465, %v1414
  %1486 = vst.msk [vmem:[%s3 + $0xa0] sm:$0xff] %vm1465, %v1419
  %1487 = vst.msk [vmem:[%s3 + $0xa8] sm:$0xff] %vm1465, %v1422
  %1488 = vst.msk [vmem:[%s3 + $0xb0] sm:$0xff] %vm1465, %v1427
  %1489 = vst.msk [vmem:[%s3 + $0xb8] sm:$0xff] %vm1465, %v1430
  %1490 = vst.msk [vmem:[%s3 + $0xc0] sm:$0xff] %vm1465, %v1435
  %1491 = vst.msk [vmem:[%s3 + $0xc8] sm:$0xff] %vm1465, %v1438
  %1492 = vst.msk [vmem:[%s3 + $0xd0] sm:$0xff] %vm1465, %v1443
  %1493 = vst.msk [vmem:[%s3 + $0xd8] sm:$0xff] %vm1465, %v1446
  %1494 = vst.msk [vmem:[%s3 + $0xe0] sm:$0xff] %vm1465, %v1451
  %1495 = vst.msk [vmem:[%s3 + $0xe8] sm:$0xff] %vm1465, %v1454
  %1496 = vst.msk [vmem:[%s3 + $0xf0] sm:$0xff] %vm1465, %v1459
  %1497 = vst.msk [vmem:[%s3 + $0xf8] sm:$0xff] %vm1465, %v1462
  // Predicated region
  $region14: #{vit_forward.3} parent=0 // pred_check
    _
  $region15: #{vit_forward.3} parent=0 // pred_check_branch
    %1499 = sbr.rel (0) target = $region17
  $region16: #{vit_forward.3} parent=0 // pred_region
    _
  $region17: #{vit_forward.3} parent=0 // pred_fallthru
    _
  // Predicated region
  $region18: #{vit_forward.3} parent=0 // pred_check
    _
  $region19: #{vit_forward.3} parent=0 // pred_check_branch
    %1501 = sbr.rel (0) target = $region21
  $region20: #{vit_forward.3} parent=0 // pred_region
    _
  $region21: #{vit_forward.3} parent=0 // pred_fallthru
    _

// kernel: vit_forward.4
$region0: #{vit_forward.4}
  #allocation0 [shape = 'u32[]', space=smem, size = 0x4, offset = 0x4, fixed_abs, tag = 'smem constant byte address 0x4 - core index']
  #allocation1 [shape = 'u32[144,128]{1,0:T(1,128)}', space=vmem, size = 0x12000, scoped, tag = 'internal scratch']
  %s0 = inlined_call_operand.vmem [shape: f32[256,48], index: 0, kind: input, shape index: {}]
  %s1 = inlined_call_operand.vmem [shape: f32[2,8,48], index: 1, kind: input, shape index: {}]
  %s2 = inlined_call_operand.vmem [shape: bf16[2,48,144], index: 2, kind: input, shape index: {}]
  %s3 = inlined_call_operand.vmem [shape: f32[2,1,144], index: 3, kind: input, shape index: {}]
  %s4 = inlined_call_operand.vmem [shape: bf16[2,48,48], index: 4, kind: input, shape index: {}]
  %s5 = inlined_call_operand.vmem [shape: bf16[2,48,192], index: 5, kind: input, shape index: {}]
  %s6 = inlined_call_operand.vmem [shape: f32[2,1,192], index: 6, kind: input, shape index: {}]
  %s7 = inlined_call_operand.vmem [shape: bf16[2,192,48], index: 7, kind: input, shape index: {}]
  %s8 = inlined_call_operand.vmem [shape: f32[256,48], index: 8, kind: output, shape index: {}]
  %s9 = sld [smem:[#allocation0]]
  $region69: #{vit_forward.4} parent=0
    _
  %s11 = ssub.s32 1, %s9
  %s12 = scalar_select 0, %s11, %s9
  loop: start=0, step=1, limit=6
  $region2: #{vit_forward.4} parent=0 // loop_pre_header
    _
  $region3: #{vit_forward.4} parent=0 // loop_header
    %s14 = sphi 0, %s18
    %p15 = scmp.ge.s32.totalorder %s14, 6
    %s21 = sphi 0, %s33
    %s22 = sphi 0, %s29
    %s23 = sphi 0, %s21
    %s24 = sphi 0, %s22
    %s25 = sphi 0, %s23
    %s26 = sphi 0, %s24
    %s36 = sphi 0, %s38
    %s39 = sphi 0, %s36
    %s40 = sphi 0, %s39
    %s56 = sphi 0, %s40
    %s60 = sphi 0, %s60
    %s62 = sphi 0, %s60
    %s63 = sphi 0, %s62
    %s77 = sphi 0, %s63
    %s81 = sphi 0, %s81
    %s83 = sphi 0, %s81
    %s84 = sphi 0, %s83
    %s98 = sphi 0, %s84
    %s102 = sphi 0, %s102
    %s104 = sphi 0, %s102
    %s105 = sphi 0, %s104
    %s119 = sphi 0, %s105
    %s123 = sphi 0, %s123
    %s125 = sphi 0, %s123
    %s126 = sphi 0, %s125
    %s140 = sphi 0, %s126
    %s144 = sphi 0, %s144
    %s146 = sphi 0, %s144
    %s147 = sphi 0, %s146
    %s161 = sphi 0, %s147
    %s165 = sphi 0, %s165
    %s167 = sphi 0, %s165
    %s168 = sphi 0, %s167
    %s182 = sphi 0, %s168
    %s186 = sphi 0, %s186
    %s188 = sphi 0, %s186
    %s189 = sphi 0, %s188
    %s203 = sphi 0, %s189
    %s209 = sphi 0, %s211
    %s212 = sphi 0, %s209
    %s213 = sphi 0, %s212
    %s229 = sphi 0, %s213
  $region4: #{vit_forward.4} parent=0 // loop_header_branch
    %17 = sbr.rel (%p15) target = $region8
  $region5: #{vit_forward.4} parent=0 // loop_body
    %s19 = ssub.s32 %s14, 1
    %s20 = ssub.s32 %s14, 2
    %s27 = sadd.s32 1, %s22
    %p28 = scmp.ge.s32.totalorder %s27, 2
    %s29 = scalar_select %p28, 0, %s27
    %s30 = sadd.s32 1, %s21
    %s31 = scalar_select %p28, %s30, %s21
    %p32 = scmp.ge.s32.totalorder %s31, 2
    %s33 = scalar_select %p32, 0, %s31
    %s34 = ssub.s32 %s21, %s33
    %p35 = scmp.eq.s32.totalorder %s34, 0
    %s37 = sadd.s32 %s36, 1
    %s38 = scalar_select %p35, %s36, %s37
    %p41 = pneg %p35
    %p42 = scmp.eq.s32.totalorder %s14, 3
    %p43 = por %p41, %p42
    %p44 = scmp.ne.s32.totalorder %s36, %s39
    %p45 = scmp.eq.s32.totalorder %s14, 0
    %p46 = por %p44, %p45
    %p47 = scmp.ne.s32.totalorder %s36, %s39
    %p48 = scmp.eq.s32.totalorder %s19, 3
    %p49 = por %p47, %p48
    %p50 = scmp.ne.s32.totalorder %s39, %s40
    %p51 = scmp.eq.s32.totalorder %s19, 0
    %p52 = por %p50, %p51
    %p53 = scmp.ne.s32.totalorder %s39, %s40
    %p54 = scmp.eq.s32.totalorder %s20, 3
    %p55 = por %p53, %p54
    %p57 = scmp.ne.s32.totalorder %s40, %s56
    %p58 = scmp.eq.s32.totalorder %s20, 0
    %p59 = por %p57, %p58
    %s61 = sadd.s32 %s60, 1
    %p64 = scmp.eq.s32.totalorder %s14, 3
    %p65 = scmp.ne.s32.totalorder %s60, %s62
    %p66 = scmp.eq.s32.totalorder %s14, 0
    %p67 = por %p65, %p66
    %p68 = scmp.ne.s32.totalorder %s60, %s62
    %p69 = scmp.eq.s32.totalorder %s19, 3
    %p70 = por %p68, %p69
    %p71 = scmp.ne.s32.totalorder %s62, %s63
    %p72 = scmp.eq.s32.totalorder %s19, 0
    %p73 = por %p71, %p72
    %p74 = scmp.ne.s32.totalorder %s62, %s63
    %p75 = scmp.eq.s32.totalorder %s20, 3
    %p76 = por %p74, %p75
    %p78 = scmp.ne.s32.totalorder %s63, %s77
    %p79 = scmp.eq.s32.totalorder %s20, 0
    %p80 = por %p78, %p79
    %s82 = sadd.s32 %s81, 1
    %p85 = scmp.eq.s32.totalorder %s14, 3
    %p86 = scmp.ne.s32.totalorder %s81, %s83
    %p87 = scmp.eq.s32.totalorder %s14, 0
    %p88 = por %p86, %p87
    %p89 = scmp.ne.s32.totalorder %s81, %s83
    %p90 = scmp.eq.s32.totalorder %s19, 3
    %p91 = por %p89, %p90
    %p92 = scmp.ne.s32.totalorder %s83, %s84
    %p93 = scmp.eq.s32.totalorder %s19, 0
    %p94 = por %p92, %p93
    %p95 = scmp.ne.s32.totalorder %s83, %s84
    %p96 = scmp.eq.s32.totalorder %s20, 3
    %p97 = por %p95, %p96
    %p99 = scmp.ne.s32.totalorder %s84, %s98
    %p100 = scmp.eq.s32.totalorder %s20, 0
    %p101 = por %p99, %p100
    %s103 = sadd.s32 %s102, 1
    %p106 = scmp.eq.s32.totalorder %s14, 3
    %p107 = scmp.ne.s32.totalorder %s102, %s104
    %p108 = scmp.eq.s32.totalorder %s14, 0
    %p109 = por %p107, %p108
    %p110 = scmp.ne.s32.totalorder %s102, %s104
    %p111 = scmp.eq.s32.totalorder %s19, 3
    %p112 = por %p110, %p111
    %p113 = scmp.ne.s32.totalorder %s104, %s105
    %p114 = scmp.eq.s32.totalorder %s19, 0
    %p115 = por %p113, %p114
    %p116 = scmp.ne.s32.totalorder %s104, %s105
    %p117 = scmp.eq.s32.totalorder %s20, 3
    %p118 = por %p116, %p117
    %p120 = scmp.ne.s32.totalorder %s105, %s119
    %p121 = scmp.eq.s32.totalorder %s20, 0
    %p122 = por %p120, %p121
    %s124 = sadd.s32 %s123, 1
    %p127 = scmp.eq.s32.totalorder %s14, 3
    %p128 = scmp.ne.s32.totalorder %s123, %s125
    %p129 = scmp.eq.s32.totalorder %s14, 0
    %p130 = por %p128, %p129
    %p131 = scmp.ne.s32.totalorder %s123, %s125
    %p132 = scmp.eq.s32.totalorder %s19, 3
    %p133 = por %p131, %p132
    %p134 = scmp.ne.s32.totalorder %s125, %s126
    %p135 = scmp.eq.s32.totalorder %s19, 0
    %p136 = por %p134, %p135
    %p137 = scmp.ne.s32.totalorder %s125, %s126
    %p138 = scmp.eq.s32.totalorder %s20, 3
    %p139 = por %p137, %p138
    %p141 = scmp.ne.s32.totalorder %s126, %s140
    %p142 = scmp.eq.s32.totalorder %s20, 0
    %p143 = por %p141, %p142
    %s145 = sadd.s32 %s144, 1
    %p148 = scmp.eq.s32.totalorder %s14, 3
    %p149 = scmp.ne.s32.totalorder %s144, %s146
    %p150 = scmp.eq.s32.totalorder %s14, 0
    %p151 = por %p149, %p150
    %p152 = scmp.ne.s32.totalorder %s144, %s146
    %p153 = scmp.eq.s32.totalorder %s19, 3
    %p154 = por %p152, %p153
    %p155 = scmp.ne.s32.totalorder %s146, %s147
    %p156 = scmp.eq.s32.totalorder %s19, 0
    %p157 = por %p155, %p156
    %p158 = scmp.ne.s32.totalorder %s146, %s147
    %p159 = scmp.eq.s32.totalorder %s20, 3
    %p160 = por %p158, %p159
    %p162 = scmp.ne.s32.totalorder %s147, %s161
    %p163 = scmp.eq.s32.totalorder %s20, 0
    %p164 = por %p162, %p163
    %s166 = sadd.s32 %s165, 1
    %p169 = scmp.eq.s32.totalorder %s14, 3
    %p170 = scmp.ne.s32.totalorder %s165, %s167
    %p171 = scmp.eq.s32.totalorder %s14, 0
    %p172 = por %p170, %p171
    %p173 = scmp.ne.s32.totalorder %s165, %s167
    %p174 = scmp.eq.s32.totalorder %s19, 3
    %p175 = por %p173, %p174
    %p176 = scmp.ne.s32.totalorder %s167, %s168
    %p177 = scmp.eq.s32.totalorder %s19, 0
    %p178 = por %p176, %p177
    %p179 = scmp.ne.s32.totalorder %s167, %s168
    %p180 = scmp.eq.s32.totalorder %s20, 3
    %p181 = por %p179, %p180
    %p183 = scmp.ne.s32.totalorder %s168, %s182
    %p184 = scmp.eq.s32.totalorder %s20, 0
    %p185 = por %p183, %p184
    %s187 = sadd.s32 %s186, 1
    %p190 = scmp.eq.s32.totalorder %s14, 3
    %p191 = scmp.ne.s32.totalorder %s186, %s188
    %p192 = scmp.eq.s32.totalorder %s14, 0
    %p193 = por %p191, %p192
    %p194 = scmp.ne.s32.totalorder %s186, %s188
    %p195 = scmp.eq.s32.totalorder %s19, 3
    %p196 = por %p194, %p195
    %p197 = scmp.ne.s32.totalorder %s188, %s189
    %p198 = scmp.eq.s32.totalorder %s19, 0
    %p199 = por %p197, %p198
    %p200 = scmp.ne.s32.totalorder %s188, %s189
    %p201 = scmp.eq.s32.totalorder %s20, 3
    %p202 = por %p200, %p201
    %p204 = scmp.ne.s32.totalorder %s189, %s203
    %p205 = scmp.eq.s32.totalorder %s20, 0
    %p206 = por %p204, %p205
    %s207 = ssub.s32 %s21, %s33
    %p208 = scmp.eq.s32.totalorder %s207, 0
    %s210 = sadd.s32 %s209, 1
    %s211 = scalar_select %p208, %s209, %s210
    %p214 = pneg %p208
    %p215 = scmp.eq.s32.totalorder %s14, 3
    %p216 = por %p214, %p215
    %p217 = scmp.ne.s32.totalorder %s209, %s212
    %p218 = scmp.eq.s32.totalorder %s14, 0
    %p219 = por %p217, %p218
    %p220 = scmp.ne.s32.totalorder %s209, %s212
    %p221 = scmp.eq.s32.totalorder %s19, 3
    %p222 = por %p220, %p221
    %p223 = scmp.ne.s32.totalorder %s212, %s213
    %p224 = scmp.eq.s32.totalorder %s19, 0
    %p225 = por %p223, %p224
    %p226 = scmp.ne.s32.totalorder %s212, %s213
    %p227 = scmp.eq.s32.totalorder %s20, 3
    %p228 = por %p226, %p227
    %p230 = scmp.ne.s32.totalorder %s213, %s229
    %p231 = scmp.eq.s32.totalorder %s20, 0
    %p232 = por %p230, %p231
    %p233 = scmp.le.s32.totalorder 1, %s14
    %p234 = scmp.lt.s32.totalorder %s14, 5
    %p235 = pnand %p233, %p234
    %p236 = pneg %p235
    // Predicated region
    $region9: #{vit_forward.4} parent=5 // pred_check
      _
    $region10: #{vit_forward.4} parent=5 // pred_check_branch
      %238 = sbr.rel (%p235) target = $region12
    $region11: #{vit_forward.4} parent=5 // pred_region
      %s239 = ssub.s32 %s14, 1
      // Predicated region
      $region13: #{vit_forward.4} parent=11 // pred_check
        %p240 = pneg %p73
      $region14: #{vit_forward.4} parent=11 // pred_check_branch
        %242 = sbr.rel (%p240) target = $region16
      $region15: #{vit_forward.4} parent=11 // pred_region
        _
      $region16: #{vit_forward.4} parent=11 // pred_fallthru
        _
      // Predicated region
      $region17: #{vit_forward.4} parent=11 // pred_check
        %p243 = pneg %p94
      $region18: #{vit_forward.4} parent=11 // pred_check_branch
        %245 = sbr.rel (%p243) target = $region20
      $region19: #{vit_forward.4} parent=11 // pred_region
        _
      $region20: #{vit_forward.4} parent=11 // pred_fallthru
        _
      // Predicated region
      $region21: #{vit_forward.4} parent=11 // pred_check
        %p246 = pneg %p115
      $region22: #{vit_forward.4} parent=11 // pred_check_branch
        %248 = sbr.rel (%p246) target = $region24
      $region23: #{vit_forward.4} parent=11 // pred_region
        _
      $region24: #{vit_forward.4} parent=11 // pred_fallthru
        _
      // Predicated region
      $region25: #{vit_forward.4} parent=11 // pred_check
        %p249 = pneg %p136
      $region26: #{vit_forward.4} parent=11 // pred_check_branch
        %251 = sbr.rel (%p249) target = $region28
      $region27: #{vit_forward.4} parent=11 // pred_region
        _
      $region28: #{vit_forward.4} parent=11 // pred_fallthru
        _
      // Predicated region
      $region29: #{vit_forward.4} parent=11 // pred_check
        %p252 = pneg %p157
      $region30: #{vit_forward.4} parent=11 // pred_check_branch
        %254 = sbr.rel (%p252) target = $region32
      $region31: #{vit_forward.4} parent=11 // pred_region
        _
      $region32: #{vit_forward.4} parent=11 // pred_fallthru
        _
      // Predicated region
      $region33: #{vit_forward.4} parent=11 // pred_check
        %p255 = pneg %p178
      $region34: #{vit_forward.4} parent=11 // pred_check_branch
        %257 = sbr.rel (%p255) target = $region36
      $region35: #{vit_forward.4} parent=11 // pred_region
        _
      $region36: #{vit_forward.4} parent=11 // pred_fallthru
        _
      // Predicated region
      $region37: #{vit_forward.4} parent=11 // pred_check
        %p258 = pneg %p199
      $region38: #{vit_forward.4} parent=11 // pred_check_branch
        %260 = sbr.rel (%p258) target = $region40
      $region39: #{vit_forward.4} parent=11 // pred_region
        _
      $region40: #{vit_forward.4} parent=11 // pred_fallthru
        _
    $region12: #{vit_forward.4} parent=5 // pred_fallthru
      _
    %p261 = scmp.lt.s32.totalorder %s14, 4
    // Predicated region
    $region41: #{vit_forward.4} parent=5 // pred_check
      %p262 = pneg %p261
    $region42: #{vit_forward.4} parent=5 // pred_check_branch
      %264 = sbr.rel (%p262) target = $region44
    $region43: #{vit_forward.4} parent=5 // pred_region
      // Predicated region
      $region45: #{vit_forward.4} parent=43 // pred_check
        %p265 = pneg %p46
      $region46: #{vit_forward.4} parent=43 // pred_check_branch
        %267 = sbr.rel (%p265) target = $region48
      $region47: #{vit_forward.4} parent=43 // pred_region
        %s268 = smul.u32 16, %s21
        %p269 = scmp.lt.s32.totalorder %s268, 31
        %s270 = scalar_select %p269, %s268, 31
        %s271 = smul.addr %s270, 8
        %s272 = scalar_lea.vmem %s0, %s271
        %s273 = smul.u32 16, %s21
      $region48: #{vit_forward.4} parent=43 // pred_fallthru
        _
    $region44: #{vit_forward.4} parent=5 // pred_fallthru
      _
    %p274 = scmp.le.s32.totalorder 1, %s14
    %p275 = scmp.lt.s32.totalorder %s14, 5
    %p276 = pnand %p274, %p275
    %p277 = pneg %p276
    // Predicated region
    $region49: #{vit_forward.4} parent=5 // pred_check
      _
    $region50: #{vit_forward.4} parent=5 // pred_check_branch
      %279 = sbr.rel (%p276) target = $region52
    $region51: #{vit_forward.4} parent=5 // pred_region
      %s280 = ssub.s32 %s14, 1
      %s281 = smul.u32 16, %s23
      %p282 = scmp.lt.s32.totalorder %s281, 31
      %s283 = scalar_select %p282, %s281, 31
      %s284 = smul.addr %s283, 8
      %s285 = scalar_lea.vmem %s0, %s284
      %p286 = pneg %p52
      %p287 = pneg %p49
      %p288 = pneg %p73
      %p289 = pneg %p70
      %p290 = pneg %p94
      %p291 = pneg %p91
      %p292 = pneg %p115
      %p293 = pneg %p112
      %p294 = pneg %p136
      %p295 = pneg %p133
      %p296 = pneg %p157
      %p297 = pneg %p154
      %p298 = pneg %p178
      %p299 = pneg %p175
      %p300 = pneg %p199
      %p301 = pneg %p196
      %p302 = pneg %p225
      %p303 = pneg %p222
      %s304 = smul.u32 16, %s23
      %p305 = scmp.lt.s32.totalorder %s304, 31
      %s306 = scalar_select %p305, %s304, 31
      %s307 = smul.addr %s306, 8
      %s308 = scalar_lea.vmem %s8, %s307
      %s309 = smul.u32 16, %s23
      %p310 = scmp.lt.s32.totalorder %s309, 31
      %s311 = scalar_select %p310, %s309, 31
      %s312 = smul.addr %s311, 8
      %s313 = scalar_lea.vmem %s0, %s312
      %s314 = smul.u32 16, %s23
      %s315 = smul.u32 16, %s23
      %p316 = scmp.lt.s32.totalorder %s315, 31
      %s317 = scalar_select %p316, %s315, 31
      %s318 = smul.addr %s317, 8
      %s319 = scalar_lea.vmem %s8, %s318
      %s320 = smul.u32 16, %s23
      %p322 = scmp.eq.s32.totalorder %s24, 0
      // Predicated region
      $region53: #{vit_forward.4} parent=51 // pred_check
        %p323 = pneg %p322
      $region54: #{vit_forward.4} parent=51 // pred_check_branch
        %325 = sbr.rel (%p323) target = $region56
      $region55: #{vit_forward.4} parent=51 // pred_region
        %v326 = vld [vmem:[%s313] sm:$0xff]
        %v327 = vld [vmem:[%s313 + $0x8] sm:$0xff]
        %v328 = vld [vmem:[%s313 + $0x10] sm:$0xff]
        %v329 = vld [vmem:[%s313 + $0x18] sm:$0xff]
        %v330 = vld [vmem:[%s313 + $0x20] sm:$0xff]
        %v331 = vld [vmem:[%s313 + $0x28] sm:$0xff]
        %v332 = vld [vmem:[%s313 + $0x30] sm:$0xff]
        %v333 = vld [vmem:[%s313 + $0x38] sm:$0xff]
        %v334 = vld [vmem:[%s313 + $0x40] sm:$0xff]
        %v335 = vld [vmem:[%s313 + $0x48] sm:$0xff]
        %v336 = vld [vmem:[%s313 + $0x50] sm:$0xff]
        %v337 = vld [vmem:[%s313 + $0x58] sm:$0xff]
        %v338 = vld [vmem:[%s313 + $0x60] sm:$0xff]
        %v339 = vld [vmem:[%s313 + $0x68] sm:$0xff]
        %v340 = vld [vmem:[%s313 + $0x70] sm:$0xff]
        %v341 = vld [vmem:[%s313 + $0x78] sm:$0xff]
        %vm342 = vcmask 392192
        %343 = vst.msk [vmem:[%s319] sm:$0xff] %vm342, %v326
        %344 = vst.msk [vmem:[%s319 + $0x8] sm:$0xff] %vm342, %v327
        %345 = vst.msk [vmem:[%s319 + $0x10] sm:$0xff] %vm342, %v328
        %346 = vst.msk [vmem:[%s319 + $0x18] sm:$0xff] %vm342, %v329
        %347 = vst.msk [vmem:[%s319 + $0x20] sm:$0xff] %vm342, %v330
        %348 = vst.msk [vmem:[%s319 + $0x28] sm:$0xff] %vm342, %v331
        %349 = vst.msk [vmem:[%s319 + $0x30] sm:$0xff] %vm342, %v332
        %350 = vst.msk [vmem:[%s319 + $0x38] sm:$0xff] %vm342, %v333
        %351 = vst.msk [vmem:[%s319 + $0x40] sm:$0xff] %vm342, %v334
        %352 = vst.msk [vmem:[%s319 + $0x48] sm:$0xff] %vm342, %v335
        %353 = vst.msk [vmem:[%s319 + $0x50] sm:$0xff] %vm342, %v336
        %354 = vst.msk [vmem:[%s319 + $0x58] sm:$0xff] %vm342, %v337
        %355 = vst.msk [vmem:[%s319 + $0x60] sm:$0xff] %vm342, %v338
        %356 = vst.msk [vmem:[%s319 + $0x68] sm:$0xff] %vm342, %v339
        %357 = vst.msk [vmem:[%s319 + $0x70] sm:$0xff] %vm342, %v340
        %358 = vst.msk [vmem:[%s319 + $0x78] sm:$0xff] %vm342, %v341
      $region56: #{vit_forward.4} parent=51 // pred_fallthru
        _
      %v359 = vld [vmem:[%s319] sm:$0xff]
      %v360 = vld [vmem:[%s319 + $0x8] sm:$0xff]
      %v361 = vld [vmem:[%s319 + $0x10] sm:$0xff]
      %v362 = vld [vmem:[%s319 + $0x18] sm:$0xff]
      %v363 = vld [vmem:[%s319 + $0x20] sm:$0xff]
      %v364 = vld [vmem:[%s319 + $0x28] sm:$0xff]
      %v365 = vld [vmem:[%s319 + $0x30] sm:$0xff]
      %v366 = vld [vmem:[%s319 + $0x38] sm:$0xff]
      %v367 = vld [vmem:[%s319 + $0x40] sm:$0xff]
      %v368 = vld [vmem:[%s319 + $0x48] sm:$0xff]
      %v369 = vld [vmem:[%s319 + $0x50] sm:$0xff]
      %v370 = vld [vmem:[%s319 + $0x58] sm:$0xff]
      %v371 = vld [vmem:[%s319 + $0x60] sm:$0xff]
      %v372 = vld [vmem:[%s319 + $0x68] sm:$0xff]
      %v373 = vld [vmem:[%s319 + $0x70] sm:$0xff]
      %v374 = vld [vmem:[%s319 + $0x78] sm:$0xff]
      %s375 = smul.u32 %s24, 8
      %s376 = scalar_lea.vmem %s1, %s375
      %v377 = vld [vmem:[%s376] sm:$0xff]
      %vm378 = vcmask 392192
      %v379 = vsel %vm378, %v359, 0.0
      %380 = vadd.xlane.f32.xlu0 %v379
      %v381 = vpop.xlane.xlu0 %380
      %v382 = vsel %vm378, %v360, 0.0
      %383 = vadd.xlane.f32.xlu0 %v382
      %v384 = vpop.xlane.xlu0 %383
      %v385 = vsel %vm378, %v361, 0.0
      %386 = vadd.xlane.f32.xlu0 %v385
      %v387 = vpop.xlane.xlu0 %386
      %v388 = vsel %vm378, %v362, 0.0
      %389 = vadd.xlane.f32.xlu0 %v388
      %v390 = vpop.xlane.xlu0 %389
      %v391 = vsel %vm378, %v363, 0.0
      %392 = vadd.xlane.f32.xlu0 %v391
      %v393 = vpop.xlane.xlu0 %392
      %v394 = vsel %vm378, %v364, 0.0
      %395 = vadd.xlane.f32.xlu0 %v394
      %v396 = vpop.xlane.xlu0 %395
      %v397 = vsel %vm378, %v365, 0.0
      %398 = vadd.xlane.f32.xlu0 %v397
      %v399 = vpop.xlane.xlu0 %398
      %v400 = vsel %vm378, %v366, 0.0
      %401 = vadd.xlane.f32.xlu0 %v400
      %v402 = vpop.xlane.xlu0 %401
      %v403 = vsel %vm378, %v367, 0.0
      %404 = vadd.xlane.f32.xlu0 %v403
      %v405 = vpop.xlane.xlu0 %404
      %v406 = vsel %vm378, %v368, 0.0
      %407 = vadd.xlane.f32.xlu0 %v406
      %v408 = vpop.xlane.xlu0 %407
      %v409 = vsel %vm378, %v369, 0.0
      %410 = vadd.xlane.f32.xlu0 %v409
      %v411 = vpop.xlane.xlu0 %410
      %v412 = vsel %vm378, %v370, 0.0
      %413 = vadd.xlane.f32.xlu0 %v412
      %v414 = vpop.xlane.xlu0 %413
      %v415 = vsel %vm378, %v371, 0.0
      %416 = vadd.xlane.f32.xlu0 %v415
      %v417 = vpop.xlane.xlu0 %416
      %v418 = vsel %vm378, %v372, 0.0
      %419 = vadd.xlane.f32.xlu0 %v418
      %v420 = vpop.xlane.xlu0 %419
      %v421 = vsel %vm378, %v373, 0.0
      %422 = vadd.xlane.f32.xlu0 %v421
      %v423 = vpop.xlane.xlu0 %422
      %v424 = vsel %vm378, %v374, 0.0
      %425 = vadd.xlane.f32.xlu0 %v424
      %v426 = vpop.xlane.xlu0 %425
      %v427 = vrcp.pop 48.0
      %v428 = vmul.f32 %v381, %v427
      %v429 = vmul.f32 %v384, %v427
      %v430 = vmul.f32 %v387, %v427
      %v431 = vmul.f32 %v390, %v427
      %v432 = vmul.f32 %v393, %v427
      %v433 = vmul.f32 %v396, %v427
      %v434 = vmul.f32 %v399, %v427
      %v435 = vmul.f32 %v402, %v427
      %v436 = vmul.f32 %v405, %v427
      %v437 = vmul.f32 %v408, %v427
      %v438 = vmul.f32 %v411, %v427
      %v439 = vmul.f32 %v414, %v427
      %v440 = vmul.f32 %v417, %v427
      %v441 = vmul.f32 %v420, %v427
      %v442 = vmul.f32 %v423, %v427
      %v443 = vmul.f32 %v426, %v427
      %v444 = vsub.f32 %v359, %v428
      %v445 = vsub.f32 %v360, %v429
      %v446 = vsub.f32 %v361, %v430
      %v447 = vsub.f32 %v362, %v431
      %v448 = vsub.f32 %v363, %v432
      %v449 = vsub.f32 %v364, %v433
      %v450 = vsub.f32 %v365, %v434
      %v451 = vsub.f32 %v366, %v435
      %v452 = vsub.f32 %v367, %v436
      %v453 = vsub.f32 %v368, %v437
      %v454 = vsub.f32 %v369, %v438
      %v455 = vsub.f32 %v370, %v439
      %v456 = vsub.f32 %v371, %v440
      %v457 = vsub.f32 %v372, %v441
      %v458 = vsub.f32 %v373, %v442
      %v459 = vsub.f32 %v374, %v443
      %v460 = vmul.f32 %v444, %v444
      %v461 = vmul.f32 %v445, %v445
      %v462 = vmul.f32 %v446, %v446
      %v463 = vmul.f32 %v447, %v447
      %v464 = vmul.f32 %v448, %v448
      %v465 = vmul.f32 %v449, %v449
      %v466 = vmul.f32 %v450, %v450
      %v467 = vmul.f32 %v451, %v451
      %v468 = vmul.f32 %v452, %v452
      %v469 = vmul.f32 %v453, %v453
      %v470 = vmul.f32 %v454, %v454
      %v471 = vmul.f32 %v455, %v455
      %v472 = vmul.f32 %v456, %v456
      %v473 = vmul.f32 %v457, %v457
      %v474 = vmul.f32 %v458, %v458
      %v475 = vmul.f32 %v459, %v459
      %v476 = vsel %vm378, %v460, 0.0
      %477 = vadd.xlane.f32.xlu0 %v476
      %v478 = vpop.xlane.xlu0 %477
      %v479 = vsel %vm378, %v461, 0.0
      %480 = vadd.xlane.f32.xlu0 %v479
      %v481 = vpop.xlane.xlu0 %480
      %v482 = vsel %vm378, %v462, 0.0
      %483 = vadd.xlane.f32.xlu0 %v482
      %v484 = vpop.xlane.xlu0 %483
      %v485 = vsel %vm378, %v463, 0.0
      %486 = vadd.xlane.f32.xlu0 %v485
      %v487 = vpop.xlane.xlu0 %486
      %v488 = vsel %vm378, %v464, 0.0
      %489 = vadd.xlane.f32.xlu0 %v488
      %v490 = vpop.xlane.xlu0 %489
      %v491 = vsel %vm378, %v465, 0.0
      %492 = vadd.xlane.f32.xlu0 %v491
      %v493 = vpop.xlane.xlu0 %492
      %v494 = vsel %vm378, %v466, 0.0
      %495 = vadd.xlane.f32.xlu0 %v494
      %v496 = vpop.xlane.xlu0 %495
      %v497 = vsel %vm378, %v467, 0.0
      %498 = vadd.xlane.f32.xlu0 %v497
      %v499 = vpop.xlane.xlu0 %498
      %v500 = vsel %vm378, %v468, 0.0
      %501 = vadd.xlane.f32.xlu0 %v500
      %v502 = vpop.xlane.xlu0 %501
      %v503 = vsel %vm378, %v469, 0.0
      %504 = vadd.xlane.f32.xlu0 %v503
      %v505 = vpop.xlane.xlu0 %504
      %v506 = vsel %vm378, %v470, 0.0
      %507 = vadd.xlane.f32.xlu0 %v506
      %v508 = vpop.xlane.xlu0 %507
      %v509 = vsel %vm378, %v471, 0.0
      %510 = vadd.xlane.f32.xlu0 %v509
      %v511 = vpop.xlane.xlu0 %510
      %v512 = vsel %vm378, %v472, 0.0
      %513 = vadd.xlane.f32.xlu0 %v512
      %v514 = vpop.xlane.xlu0 %513
      %v515 = vsel %vm378, %v473, 0.0
      %516 = vadd.xlane.f32.xlu0 %v515
      %v517 = vpop.xlane.xlu0 %516
      %v518 = vsel %vm378, %v474, 0.0
      %519 = vadd.xlane.f32.xlu0 %v518
      %v520 = vpop.xlane.xlu0 %519
      %v521 = vsel %vm378, %v475, 0.0
      %522 = vadd.xlane.f32.xlu0 %v521
      %v523 = vpop.xlane.xlu0 %522
      %v524 = vmul.f32 %v478, %v427
      %v525 = vmul.f32 %v481, %v427
      %v526 = vmul.f32 %v484, %v427
      %v527 = vmul.f32 %v487, %v427
      %v528 = vmul.f32 %v490, %v427
      %v529 = vmul.f32 %v493, %v427
      %v530 = vmul.f32 %v496, %v427
      %v531 = vmul.f32 %v499, %v427
      %v532 = vmul.f32 %v502, %v427
      %v533 = vmul.f32 %v505, %v427
      %v534 = vmul.f32 %v508, %v427
      %v535 = vmul.f32 %v511, %v427
      %v536 = vmul.f32 %v514, %v427
      %v537 = vmul.f32 %v517, %v427
      %v538 = vmul.f32 %v520, %v427
      %v539 = vmul.f32 %v523, %v427
      %v540 = vadd.f32 %v524, 1e-06
      %v541 = vadd.f32 %v525, 1e-06
      %v542 = vadd.f32 %v526, 1e-06
      %v543 = vadd.f32 %v527, 1e-06
      %v544 = vadd.f32 %v528, 1e-06
      %v545 = vadd.f32 %v529, 1e-06
      %v546 = vadd.f32 %v530, 1e-06
      %v547 = vadd.f32 %v531, 1e-06
      %v548 = vadd.f32 %v532, 1e-06
      %v549 = vadd.f32 %v533, 1e-06
      %v550 = vadd.f32 %v534, 1e-06
      %v551 = vadd.f32 %v535, 1e-06
      %v552 = vadd.f32 %v536, 1e-06
      %v553 = vadd.f32 %v537, 1e-06
      %v554 = vadd.f32 %v538, 1e-06
      %v555 = vadd.f32 %v539, 1e-06
      %v556 = vrsqrt.pop %v540
      %v557 = vrsqrt.pop %v541
      %v558 = vrsqrt.pop %v542
      %v559 = vrsqrt.pop %v543
      %v560 = vrsqrt.pop %v544
      %v561 = vrsqrt.pop %v545
      %v562 = vrsqrt.pop %v546
      %v563 = vrsqrt.pop %v547
      %v564 = vrsqrt.pop %v548
      %v565 = vrsqrt.pop %v549
      %v566 = vrsqrt.pop %v550
      %v567 = vrsqrt.pop %v551
      %v568 = vrsqrt.pop %v552
      %v569 = vrsqrt.pop %v553
      %v570 = vrsqrt.pop %v554
      %v571 = vrsqrt.pop %v555
      %v572 = vmul.f32 %v444, %v556
      %v573 = vmul.f32 %v445, %v557
      %v574 = vmul.f32 %v446, %v558
      %v575 = vmul.f32 %v447, %v559
      %v576 = vmul.f32 %v448, %v560
      %v577 = vmul.f32 %v449, %v561
      %v578 = vmul.f32 %v450, %v562
      %v579 = vmul.f32 %v451, %v563
      %v580 = vmul.f32 %v452, %v564
      %v581 = vmul.f32 %v453, %v565
      %v582 = vmul.f32 %v454, %v566
      %v583 = vmul.f32 %v455, %v567
      %v584 = vmul.f32 %v456, %v568
      %v585 = vmul.f32 %v457, %v569
      %v586 = vmul.f32 %v458, %v570
      %v587 = vmul.f32 %v459, %v571
      %v588 = vlaneseq
      %v589 = vshrl.u32 %v588, 7
      %v590 = vsub.s32 0, %v589
      %v591 = vrot.slane %v377, %v590
      %v592 = vmul.f32 %v572, %v591
      %v593 = vmul.f32 %v573, %v591
      %v594 = vmul.f32 %v574, %v591
      %v595 = vmul.f32 %v575, %v591
      %v596 = vmul.f32 %v576, %v591
      %v597 = vmul.f32 %v577, %v591
      %v598 = vmul.f32 %v578, %v591
      %v599 = vmul.f32 %v579, %v591
      %v600 = vmul.f32 %v580, %v591
      %v601 = vmul.f32 %v581, %v591
      %v602 = vmul.f32 %v582, %v591
      %v603 = vmul.f32 %v583, %v591
      %v604 = vmul.f32 %v584, %v591
      %v605 = vmul.f32 %v585, %v591
      %v606 = vmul.f32 %v586, %v591
      %v607 = vmul.f32 %v587, %v591
      %v608 = vlaneseq
      %v609 = vshrl.u32 %v608, 7
      %v610 = vsub.s32 1, %v609
      %v611 = vrot.slane %v377, %v610
      %v612 = vadd.f32 %v592, %v611
      %v613 = vadd.f32 %v593, %v611
      %v614 = vadd.f32 %v594, %v611
      %v615 = vadd.f32 %v595, %v611
      %v616 = vadd.f32 %v596, %v611
      %v617 = vadd.f32 %v597, %v611
      %v618 = vadd.f32 %v598, %v611
      %v619 = vadd.f32 %v599, %v611
      %v620 = vadd.f32 %v600, %v611
      %v621 = vadd.f32 %v601, %v611
      %v622 = vadd.f32 %v602, %v611
      %v623 = vadd.f32 %v603, %v611
      %v624 = vadd.f32 %v604, %v611
      %v625 = vadd.f32 %v605, %v611
      %v626 = vadd.f32 %v606, %v611
      %v627 = vadd.f32 %v607, %v611
      %v628 = vpack.c.bf16 %v613, %v612
      %v629 = vpack.c.bf16 %v615, %v614
      %v630 = vpack.c.bf16 %v617, %v616
      %v631 = vpack.c.bf16 %v619, %v618
      %v632 = vpack.c.bf16 %v621, %v620
      %v633 = vpack.c.bf16 %v623, %v622
      %v634 = vpack.c.bf16 %v625, %v624
      %v635 = vpack.c.bf16 %v627, %v626
      %s636 = smul.u32 %s24, 12
      %s637 = smul.addr %s636, 4
      %s638 = scalar_lea.vmem %s2, %s637
      %v639 = vld [vmem:[%s638] sm:$0xff]
      %v640 = vld [vmem:[%s638 + $0x8] sm:$0xff]
      %v641 = vld [vmem:[%s638 + $0x10] sm:$0xff]
      %v642 = vld [vmem:[%s638 + $0x18] sm:$0xff]
      %v643 = vld [vmem:[%s638 + $0x20] sm:$0xff]
      %v644 = vld [vmem:[%s638 + $0x28] sm:$0xff]
      %s645 = smul.u32 %s24, 2
      %s646 = scalar_lea.vmem %s3, %s645
      %v647 = vld [vmem:[%s646] sm:$0x3]
      %v649 = vlaneseq
      %v650 = vshrl.u32 %v649, 7
      %v651 = vsub.s32 0, %v650
      %v652 = vrot.slane %v647, %v651
      %v653 = vlaneseq
      %v654 = vshrl.u32 %v653, 7
      %v655 = vsub.s32 1, %v654
      %v656 = vrot.slane %v647, %v655
      %v665 = vunpack.c.l.b16 %v639
      %v666 = vunpack.c.h.b16 %v639
      %v667 = vunpack.c.l.b16 %v640
      %v668 = vunpack.c.h.b16 %v640
      %v669 = vunpack.c.l.b16 %v641
      %v670 = vunpack.c.h.b16 %v641
      %v671 = vunpack.c.l.b16 %v642
      %v672 = vunpack.c.h.b16 %v642
      %v673 = vunpack.c.l.b16 %v643
      %v674 = vunpack.c.h.b16 %v643
      %v675 = vunpack.c.l.b16 %v644
      %v676 = vunpack.c.h.b16 %v644
      %v677 = vpack.c.b16 %v667, %v665
      %v678 = vpack.c.b16 %v668, %v666
      %v679 = vpack.c.b16 %v671, %v669
      %v680 = vpack.c.b16 %v672, %v670
      %v681 = vpack.c.b16 %v675, %v673
      %v682 = vpack.c.b16 %v676, %v674
      %v690 = vsel %vm378, %v628, 0
      %v693 = vsel %vm378, %v629, 0
      %v696 = vsel %vm378, %v630, 0
      %v699 = vsel %vm378, %v631, 0
      %v702 = vsel %vm378, %v632, 0
      %v705 = vsel %vm378, %v633, 0
      %v708 = vsel %vm378, %v634, 0
      %v711 = vsel %vm378, %v635, 0
      %713 = vmatprep.subr.bf16.mxu0 %v678
      %714 = vmatpush1.bf16.msra.mxu0 %v677
      %715 = vmatprep.subr.bf16.mxu0 %v680
      %716 = vmatpush1.bf16.msra.mxu0 %v679
      %717 = vmatprep.subr.bf16.mxu0 %v682
      %718 = vmatpush1.bf16.msra.mxu0 %v681
      %719 = vmatprep.subr.bf16.mxu0 0
      %720 = vmatpush1.bf16.msra.mxu0 0
      %721 = vmatprep.subr.bf16.mxu0 0
      %722 = vmatpush1.bf16.msra.mxu0 0
      %723 = vmatprep.subr.bf16.mxu0 0
      %724 = vmatpush1.bf16.msra.mxu0 0
      %725 = vmatprep.subr.bf16.mxu0 0
      %726 = vmatpush1.bf16.msra.mxu0 0
      %727 = vmatprep.subr.bf16.mxu0 0
      %728 = vmatpush1.bf16.msra.mxu0 0
      %729 = vmatprep.subr.bf16.mxu0 0
      %730 = vmatpush1.bf16.msra.mxu0 0
      %731 = vmatprep.subr.bf16.mxu0 0
      %732 = vmatpush1.bf16.msra.mxu0 0
      %733 = vmatprep.subr.bf16.mxu0 0
      %734 = vmatpush1.bf16.msra.mxu0 0
      %735 = vmatprep.subr.bf16.mxu0 0
      %736 = vmatpush1.bf16.msra.mxu0 0
      %737 = vmatprep.subr.bf16.mxu0 0
      %738 = vmatpush1.bf16.msra.mxu0 0
      %739 = vmatprep.subr.bf16.mxu0 0
      %740 = vmatpush1.bf16.msra.mxu0 0
      %741 = vmatprep.subr.bf16.mxu0 0
      %742 = vmatpush1.bf16.msra.mxu0 0
      %743 = vmatprep.subr.bf16.mxu0 0
      %744 = vmatpush1.bf16.msra.mxu0 0
      %745 = vmatprep.mubr.bf16.mxu0 0
      %746 = vmatmul.mubr.bf16.gmra.mrb[0].mxu0 %v690
      %v747 = vpop.f32.mrb[0].mxu0
      %v748 = vadd.f32 %v652, %v747
      %v749 = vpop.f32.mrb[0].mxu0
      %v750 = vadd.f32 %v656, %v749
      %v751 = vpop.f32.mrb[0].mxu0
      %v752 = vadd.f32 %v652, %v751
      %v753 = vpop.f32.mrb[0].mxu0
      %v754 = vadd.f32 %v656, %v753
      %755 = vmatprep.mubr.bf16.mxu0 0
      %756 = vmatmul.mubr.bf16.gmra.mrb[0].mxu0 %v693
      %v757 = vpop.f32.mrb[0].mxu0
      %v758 = vadd.f32 %v652, %v757
      %v759 = vpop.f32.mrb[0].mxu0
      %v760 = vadd.f32 %v656, %v759
      %v761 = vpop.f32.mrb[0].mxu0
      %v762 = vadd.f32 %v652, %v761
      %v763 = vpop.f32.mrb[0].mxu0
      %v764 = vadd.f32 %v656, %v763
      %765 = vmatprep.mubr.bf16.mxu0 0
      %766 = vmatmul.mubr.bf16.gmra.mrb[0].mxu0 %v696
      %v767 = vpop.f32.mrb[0].mxu0
      %v768 = vadd.f32 %v652, %v767
      %v769 = vpop.f32.mrb[0].mxu0
      %v770 = vadd.f32 %v656, %v769
      %v771 = vpop.f32.mrb[0].mxu0
      %v772 = vadd.f32 %v652, %v771
      %v773 = vpop.f32.mrb[0].mxu0
      %v774 = vadd.f32 %v656, %v773
      %775 = vmatprep.mubr.bf16.mxu0 0
      %776 = vmatmul.mubr.bf16.gmra.mrb[0].mxu0 %v699
      %v777 = vpop.f32.mrb[0].mxu0
      %v778 = vadd.f32 %v652, %v777
      %v779 = vpop.f32.mrb[0].mxu0
      %v780 = vadd.f32 %v656, %v779
      %v781 = vpop.f32.mrb[0].mxu0
      %v782 = vadd.f32 %v652, %v781
      %v783 = vpop.f32.mrb[0].mxu0
      %v784 = vadd.f32 %v656, %v783
      %785 = vmatprep.mubr.bf16.mxu0 0
      %786 = vmatmul.mubr.bf16.gmra.mrb[0].mxu0 %v702
      %v787 = vpop.f32.mrb[0].mxu0
      %v788 = vadd.f32 %v652, %v787
      %v789 = vpop.f32.mrb[0].mxu0
      %v790 = vadd.f32 %v656, %v789
      %v791 = vpop.f32.mrb[0].mxu0
      %v792 = vadd.f32 %v652, %v791
      %v793 = vpop.f32.mrb[0].mxu0
      %v794 = vadd.f32 %v656, %v793
      %795 = vmatprep.mubr.bf16.mxu0 0
      %796 = vmatmul.mubr.bf16.gmra.mrb[0].mxu0 %v705
      %v797 = vpop.f32.mrb[0].mxu0
      %v798 = vadd.f32 %v652, %v797
      %v799 = vpop.f32.mrb[0].mxu0
      %v800 = vadd.f32 %v656, %v799
      %v801 = vpop.f32.mrb[0].mxu0
      %v802 = vadd.f32 %v652, %v801
      %v803 = vpop.f32.mrb[0].mxu0
      %v804 = vadd.f32 %v656, %v803
      %805 = vmatprep.mubr.bf16.mxu0 0
      %806 = vmatmul.mubr.bf16.gmra.mrb[0].mxu0 %v708
      %v807 = vpop.f32.mrb[0].mxu0
      %v808 = vadd.f32 %v652, %v807
      %v809 = vpop.f32.mrb[0].mxu0
      %v810 = vadd.f32 %v656, %v809
      %v811 = vpop.f32.mrb[0].mxu0
      %v812 = vadd.f32 %v652, %v811
      %v813 = vpop.f32.mrb[0].mxu0
      %v814 = vadd.f32 %v656, %v813
      %815 = vmatprep.mubr.bf16.mxu0 0
      %816 = vmatmul.mubr.bf16.gmra.mrb[0].mxu0 %v711
      %v817 = vpop.f32.mrb[0].mxu0
      %v818 = vadd.f32 %v652, %v817
      %v819 = vpop.f32.mrb[0].mxu0
      %v820 = vadd.f32 %v656, %v819
      %v821 = vpop.f32.mrb[0].mxu0
      %v822 = vadd.f32 %v652, %v821
      %v823 = vpop.f32.mrb[0].mxu0
      %v824 = vadd.f32 %v656, %v823
      %825 = vdwg.mxu0
      %v826 = vlaneseq
      %v827 = vand.u32 %v826, 127
      %vm828 = vcmp.lt.s32.totalorder %v827, 17
      %v829 = vsel %vm828, 0.0, -1e+30
      %v830 = vpack.c.bf16 %v752, %v748
      %v831 = vpack.c.bf16 %v762, %v758
      %v832 = vpack.c.bf16 %v772, %v768
      %v833 = vpack.c.bf16 %v782, %v778
      %v834 = vpack.c.bf16 %v792, %v788
      %v835 = vpack.c.bf16 %v802, %v798
      %v836 = vpack.c.bf16 %v812, %v808
      %v837 = vpack.c.bf16 %v822, %v818
      %846 = vrot.lane.b32.xlu0 %v830, 80
      %v847 = vpop.permute.xlu0 %846
      %848 = vrot.lane.b32.xlu0 %v831, 80
      %v849 = vpop.permute.xlu0 %848
      %850 = vrot.lane.b32.xlu0 %v832, 80
      %v851 = vpop.permute.xlu0 %850
      %852 = vrot.lane.b32.xlu0 %v833, 80
      %v853 = vpop.permute.xlu0 %852
      %854 = vrot.lane.b32.xlu0 %v834, 80
      %v855 = vpop.permute.xlu0 %854
      %856 = vrot.lane.b32.xlu0 %v835, 80
      %v857 = vpop.permute.xlu0 %856
      %858 = vrot.lane.b32.xlu0 %v836, 80
      %v859 = vpop.permute.xlu0 %858
      %860 = vrot.lane.b32.xlu0 %v837, 80
      %v861 = vpop.permute.xlu0 %860
      %vm862 = vcmask 130048
      %v864 = vsel %vm862, %v830, 0
      %v867 = vsel %vm862, %v831, 0
      %v870 = vsel %vm862, %v832, 0
      %v873 = vsel %vm862, %v833, 0
      %v876 = vsel %vm862, %v834, 0
      %v879 = vsel %vm862, %v835, 0
      %v882 = vsel %vm862, %v836, 0
      %v885 = vsel %vm862, %v837, 0
      %v888 = vsel %vm862, %v847, 0
      %v891 = vsel %vm862, %v849, 0
      %v894 = vsel %vm862, %v851, 0
      %v897 = vsel %vm862, %v853, 0
      %v900 = vsel %vm862, %v855, 0
      %v903 = vsel %vm862, %v857, 0
      %v906 = vsel %vm862, %v859, 0
      %v909 = vsel %vm862, %v861, 0
      %911 = vmatprep.subr.bf16.mxu0 0
      %912 = vmatpush1.bf16.xpose.msra.mxu0 %v888
      %913 = vmatprep.subr.bf16.mxu0 0
      %914 = vmatpush1.bf16.xpose.msra.mxu0 %v891
      %915 = vmatprep.subr.bf16.mxu0 0
      %916 = vmatpush1.bf16.xpose.msra.mxu0 %v894
      %917 = vmatprep.subr.bf16.mxu0 0
      %918 = vmatpush1.bf16.xpose.msra.mxu0 %v897
      %919 = vmatprep.subr.bf16.mxu0 0
      %920 = vmatpush1.bf16.xpose.msra.mxu0 %v900
      %921 = vmatprep.subr.bf16.mxu0 0
      %922 = vmatpush1.bf16.xpose.msra.mxu0 %v903
      %923 = vmatprep.subr.bf16.mxu0 0
      %924 = vmatpush1.bf16.xpose.msra.mxu0 %v906
      %925 = vmatprep.subr.bf16.mxu0 0
      %926 = vmatpush1.bf16.xpose.msra.mxu0 %v909
      %927 = vmatprep.subr.bf16.mxu0 0
      %928 = vmatpush1.bf16.xpose.msra.mxu0 0
      %929 = vmatprep.subr.bf16.mxu0 0
      %930 = vmatpush1.bf16.xpose.msra.mxu0 0
      %931 = vmatprep.subr.bf16.mxu0 0
      %932 = vmatpush1.bf16.xpose.msra.mxu0 0
      %933 = vmatprep.subr.bf16.mxu0 0
      %934 = vmatpush1.bf16.xpose.msra.mxu0 0
      %935 = vmatprep.subr.bf16.mxu0 0
      %936 = vmatpush1.bf16.xpose.msra.mxu0 0
      %937 = vmatprep.subr.bf16.mxu0 0
      %938 = vmatpush1.bf16.xpose.msra.mxu0 0
      %939 = vmatprep.subr.bf16.mxu0 0
      %940 = vmatpush1.bf16.xpose.msra.mxu0 0
      %941 = vmatprep.subr.bf16.mxu0 0
      %942 = vmatpush1.bf16.xpose.msra.mxu0 0
      %943 = vmatprep.mubr.bf16.mxu0 0
      %944 = vmatmul.mubr.bf16.gmra.mrb[0].mxu0 %v864
      %v945 = vpop.f32.mrb[0].mxu0
      %v946 = vadd.f32 0.0, %v945
      %v947 = vpop.f32.mrb[0].mxu0
      %v948 = vpop.f32.mrb[0].mxu0
      %v949 = vadd.f32 0.0, %v948
      %v950 = vpop.f32.mrb[0].mxu0
      %951 = vmatprep.mubr.bf16.mxu0 0
      %952 = vmatmul.mubr.bf16.gmra.mrb[0].mxu0 %v867
      %v953 = vpop.f32.mrb[0].mxu0
      %v954 = vadd.f32 0.0, %v953
      %v955 = vpop.f32.mrb[0].mxu0
      %v956 = vpop.f32.mrb[0].mxu0
      %v957 = vadd.f32 0.0, %v956
      %v958 = vpop.f32.mrb[0].mxu0
      %959 = vmatprep.mubr.bf16.mxu0 0
      %960 = vmatmul.mubr.bf16.gmra.mrb[0].mxu0 %v870
      %v961 = vpop.f32.mrb[0].mxu0
      %v962 = vadd.f32 0.0, %v961
      %v963 = vpop.f32.mrb[0].mxu0
      %v964 = vpop.f32.mrb[0].mxu0
      %v965 = vadd.f32 0.0, %v964
      %v966 = vpop.f32.mrb[0].mxu0
      %967 = vmatprep.mubr.bf16.mxu0 0
      %968 = vmatmul.mubr.bf16.gmra.mrb[0].mxu0 %v873
      %v969 = vpop.f32.mrb[0].mxu0
      %v970 = vadd.f32 0.0, %v969
      %v971 = vpop.f32.mrb[0].mxu0
      %v972 = vpop.f32.mrb[0].mxu0
      %v973 = vadd.f32 0.0, %v972
      %v974 = vpop.f32.mrb[0].mxu0
      %975 = vmatprep.mubr.bf16.mxu0 0
      %976 = vmatmul.mubr.bf16.gmra.mrb[0].mxu0 %v876
      %v977 = vpop.f32.mrb[0].mxu0
      %v978 = vadd.f32 0.0, %v977
      %v979 = vpop.f32.mrb[0].mxu0
      %v980 = vpop.f32.mrb[0].mxu0
      %v981 = vadd.f32 0.0, %v980
      %v982 = vpop.f32.mrb[0].mxu0
      %983 = vmatprep.mubr.bf16.mxu0 0
      %984 = vmatmul.mubr.bf16.gmra.mrb[0].mxu0 %v879
      %v985 = vpop.f32.mrb[0].mxu0
      %v986 = vadd.f32 0.0, %v985
      %v987 = vpop.f32.mrb[0].mxu0
      %v988 = vpop.f32.mrb[0].mxu0
      %v989 = vadd.f32 0.0, %v988
      %v990 = vpop.f32.mrb[0].mxu0
      %991 = vmatprep.mubr.bf16.mxu0 0
      %992 = vmatmul.mubr.bf16.gmra.mrb[0].mxu0 %v882
      %v993 = vpop.f32.mrb[0].mxu0
      %v994 = vadd.f32 0.0, %v993
      %v995 = vpop.f32.mrb[0].mxu0
      %v996 = vpop.f32.mrb[0].mxu0
      %v997 = vadd.f32 0.0, %v996
      %v998 = vpop.f32.mrb[0].mxu0
      %999 = vmatprep.mubr.bf16.mxu0 0
      %1000 = vmatmul.mubr.bf16.gmra.mrb[0].mxu0 %v885
      %v1001 = vpop.f32.mrb[0].mxu0
      %v1002 = vadd.f32 0.0, %v1001
      %v1003 = vpop.f32.mrb[0].mxu0
      %v1004 = vpop.f32.mrb[0].mxu0
      %v1005 = vadd.f32 0.0, %v1004
      %v1006 = vpop.f32.mrb[0].mxu0
      %1007 = vdwg.mxu0
      %v1008 = vmul.f32 %v946, 0.25
      %v1009 = vmul.f32 %v949, 0.25
      %v1010 = vmul.f32 %v954, 0.25
      %v1011 = vmul.f32 %v957, 0.25
      %v1012 = vmul.f32 %v962, 0.25
      %v1013 = vmul.f32 %v965, 0.25
      %v1014 = vmul.f32 %v970, 0.25
      %v1015 = vmul.f32 %v973, 0.25
      %v1016 = vmul.f32 %v978, 0.25
      %v1017 = vmul.f32 %v981, 0.25
      %v1018 = vmul.f32 %v986, 0.25
      %v1019 = vmul.f32 %v989, 0.25
      %v1020 = vmul.f32 %v994, 0.25
      %v1021 = vmul.f32 %v997, 0.25
      %v1022 = vmul.f32 %v1002, 0.25
      %v1023 = vmul.f32 %v1005, 0.25
      %v1024 = vadd.f32 %v1008, %v829
      %v1025 = vadd.f32 %v1009, %v829
      %v1026 = vadd.f32 %v1010, %v829
      %v1027 = vadd.f32 %v1011, %v829
      %v1028 = vadd.f32 %v1012, %v829
      %v1029 = vadd.f32 %v1013, %v829
      %v1030 = vadd.f32 %v1014, %v829
      %v1031 = vadd.f32 %v1015, %v829
      %v1032 = vadd.f32 %v1016, %v829
      %v1033 = vadd.f32 %v1017, %v829
      %v1034 = vadd.f32 %v1018, %v829
      %v1035 = vadd.f32 %v1019, %v829
      %v1036 = vadd.f32 %v1020, %v829
      %v1037 = vadd.f32 %v1021, %v829
      %v1038 = vadd.f32 %v1022, %v829
      %v1039 = vadd.f32 %v1023, %v829
      %1040 = vmax.xlane.f32.xlu0 %v1024
      %v1041 = vpop.xlane.xlu0 %1040
      %1042 = vmax.xlane.f32.xlu0 %v1025
      %v1043 = vpop.xlane.xlu0 %1042
      %1044 = vmax.xlane.f32.xlu0 %v1026
      %v1045 = vpop.xlane.xlu0 %1044
      %1046 = vmax.xlane.f32.xlu0 %v1027
      %v1047 = vpop.xlane.xlu0 %1046
      %1048 = vmax.xlane.f32.xlu0 %v1028
      %v1049 = vpop.xlane.xlu0 %1048
      %1050 = vmax.xlane.f32.xlu0 %v1029
      %v1051 = vpop.xlane.xlu0 %1050
      %1052 = vmax.xlane.f32.xlu0 %v1030
      %v1053 = vpop.xlane.xlu0 %1052
      %1054 = vmax.xlane.f32.xlu0 %v1031
      %v1055 = vpop.xlane.xlu0 %1054
      %1056 = vmax.xlane.f32.xlu0 %v1032
      %v1057 = vpop.xlane.xlu0 %1056
      %1058 = vmax.xlane.f32.xlu0 %v1033
      %v1059 = vpop.xlane.xlu0 %1058
      %1060 = vmax.xlane.f32.xlu0 %v1034
      %v1061 = vpop.xlane.xlu0 %1060
      %1062 = vmax.xlane.f32.xlu0 %v1035
      %v1063 = vpop.xlane.xlu0 %1062
      %1064 = vmax.xlane.f32.xlu0 %v1036
      %v1065 = vpop.xlane.xlu0 %1064
      %1066 = vmax.xlane.f32.xlu0 %v1037
      %v1067 = vpop.xlane.xlu0 %1066
      %1068 = vmax.xlane.f32.xlu0 %v1038
      %v1069 = vpop.xlane.xlu0 %1068
      %1070 = vmax.xlane.f32.xlu0 %v1039
      %v1071 = vpop.xlane.xlu0 %1070
      %v1072 = vsub.f32 %v1024, %v1041
      %v1073 = vsub.f32 %v1025, %v1043
      %v1074 = vsub.f32 %v1026, %v1045
      %v1075 = vsub.f32 %v1027, %v1047
      %v1076 = vsub.f32 %v1028, %v1049
      %v1077 = vsub.f32 %v1029, %v1051
      %v1078 = vsub.f32 %v1030, %v1053
      %v1079 = vsub.f32 %v1031, %v1055
      %v1080 = vsub.f32 %v1032, %v1057
      %v1081 = vsub.f32 %v1033, %v1059
      %v1082 = vsub.f32 %v1034, %v1061
      %v1083 = vsub.f32 %v1035, %v1063
      %v1084 = vsub.f32 %v1036, %v1065
      %v1085 = vsub.f32 %v1037, %v1067
      %v1086 = vsub.f32 %v1038, %v1069
      %v1087 = vsub.f32 %v1039, %v1071
      %v1088 = vmul.f32 %v1072, 1.442695
      %v1089 = vpow.pop %v1088
      %v1090 = vmul.f32 %v1073, 1.442695
      %v1091 = vpow.pop %v1090
      %v1092 = vmul.f32 %v1074, 1.442695
      %v1093 = vpow.pop %v1092
      %v1094 = vmul.f32 %v1075, 1.442695
      %v1095 = vpow.pop %v1094
      %v1096 = vmul.f32 %v1076, 1.442695
      %v1097 = vpow.pop %v1096
      %v1098 = vmul.f32 %v1077, 1.442695
      %v1099 = vpow.pop %v1098
      %v1100 = vmul.f32 %v1078, 1.442695
      %v1101 = vpow.pop %v1100
      %v1102 = vmul.f32 %v1079, 1.442695
      %v1103 = vpow.pop %v1102
      %v1104 = vmul.f32 %v1080, 1.442695
      %v1105 = vpow.pop %v1104
      %v1106 = vmul.f32 %v1081, 1.442695
      %v1107 = vpow.pop %v1106
      %v1108 = vmul.f32 %v1082, 1.442695
      %v1109 = vpow.pop %v1108
      %v1110 = vmul.f32 %v1083, 1.442695
      %v1111 = vpow.pop %v1110
      %v1112 = vmul.f32 %v1084, 1.442695
      %v1113 = vpow.pop %v1112
      %v1114 = vmul.f32 %v1085, 1.442695
      %v1115 = vpow.pop %v1114
      %v1116 = vmul.f32 %v1086, 1.442695
      %v1117 = vpow.pop %v1116
      %v1118 = vmul.f32 %v1087, 1.442695
      %v1119 = vpow.pop %v1118
      %1120 = vadd.xlane.f32.xlu0 %v1089
      %v1121 = vpop.xlane.xlu0 %1120
      %1122 = vadd.xlane.f32.xlu0 %v1091
      %v1123 = vpop.xlane.xlu0 %1122
      %1124 = vadd.xlane.f32.xlu0 %v1093
      %v1125 = vpop.xlane.xlu0 %1124
      %1126 = vadd.xlane.f32.xlu0 %v1095
      %v1127 = vpop.xlane.xlu0 %1126
      %1128 = vadd.xlane.f32.xlu0 %v1097
      %v1129 = vpop.xlane.xlu0 %1128
      %1130 = vadd.xlane.f32.xlu0 %v1099
      %v1131 = vpop.xlane.xlu0 %1130
      %1132 = vadd.xlane.f32.xlu0 %v1101
      %v1133 = vpop.xlane.xlu0 %1132
      %1134 = vadd.xlane.f32.xlu0 %v1103
      %v1135 = vpop.xlane.xlu0 %1134
      %1136 = vadd.xlane.f32.xlu0 %v1105
      %v1137 = vpop.xlane.xlu0 %1136
      %1138 = vadd.xlane.f32.xlu0 %v1107
      %v1139 = vpop.xlane.xlu0 %1138
      %1140 = vadd.xlane.f32.xlu0 %v1109
      %v1141 = vpop.xlane.xlu0 %1140
      %1142 = vadd.xlane.f32.xlu0 %v1111
      %v1143 = vpop.xlane.xlu0 %1142
      %1144 = vadd.xlane.f32.xlu0 %v1113
      %v1145 = vpop.xlane.xlu0 %1144
      %1146 = vadd.xlane.f32.xlu0 %v1115
      %v1147 = vpop.xlane.xlu0 %1146
      %1148 = vadd.xlane.f32.xlu0 %v1117
      %v1149 = vpop.xlane.xlu0 %1148
      %1150 = vadd.xlane.f32.xlu0 %v1119
      %v1151 = vpop.xlane.xlu0 %1150
      %v1152 = vrcp.pop %v1121
      %v1153 = vrcp.pop %v1123
      %v1154 = vrcp.pop %v1125
      %v1155 = vrcp.pop %v1127
      %v1156 = vrcp.pop %v1129
      %v1157 = vrcp.pop %v1131
      %v1158 = vrcp.pop %v1133
      %v1159 = vrcp.pop %v1135
      %v1160 = vrcp.pop %v1137
      %v1161 = vrcp.pop %v1139
      %v1162 = vrcp.pop %v1141
      %v1163 = vrcp.pop %v1143
      %v1164 = vrcp.pop %v1145
      %v1165 = vrcp.pop %v1147
      %v1166 = vrcp.pop %v1149
      %v1167 = vrcp.pop %v1151
      %v1168 = vmul.f32 %v1089, %v1152
      %v1169 = vmul.f32 %v1091, %v1153
      %v1170 = vmul.f32 %v1093, %v1154
      %v1171 = vmul.f32 %v1095, %v1155
      %v1172 = vmul.f32 %v1097, %v1156
      %v1173 = vmul.f32 %v1099, %v1157
      %v1174 = vmul.f32 %v1101, %v1158
      %v1175 = vmul.f32 %v1103, %v1159
      %v1176 = vmul.f32 %v1105, %v1160
      %v1177 = vmul.f32 %v1107, %v1161
      %v1178 = vmul.f32 %v1109, %v1162
      %v1179 = vmul.f32 %v1111, %v1163
      %v1180 = vmul.f32 %v1113, %v1164
      %v1181 = vmul.f32 %v1115, %v1165
      %v1182 = vmul.f32 %v1117, %v1166
      %v1183 = vmul.f32 %v1119, %v1167
      %v1184 = vpack.c.bf16 %v1169, %v1168
      %v1185 = vpack.c.bf16 %v1171, %v1170
      %v1186 = vpack.c.bf16 %v1173, %v1172
      %v1187 = vpack.c.bf16 %v1175, %v1174
      %v1188 = vpack.c.bf16 %v1177, %v1176
      %v1189 = vpack.c.bf16 %v1179, %v1178
      %v1190 = vpack.c.bf16 %v1181, %v1180
      %v1191 = vpack.c.bf16 %v1183, %v1182
      %1192 = vrot.lane.b32.xlu0 %v830, 32
      %v1193 = vpop.permute.xlu0 %1192
      %1194 = vrot.lane.b32.xlu0 %v831, 32
      %v1195 = vpop.permute.xlu0 %1194
      %1196 = vrot.lane.b32.xlu0 %v832, 32
      %v1197 = vpop.permute.xlu0 %1196
      %1198 = vrot.lane.b32.xlu0 %v833, 32
      %v1199 = vpop.permute.xlu0 %1198
      %1200 = vrot.lane.b32.xlu0 %v834, 32
      %v1201 = vpop.permute.xlu0 %1200
      %1202 = vrot.lane.b32.xlu0 %v835, 32
      %v1203 = vpop.permute.xlu0 %1202
      %1204 = vrot.lane.b32.xlu0 %v836, 32
      %v1205 = vpop.permute.xlu0 %1204
      %1206 = vrot.lane.b32.xlu0 %v837, 32
      %v1207 = vpop.permute.xlu0 %1206
      %1216 = vmatprep.subr.bf16.mxu0 0
      %1217 = vmatpush1.bf16.msra.mxu0 %v1193
      %1218 = vmatprep.subr.bf16.mxu0 0
      %1219 = vmatpush1.bf16.msra.mxu0 %v1195
      %1220 = vmatprep.subr.bf16.mxu0 0
      %1221 = vmatpush1.bf16.msra.mxu0 %v1197
      %1222 = vmatprep.subr.bf16.mxu0 0
      %1223 = vmatpush1.bf16.msra.mxu0 %v1199
      %1224 = vmatprep.subr.bf16.mxu0 0
      %1225 = vmatpush1.bf16.msra.mxu0 %v1201
      %1226 = vmatprep.subr.bf16.mxu0 0
      %1227 = vmatpush1.bf16.msra.mxu0 %v1203
      %1228 = vmatprep.subr.bf16.mxu0 0
      %1229 = vmatpush1.bf16.msra.mxu0 %v1205
      %1230 = vmatprep.subr.bf16.mxu0 0
      %1231 = vmatpush1.bf16.msra.mxu0 %v1207
      %1232 = vmatprep.subr.bf16.mxu0 0
      %1233 = vmatpush1.bf16.msra.mxu0 0
      %1234 = vmatprep.subr.bf16.mxu0 0
      %1235 = vmatpush1.bf16.msra.mxu0 0
      %1236 = vmatprep.subr.bf16.mxu0 0
      %1237 = vmatpush1.bf16.msra.mxu0 0
      %1238 = vmatprep.subr.bf16.mxu0 0
      %1239 = vmatpush1.bf16.msra.mxu0 0
      %1240 = vmatprep.subr.bf16.mxu0 0
      %1241 = vmatpush1.bf16.msra.mxu0 0
      %1242 = vmatprep.subr.bf16.mxu0 0
      %1243 = vmatpush1.bf16.msra.mxu0 0
      %1244 = vmatprep.subr.bf16.mxu0 0
      %1245 = vmatpush1.bf16.msra.mxu0 0
      %1246 = vmatprep.subr.bf16.mxu0 0
      %1247 = vmatpush1.bf16.msra.mxu0 0
      %1248 = vmatprep.mubr.bf16.mxu0 0
      %1249 = vmatmul.mubr.bf16.gmra.mrb[0].mxu0 %v1184
      %v1250 = vpop.f32.mrb[0].mxu0
      %v1251 = vadd.f32 0.0, %v1250
      %v1252 = vpop.f32.mrb[0].mxu0
      %v1253 = vpop.f32.mrb[0].mxu0
      %v1254 = vadd.f32 0.0, %v1253
      %v1255 = vpop.f32.mrb[0].mxu0
      %1256 = vmatprep.mubr.bf16.mxu0 0
      %1257 = vmatmul.mubr.bf16.gmra.mrb[0].mxu0 %v1185
      %v1258 = vpop.f32.mrb[0].mxu0
      %v1259 = vadd.f32 0.0, %v1258
      %v1260 = vpop.f32.mrb[0].mxu0
      %v1261 = vpop.f32.mrb[0].mxu0
      %v1262 = vadd.f32 0.0, %v1261
      %v1263 = vpop.f32.mrb[0].mxu0
      %1264 = vmatprep.mubr.bf16.mxu0 0
      %1265 = vmatmul.mubr.bf16.gmra.mrb[0].mxu0 %v1186
      %v1266 = vpop.f32.mrb[0].mxu0
      %v1267 = vadd.f32 0.0, %v1266
      %v1268 = vpop.f32.mrb[0].mxu0
      %v1269 = vpop.f32.mrb[0].mxu0
      %v1270 = vadd.f32 0.0, %v1269
      %v1271 = vpop.f32.mrb[0].mxu0
      %1272 = vmatprep.mubr.bf16.mxu0 0
      %1273 = vmatmul.mubr.bf16.gmra.mrb[0].mxu0 %v1187
      %v1274 = vpop.f32.mrb[0].mxu0
      %v1275 = vadd.f32 0.0, %v1274
      %v1276 = vpop.f32.mrb[0].mxu0
      %v1277 = vpop.f32.mrb[0].mxu0
      %v1278 = vadd.f32 0.0, %v1277
      %v1279 = vpop.f32.mrb[0].mxu0
      %1280 = vmatprep.mubr.bf16.mxu0 0
      %1281 = vmatmul.mubr.bf16.gmra.mrb[0].mxu0 %v1188
      %v1282 = vpop.f32.mrb[0].mxu0
      %v1283 = vadd.f32 0.0, %v1282
      %v1284 = vpop.f32.mrb[0].mxu0
      %v1285 = vpop.f32.mrb[0].mxu0
      %v1286 = vadd.f32 0.0, %v1285
      %v1287 = vpop.f32.mrb[0].mxu0
      %1288 = vmatprep.mubr.bf16.mxu0 0
      %1289 = vmatmul.mubr.bf16.gmra.mrb[0].mxu0 %v1189
      %v1290 = vpop.f32.mrb[0].mxu0
      %v1291 = vadd.f32 0.0, %v1290
      %v1292 = vpop.f32.mrb[0].mxu0
      %v1293 = vpop.f32.mrb[0].mxu0
      %v1294 = vadd.f32 0.0, %v1293
      %v1295 = vpop.f32.mrb[0].mxu0
      %1296 = vmatprep.mubr.bf16.mxu0 0
      %1297 = vmatmul.mubr.bf16.gmra.mrb[0].mxu0 %v1190
      %v1298 = vpop.f32.mrb[0].mxu0
      %v1299 = vadd.f32 0.0, %v1298
      %v1300 = vpop.f32.mrb[0].mxu0
      %v1301 = vpop.f32.mrb[0].mxu0
      %v1302 = vadd.f32 0.0, %v1301
      %v1303 = vpop.f32.mrb[0].mxu0
      %1304 = vmatprep.mubr.bf16.mxu0 0
      %1305 = vmatmul.mubr.bf16.gmra.mrb[0].mxu0 %v1191
      %v1306 = vpop.f32.mrb[0].mxu0
      %v1307 = vadd.f32 0.0, %v1306
      %v1308 = vpop.f32.mrb[0].mxu0
      %v1309 = vpop.f32.mrb[0].mxu0
      %v1310 = vadd.f32 0.0, %v1309
      %v1311 = vpop.f32.mrb[0].mxu0
      %1312 = vdwg.mxu0
      %1313 = vrot.lane.b32.xlu0 %v830, 112
      %v1314 = vpop.permute.xlu0 %1313
      %1315 = vrot.lane.b32.xlu0 %v831, 112
      %v1316 = vpop.permute.xlu0 %1315
      %1317 = vrot.lane.b32.xlu0 %v832, 112
      %v1318 = vpop.permute.xlu0 %1317
      %1319 = vrot.lane.b32.xlu0 %v833, 112
      %v1320 = vpop.permute.xlu0 %1319
      %1321 = vrot.lane.b32.xlu0 %v834, 112
      %v1322 = vpop.permute.xlu0 %1321
      %1323 = vrot.lane.b32.xlu0 %v835, 112
      %v1324 = vpop.permute.xlu0 %1323
      %1325 = vrot.lane.b32.xlu0 %v836, 112
      %v1326 = vpop.permute.xlu0 %1325
      %1327 = vrot.lane.b32.xlu0 %v837, 112
      %v1328 = vpop.permute.xlu0 %1327
      %1329 = vrot.lane.b32.xlu0 %v830, 64
      %v1330 = vpop.permute.xlu0 %1329
      %1331 = vrot.lane.b32.xlu0 %v831, 64
      %v1332 = vpop.permute.xlu0 %1331
      %1333 = vrot.lane.b32.xlu0 %v832, 64
      %v1334 = vpop.permute.xlu0 %1333
      %1335 = vrot.lane.b32.xlu0 %v833, 64
      %v1336 = vpop.permute.xlu0 %1335
      %1337 = vrot.lane.b32.xlu0 %v834, 64
      %v1338 = vpop.permute.xlu0 %1337
      %1339 = vrot.lane.b32.xlu0 %v835, 64
      %v1340 = vpop.permute.xlu0 %1339
      %1341 = vrot.lane.b32.xlu0 %v836, 64
      %v1342 = vpop.permute.xlu0 %1341
      %1343 = vrot.lane.b32.xlu0 %v837, 64
      %v1344 = vpop.permute.xlu0 %1343
      %v1346 = vsel %vm862, %v1314, 0
      %v1349 = vsel %vm862, %v1316, 0
      %v1352 = vsel %vm862, %v1318, 0
      %v1355 = vsel %vm862, %v1320, 0
      %v1358 = vsel %vm862, %v1322, 0
      %v1361 = vsel %vm862, %v1324, 0
      %v1364 = vsel %vm862, %v1326, 0
      %v1367 = vsel %vm862, %v1328, 0
      %v1370 = vsel %vm862, %v1330, 0
      %v1373 = vsel %vm862, %v1332, 0
      %v1376 = vsel %vm862, %v1334, 0
      %v1379 = vsel %vm862, %v1336, 0
      %v1382 = vsel %vm862, %v1338, 0
      %v1385 = vsel %vm862, %v1340, 0
      %v1388 = vsel %vm862, %v1342, 0
      %v1391 = vsel %vm862, %v1344, 0
      %1393 = vmatprep.subr.bf16.mxu0 0
      %1394 = vmatpush1.bf16.xpose.msra.mxu0 %v1370
      %1395 = vmatprep.subr.bf16.mxu0 0
      %1396 = vmatpush1.bf16.xpose.msra.mxu0 %v1373
      %1397 = vmatprep.subr.bf16.mxu0 0
      %1398 = vmatpush1.bf16.xpose.msra.mxu0 %v1376
      %1399 = vmatprep.subr.bf16.mxu0 0
      %1400 = vmatpush1.bf16.xpose.msra.mxu0 %v1379
      %1401 = vmatprep.subr.bf16.mxu0 0
      %1402 = vmatpush1.bf16.xpose.msra.mxu0 %v1382
      %1403 = vmatprep.subr.bf16.mxu0 0
      %1404 = vmatpush1.bf16.xpose.msra.mxu0 %v1385
      %1405 = vmatprep.subr.bf16.mxu0 0
      %1406 = vmatpush1.bf16.xpose.msra.mxu0 %v1388
      %1407 = vmatprep.subr.bf16.mxu0 0
      %1408 = vmatpush1.bf16.xpose.msra.mxu0 %v1391
      %1409 = vmatprep.subr.bf16.mxu0 0
      %1410 = vmatpush1.bf16.xpose.msra.mxu0 0
      %1411 = vmatprep.subr.bf16.mxu0 0
      %1412 = vmatpush1.bf16.xpose.msra.mxu0 0
      %1413 = vmatprep.subr.bf16.mxu0 0
      %1414 = vmatpush1.bf16.xpose.msra.mxu0 0
      %1415 = vmatprep.subr.bf16.mxu0 0
      %1416 = vmatpush1.bf16.xpose.msra.mxu0 0
      %1417 = vmatprep.subr.bf16.mxu0 0
      %1418 = vmatpush1.bf16.xpose.msra.mxu0 0
      %1419 = vmatprep.subr.bf16.mxu0 0
      %1420 = vmatpush1.bf16.xpose.msra.mxu0 0
      %1421 = vmatprep.subr.bf16.mxu0 0
      %1422 = vmatpush1.bf16.xpose.msra.mxu0 0
      %1423 = vmatprep.subr.bf16.mxu0 0
      %1424 = vmatpush1.bf16.xpose.msra.mxu0 0
      %1425 = vmatprep.mubr.bf16.mxu0 0
      %1426 = vmatmul.mubr.bf16.gmra.mrb[0].mxu0 %v1346
      %v1427 = vpop.f32.mrb[0].mxu0
      %v1428 = vadd.f32 0.0, %v1427
      %v1429 = vpop.f32.mrb[0].mxu0
      %v1430 = vpop.f32.mrb[0].mxu0
      %v1431 = vadd.f32 0.0, %v1430
      %v1432 = vpop.f32.mrb[0].mxu0
      %1433 = vmatprep.mubr.bf16.mxu0 0
      %1434 = vmatmul.mubr.bf16.gmra.mrb[0].mxu0 %v1349
      %v1435 = vpop.f32.mrb[0].mxu0
      %v1436 = vadd.f32 0.0, %v1435
      %v1437 = vpop.f32.mrb[0].mxu0
      %v1438 = vpop.f32.mrb[0].mxu0
      %v1439 = vadd.f32 0.0, %v1438
      %v1440 = vpop.f32.mrb[0].mxu0
      %1441 = vmatprep.mubr.bf16.mxu0 0
      %1442 = vmatmul.mubr.bf16.gmra.mrb[0].mxu0 %v1352
      %v1443 = vpop.f32.mrb[0].mxu0
      %v1444 = vadd.f32 0.0, %v1443
      %v1445 = vpop.f32.mrb[0].mxu0
      %v1446 = vpop.f32.mrb[0].mxu0
      %v1447 = vadd.f32 0.0, %v1446
      %v1448 = vpop.f32.mrb[0].mxu0
      %1449 = vmatprep.mubr.bf16.mxu0 0
      %1450 = vmatmul.mubr.bf16.gmra.mrb[0].mxu0 %v1355
      %v1451 = vpop.f32.mrb[0].mxu0
      %v1452 = vadd.f32 0.0, %v1451
      %v1453 = vpop.f32.mrb[0].mxu0
      %v1454 = vpop.f32.mrb[0].mxu0
      %v1455 = vadd.f32 0.0, %v1454
      %v1456 = vpop.f32.mrb[0].mxu0
      %1457 = vmatprep.mubr.bf16.mxu0 0
      %1458 = vmatmul.mubr.bf16.gmra.mrb[0].mxu0 %v1358
      %v1459 = vpop.f32.mrb[0].mxu0
      %v1460 = vadd.f32 0.0, %v1459
      %v1461 = vpop.f32.mrb[0].mxu0
      %v1462 = vpop.f32.mrb[0].mxu0
      %v1463 = vadd.f32 0.0, %v1462
      %v1464 = vpop.f32.mrb[0].mxu0
      %1465 = vmatprep.mubr.bf16.mxu0 0
      %1466 = vmatmul.mubr.bf16.gmra.mrb[0].mxu0 %v1361
      %v1467 = vpop.f32.mrb[0].mxu0
      %v1468 = vadd.f32 0.0, %v1467
      %v1469 = vpop.f32.mrb[0].mxu0
      %v1470 = vpop.f32.mrb[0].mxu0
      %v1471 = vadd.f32 0.0, %v1470
      %v1472 = vpop.f32.mrb[0].mxu0
      %1473 = vmatprep.mubr.bf16.mxu0 0
      %1474 = vmatmul.mubr.bf16.gmra.mrb[0].mxu0 %v1364
      %v1475 = vpop.f32.mrb[0].mxu0
      %v1476 = vadd.f32 0.0, %v1475
      %v1477 = vpop.f32.mrb[0].mxu0
      %v1478 = vpop.f32.mrb[0].mxu0
      %v1479 = vadd.f32 0.0, %v1478
      %v1480 = vpop.f32.mrb[0].mxu0
      %1481 = vmatprep.mubr.bf16.mxu0 0
      %1482 = vmatmul.mubr.bf16.gmra.mrb[0].mxu0 %v1367
      %v1483 = vpop.f32.mrb[0].mxu0
      %v1484 = vadd.f32 0.0, %v1483
      %v1485 = vpop.f32.mrb[0].mxu0
      %v1486 = vpop.f32.mrb[0].mxu0
      %v1487 = vadd.f32 0.0, %v1486
      %v1488 = vpop.f32.mrb[0].mxu0
      %1489 = vdwg.mxu0
      %v1490 = vmul.f32 %v1428, 0.25
      %v1491 = vmul.f32 %v1431, 0.25
      %v1492 = vmul.f32 %v1436, 0.25
      %v1493 = vmul.f32 %v1439, 0.25
      %v1494 = vmul.f32 %v1444, 0.25
      %v1495 = vmul.f32 %v1447, 0.25
      %v1496 = vmul.f32 %v1452, 0.25
      %v1497 = vmul.f32 %v1455, 0.25
      %v1498 = vmul.f32 %v1460, 0.25
      %v1499 = vmul.f32 %v1463, 0.25
      %v1500 = vmul.f32 %v1468, 0.25
      %v1501 = vmul.f32 %v1471, 0.25
      %v1502 = vmul.f32 %v1476, 0.25
      %v1503 = vmul.f32 %v1479, 0.25
      %v1504 = vmul.f32 %v1484, 0.25
      %v1505 = vmul.f32 %v1487, 0.25
      %v1506 = vadd.f32 %v1490, %v829
      %v1507 = vadd.f32 %v1491, %v829
      %v1508 = vadd.f32 %v1492, %v829
      %v1509 = vadd.f32 %v1493, %v829
      %v1510 = vadd.f32 %v1494, %v829
      %v1511 = vadd.f32 %v1495, %v829
      %v1512 = vadd.f32 %v1496, %v829
      %v1513 = vadd.f32 %v1497, %v829
      %v1514 = vadd.f32 %v1498, %v829
      %v1515 = vadd.f32 %v1499, %v829
      %v1516 = vadd.f32 %v1500, %v829
      %v1517 = vadd.f32 %v1501, %v829
      %v1518 = vadd.f32 %v1502, %v829
      %v1519 = vadd.f32 %v1503, %v829
      %v1520 = vadd.f32 %v1504, %v829
      %v1521 = vadd.f32 %v1505, %v829
      %1522 = vmax.xlane.f32.xlu0 %v1506
      %v1523 = vpop.xlane.xlu0 %1522
      %1524 = vmax.xlane.f32.xlu0 %v1507
      %v1525 = vpop.xlane.xlu0 %1524
      %1526 = vmax.xlane.f32.xlu0 %v1508
      %v1527 = vpop.xlane.xlu0 %1526
      %1528 = vmax.xlane.f32.xlu0 %v1509
      %v1529 = vpop.xlane.xlu0 %1528
      %1530 = vmax.xlane.f32.xlu0 %v1510
      %v1531 = vpop.xlane.xlu0 %1530
      %1532 = vmax.xlane.f32.xlu0 %v1511
      %v1533 = vpop.xlane.xlu0 %1532
      %1534 = vmax.xlane.f32.xlu0 %v1512
      %v1535 = vpop.xlane.xlu0 %1534
      %1536 = vmax.xlane.f32.xlu0 %v1513
      %v1537 = vpop.xlane.xlu0 %1536
      %1538 = vmax.xlane.f32.xlu0 %v1514
      %v1539 = vpop.xlane.xlu0 %1538
      %1540 = vmax.xlane.f32.xlu0 %v1515
      %v1541 = vpop.xlane.xlu0 %1540
      %1542 = vmax.xlane.f32.xlu0 %v1516
      %v1543 = vpop.xlane.xlu0 %1542
      %1544 = vmax.xlane.f32.xlu0 %v1517
      %v1545 = vpop.xlane.xlu0 %1544
      %1546 = vmax.xlane.f32.xlu0 %v1518
      %v1547 = vpop.xlane.xlu0 %1546
      %1548 = vmax.xlane.f32.xlu0 %v1519
      %v1549 = vpop.xlane.xlu0 %1548
      %1550 = vmax.xlane.f32.xlu0 %v1520
      %v1551 = vpop.xlane.xlu0 %1550
      %1552 = vmax.xlane.f32.xlu0 %v1521
      %v1553 = vpop.xlane.xlu0 %1552
      %v1554 = vsub.f32 %v1506, %v1523
      %v1555 = vsub.f32 %v1507, %v1525
      %v1556 = vsub.f32 %v1508, %v1527
      %v1557 = vsub.f32 %v1509, %v1529
      %v1558 = vsub.f32 %v1510, %v1531
      %v1559 = vsub.f32 %v1511, %v1533
      %v1560 = vsub.f32 %v1512, %v1535
      %v1561 = vsub.f32 %v1513, %v1537
      %v1562 = vsub.f32 %v1514, %v1539
      %v1563 = vsub.f32 %v1515, %v1541
      %v1564 = vsub.f32 %v1516, %v1543
      %v1565 = vsub.f32 %v1517, %v1545
      %v1566 = vsub.f32 %v1518, %v1547
      %v1567 = vsub.f32 %v1519, %v1549
      %v1568 = vsub.f32 %v1520, %v1551
      %v1569 = vsub.f32 %v1521, %v1553
      %v1570 = vmul.f32 %v1554, 1.442695
      %v1571 = vpow.pop %v1570
      %v1572 = vmul.f32 %v1555, 1.442695
      %v1573 = vpow.pop %v1572
      %v1574 = vmul.f32 %v1556, 1.442695
      %v1575 = vpow.pop %v1574
      %v1576 = vmul.f32 %v1557, 1.442695
      %v1577 = vpow.pop %v1576
      %v1578 = vmul.f32 %v1558, 1.442695
      %v1579 = vpow.pop %v1578
      %v1580 = vmul.f32 %v1559, 1.442695
      %v1581 = vpow.pop %v1580
      %v1582 = vmul.f32 %v1560, 1.442695
      %v1583 = vpow.pop %v1582
      %v1584 = vmul.f32 %v1561, 1.442695
      %v1585 = vpow.pop %v1584
      %v1586 = vmul.f32 %v1562, 1.442695
      %v1587 = vpow.pop %v1586
      %v1588 = vmul.f32 %v1563, 1.442695
      %v1589 = vpow.pop %v1588
      %v1590 = vmul.f32 %v1564, 1.442695
      %v1591 = vpow.pop %v1590
      %v1592 = vmul.f32 %v1565, 1.442695
      %v1593 = vpow.pop %v1592
      %v1594 = vmul.f32 %v1566, 1.442695
      %v1595 = vpow.pop %v1594
      %v1596 = vmul.f32 %v1567, 1.442695
      %v1597 = vpow.pop %v1596
      %v1598 = vmul.f32 %v1568, 1.442695
      %v1599 = vpow.pop %v1598
      %v1600 = vmul.f32 %v1569, 1.442695
      %v1601 = vpow.pop %v1600
      %1602 = vadd.xlane.f32.xlu0 %v1571
      %v1603 = vpop.xlane.xlu0 %1602
      %1604 = vadd.xlane.f32.xlu0 %v1573
      %v1605 = vpop.xlane.xlu0 %1604
      %1606 = vadd.xlane.f32.xlu0 %v1575
      %v1607 = vpop.xlane.xlu0 %1606
      %1608 = vadd.xlane.f32.xlu0 %v1577
      %v1609 = vpop.xlane.xlu0 %1608
      %1610 = vadd.xlane.f32.xlu0 %v1579
      %v1611 = vpop.xlane.xlu0 %1610
      %1612 = vadd.xlane.f32.xlu0 %v1581
      %v1613 = vpop.xlane.xlu0 %1612
      %1614 = vadd.xlane.f32.xlu0 %v1583
      %v1615 = vpop.xlane.xlu0 %1614
      %1616 = vadd.xlane.f32.xlu0 %v1585
      %v1617 = vpop.xlane.xlu0 %1616
      %1618 = vadd.xlane.f32.xlu0 %v1587
      %v1619 = vpop.xlane.xlu0 %1618
      %1620 = vadd.xlane.f32.xlu0 %v1589
      %v1621 = vpop.xlane.xlu0 %1620
      %1622 = vadd.xlane.f32.xlu0 %v1591
      %v1623 = vpop.xlane.xlu0 %1622
      %1624 = vadd.xlane.f32.xlu0 %v1593
      %v1625 = vpop.xlane.xlu0 %1624
      %1626 = vadd.xlane.f32.xlu0 %v1595
      %v1627 = vpop.xlane.xlu0 %1626
      %1628 = vadd.xlane.f32.xlu0 %v1597
      %v1629 = vpop.xlane.xlu0 %1628
      %1630 = vadd.xlane.f32.xlu0 %v1599
      %v1631 = vpop.xlane.xlu0 %1630
      %1632 = vadd.xlane.f32.xlu0 %v1601
      %v1633 = vpop.xlane.xlu0 %1632
      %v1634 = vrcp.pop %v1603
      %v1635 = vrcp.pop %v1605
      %v1636 = vrcp.pop %v1607
      %v1637 = vrcp.pop %v1609
      %v1638 = vrcp.pop %v1611
      %v1639 = vrcp.pop %v1613
      %v1640 = vrcp.pop %v1615
      %v1641 = vrcp.pop %v1617
      %v1642 = vrcp.pop %v1619
      %v1643 = vrcp.pop %v1621
      %v1644 = vrcp.pop %v1623
      %v1645 = vrcp.pop %v1625
      %v1646 = vrcp.pop %v1627
      %v1647 = vrcp.pop %v1629
      %v1648 = vrcp.pop %v1631
      %v1649 = vrcp.pop %v1633
      %v1650 = vmul.f32 %v1571, %v1634
      %v1651 = vmul.f32 %v1573, %v1635
      %v1652 = vmul.f32 %v1575, %v1636
      %v1653 = vmul.f32 %v1577, %v1637
      %v1654 = vmul.f32 %v1579, %v1638
      %v1655 = vmul.f32 %v1581, %v1639
      %v1656 = vmul.f32 %v1583, %v1640
      %v1657 = vmul.f32 %v1585, %v1641
      %v1658 = vmul.f32 %v1587, %v1642
      %v1659 = vmul.f32 %v1589, %v1643
      %v1660 = vmul.f32 %v1591, %v1644
      %v1661 = vmul.f32 %v1593, %v1645
      %v1662 = vmul.f32 %v1595, %v1646
      %v1663 = vmul.f32 %v1597, %v1647
      %v1664 = vmul.f32 %v1599, %v1648
      %v1665 = vmul.f32 %v1601, %v1649
      %v1666 = vpack.c.bf16 %v1651, %v1650
      %v1667 = vpack.c.bf16 %v1653, %v1652
      %v1668 = vpack.c.bf16 %v1655, %v1654
      %v1669 = vpack.c.bf16 %v1657, %v1656
      %v1670 = vpack.c.bf16 %v1659, %v1658
      %v1671 = vpack.c.bf16 %v1661, %v1660
      %v1672 = vpack.c.bf16 %v1663, %v1662
      %v1673 = vpack.c.bf16 %v1665, %v1664
      %1674 = vrot.lane.b32.xlu0 %v830, 16
      %v1675 = vpop.permute.xlu0 %1674
      %1676 = vrot.lane.b32.xlu0 %v831, 16
      %v1677 = vpop.permute.xlu0 %1676
      %1678 = vrot.lane.b32.xlu0 %v832, 16
      %v1679 = vpop.permute.xlu0 %1678
      %1680 = vrot.lane.b32.xlu0 %v833, 16
      %v1681 = vpop.permute.xlu0 %1680
      %1682 = vrot.lane.b32.xlu0 %v834, 16
      %v1683 = vpop.permute.xlu0 %1682
      %1684 = vrot.lane.b32.xlu0 %v835, 16
      %v1685 = vpop.permute.xlu0 %1684
      %1686 = vrot.lane.b32.xlu0 %v836, 16
      %v1687 = vpop.permute.xlu0 %1686
      %1688 = vrot.lane.b32.xlu0 %v837, 16
      %v1689 = vpop.permute.xlu0 %1688
      %1698 = vmatprep.subr.bf16.mxu0 0
      %1699 = vmatpush1.bf16.msra.mxu0 %v1675
      %1700 = vmatprep.subr.bf16.mxu0 0
      %1701 = vmatpush1.bf16.msra.mxu0 %v1677
      %1702 = vmatprep.subr.bf16.mxu0 0
      %1703 = vmatpush1.bf16.msra.mxu0 %v1679
      %1704 = vmatprep.subr.bf16.mxu0 0
      %1705 = vmatpush1.bf16.msra.mxu0 %v1681
      %1706 = vmatprep.subr.bf16.mxu0 0
      %1707 = vmatpush1.bf16.msra.mxu0 %v1683
      %1708 = vmatprep.subr.bf16.mxu0 0
      %1709 = vmatpush1.bf16.msra.mxu0 %v1685
      %1710 = vmatprep.subr.bf16.mxu0 0
      %1711 = vmatpush1.bf16.msra.mxu0 %v1687
      %1712 = vmatprep.subr.bf16.mxu0 0
      %1713 = vmatpush1.bf16.msra.mxu0 %v1689
      %1714 = vmatprep.subr.bf16.mxu0 0
      %1715 = vmatpush1.bf16.msra.mxu0 0
      %1716 = vmatprep.subr.bf16.mxu0 0
      %1717 = vmatpush1.bf16.msra.mxu0 0
      %1718 = vmatprep.subr.bf16.mxu0 0
      %1719 = vmatpush1.bf16.msra.mxu0 0
      %1720 = vmatprep.subr.bf16.mxu0 0
      %1721 = vmatpush1.bf16.msra.mxu0 0
      %1722 = vmatprep.subr.bf16.mxu0 0
      %1723 = vmatpush1.bf16.msra.mxu0 0
      %1724 = vmatprep.subr.bf16.mxu0 0
      %1725 = vmatpush1.bf16.msra.mxu0 0
      %1726 = vmatprep.subr.bf16.mxu0 0
      %1727 = vmatpush1.bf16.msra.mxu0 0
      %1728 = vmatprep.subr.bf16.mxu0 0
      %1729 = vmatpush1.bf16.msra.mxu0 0
      %1730 = vmatprep.mubr.bf16.mxu0 0
      %1731 = vmatmul.mubr.bf16.gmra.mrb[0].mxu0 %v1666
      %v1732 = vpop.f32.mrb[0].mxu0
      %v1733 = vadd.f32 0.0, %v1732
      %v1734 = vpop.f32.mrb[0].mxu0
      %v1735 = vpop.f32.mrb[0].mxu0
      %v1736 = vadd.f32 0.0, %v1735
      %v1737 = vpop.f32.mrb[0].mxu0
      %1738 = vmatprep.mubr.bf16.mxu0 0
      %1739 = vmatmul.mubr.bf16.gmra.mrb[0].mxu0 %v1667
      %v1740 = vpop.f32.mrb[0].mxu0
      %v1741 = vadd.f32 0.0, %v1740
      %v1742 = vpop.f32.mrb[0].mxu0
      %v1743 = vpop.f32.mrb[0].mxu0
      %v1744 = vadd.f32 0.0, %v1743
      %v1745 = vpop.f32.mrb[0].mxu0
      %1746 = vmatprep.mubr.bf16.mxu0 0
      %1747 = vmatmul.mubr.bf16.gmra.mrb[0].mxu0 %v1668
      %v1748 = vpop.f32.mrb[0].mxu0
      %v1749 = vadd.f32 0.0, %v1748
      %v1750 = vpop.f32.mrb[0].mxu0
      %v1751 = vpop.f32.mrb[0].mxu0
      %v1752 = vadd.f32 0.0, %v1751
      %v1753 = vpop.f32.mrb[0].mxu0
      %1754 = vmatprep.mubr.bf16.mxu0 0
      %1755 = vmatmul.mubr.bf16.gmra.mrb[0].mxu0 %v1669
      %v1756 = vpop.f32.mrb[0].mxu0
      %v1757 = vadd.f32 0.0, %v1756
      %v1758 = vpop.f32.mrb[0].mxu0
      %v1759 = vpop.f32.mrb[0].mxu0
      %v1760 = vadd.f32 0.0, %v1759
      %v1761 = vpop.f32.mrb[0].mxu0
      %1762 = vmatprep.mubr.bf16.mxu0 0
      %1763 = vmatmul.mubr.bf16.gmra.mrb[0].mxu0 %v1670
      %v1764 = vpop.f32.mrb[0].mxu0
      %v1765 = vadd.f32 0.0, %v1764
      %v1766 = vpop.f32.mrb[0].mxu0
      %v1767 = vpop.f32.mrb[0].mxu0
      %v1768 = vadd.f32 0.0, %v1767
      %v1769 = vpop.f32.mrb[0].mxu0
      %1770 = vmatprep.mubr.bf16.mxu0 0
      %1771 = vmatmul.mubr.bf16.gmra.mrb[0].mxu0 %v1671
      %v1772 = vpop.f32.mrb[0].mxu0
      %v1773 = vadd.f32 0.0, %v1772
      %v1774 = vpop.f32.mrb[0].mxu0
      %v1775 = vpop.f32.mrb[0].mxu0
      %v1776 = vadd.f32 0.0, %v1775
      %v1777 = vpop.f32.mrb[0].mxu0
      %1778 = vmatprep.mubr.bf16.mxu0 0
      %1779 = vmatmul.mubr.bf16.gmra.mrb[0].mxu0 %v1672
      %v1780 = vpop.f32.mrb[0].mxu0
      %v1781 = vadd.f32 0.0, %v1780
      %v1782 = vpop.f32.mrb[0].mxu0
      %v1783 = vpop.f32.mrb[0].mxu0
      %v1784 = vadd.f32 0.0, %v1783
      %v1785 = vpop.f32.mrb[0].mxu0
      %1786 = vmatprep.mubr.bf16.mxu0 0
      %1787 = vmatmul.mubr.bf16.gmra.mrb[0].mxu0 %v1673
      %v1788 = vpop.f32.mrb[0].mxu0
      %v1789 = vadd.f32 0.0, %v1788
      %v1790 = vpop.f32.mrb[0].mxu0
      %v1791 = vpop.f32.mrb[0].mxu0
      %v1792 = vadd.f32 0.0, %v1791
      %v1793 = vpop.f32.mrb[0].mxu0
      %1794 = vdwg.mxu0
      %v1795 = vpack.c.bf16 %v754, %v750
      %v1796 = vpack.c.bf16 %v764, %v760
      %v1797 = vpack.c.bf16 %v774, %v770
      %v1798 = vpack.c.bf16 %v784, %v780
      %v1799 = vpack.c.bf16 %v794, %v790
      %v1800 = vpack.c.bf16 %v804, %v800
      %v1801 = vpack.c.bf16 %v814, %v810
      %v1802 = vpack.c.bf16 %v824, %v820
      %1803 = vrot.lane.b32.xlu0 %v830, 96
      %v1804 = vpop.permute.xlu0 %1803
      %1805 = vrot.lane.b32.xlu0 %v831, 96
      %v1806 = vpop.permute.xlu0 %1805
      %1807 = vrot.lane.b32.xlu0 %v832, 96
      %v1808 = vpop.permute.xlu0 %1807
      %1809 = vrot.lane.b32.xlu0 %v833, 96
      %v1810 = vpop.permute.xlu0 %1809
      %1811 = vrot.lane.b32.xlu0 %v834, 96
      %v1812 = vpop.permute.xlu0 %1811
      %1813 = vrot.lane.b32.xlu0 %v835, 96
      %v1814 = vpop.permute.xlu0 %1813
      %1815 = vrot.lane.b32.xlu0 %v836, 96
      %v1816 = vpop.permute.xlu0 %1815
      %1817 = vrot.lane.b32.xlu0 %v837, 96
      %v1818 = vpop.permute.xlu0 %1817
      %1819 = vrot.lane.b32.xlu0 %v830, 48
      %v1820 = vpop.permute.xlu0 %1819
      %1821 = vrot.lane.b32.xlu0 %v831, 48
      %v1822 = vpop.permute.xlu0 %1821
      %1823 = vrot.lane.b32.xlu0 %v832, 48
      %v1824 = vpop.permute.xlu0 %1823
      %1825 = vrot.lane.b32.xlu0 %v833, 48
      %v1826 = vpop.permute.xlu0 %1825
      %1827 = vrot.lane.b32.xlu0 %v834, 48
      %v1828 = vpop.permute.xlu0 %1827
      %1829 = vrot.lane.b32.xlu0 %v835, 48
      %v1830 = vpop.permute.xlu0 %1829
      %1831 = vrot.lane.b32.xlu0 %v836, 48
      %v1832 = vpop.permute.xlu0 %1831
      %1833 = vrot.lane.b32.xlu0 %v837, 48
      %v1834 = vpop.permute.xlu0 %1833
      %v1836 = vsel %vm862, %v1804, 0
      %v1839 = vsel %vm862, %v1806, 0
      %v1842 = vsel %vm862, %v1808, 0
      %v1845 = vsel %vm862, %v1810, 0
      %v1848 = vsel %vm862, %v1812, 0
      %v1851 = vsel %vm862, %v1814, 0
      %v1854 = vsel %vm862, %v1816, 0
      %v1857 = vsel %vm862, %v1818, 0
      %v1860 = vsel %vm862, %v1820, 0
      %v1863 = vsel %vm862, %v1822, 0
      %v1866 = vsel %vm862, %v1824, 0
      %v1869 = vsel %vm862, %v1826, 0
      %v1872 = vsel %vm862, %v1828, 0
      %v1875 = vsel %vm862, %v1830, 0
      %v1878 = vsel %vm862, %v1832, 0
      %v1881 = vsel %vm862, %v1834, 0
      %1883 = vmatprep.subr.bf16.mxu0 0
      %1884 = vmatpush1.bf16.xpose.msra.mxu0 %v1860
      %1885 = vmatprep.subr.bf16.mxu0 0
      %1886 = vmatpush1.bf16.xpose.msra.mxu0 %v1863
      %1887 = vmatprep.subr.bf16.mxu0 0
      %1888 = vmatpush1.bf16.xpose.msra.mxu0 %v1866
      %1889 = vmatprep.subr.bf16.mxu0 0
      %1890 = vmatpush1.bf16.xpose.msra.mxu0 %v1869
      %1891 = vmatprep.subr.bf16.mxu0 0
      %1892 = vmatpush1.bf16.xpose.msra.mxu0 %v1872
      %1893 = vmatprep.subr.bf16.mxu0 0
      %1894 = vmatpush1.bf16.xpose.msra.mxu0 %v1875
      %1895 = vmatprep.subr.bf16.mxu0 0
      %1896 = vmatpush1.bf16.xpose.msra.mxu0 %v1878
      %1897 = vmatprep.subr.bf16.mxu0 0
      %1898 = vmatpush1.bf16.xpose.msra.mxu0 %v1881
      %1899 = vmatprep.subr.bf16.mxu0 0
      %1900 = vmatpush1.bf16.xpose.msra.mxu0 0
      %1901 = vmatprep.subr.bf16.mxu0 0
      %1902 = vmatpush1.bf16.xpose.msra.mxu0 0
      %1903 = vmatprep.subr.bf16.mxu0 0
      %1904 = vmatpush1.bf16.xpose.msra.mxu0 0
      %1905 = vmatprep.subr.bf16.mxu0 0
      %1906 = vmatpush1.bf16.xpose.msra.mxu0 0
      %1907 = vmatprep.subr.bf16.mxu0 0
      %1908 = vmatpush1.bf16.xpose.msra.mxu0 0
      %1909 = vmatprep.subr.bf16.mxu0 0
      %1910 = vmatpush1.bf16.xpose.msra.mxu0 0
      %1911 = vmatprep.subr.bf16.mxu0 0
      %1912 = vmatpush1.bf16.xpose.msra.mxu0 0
      %1913 = vmatprep.subr.bf16.mxu0 0
      %1914 = vmatpush1.bf16.xpose.msra.mxu0 0
      %1915 = vmatprep.mubr.bf16.mxu0 0
      %1916 = vmatmul.mubr.bf16.gmra.mrb[0].mxu0 %v1836
      %v1917 = vpop.f32.mrb[0].mxu0
      %v1918 = vadd.f32 0.0, %v1917
      %v1919 = vpop.f32.mrb[0].mxu0
      %v1920 = vpop.f32.mrb[0].mxu0
      %v1921 = vadd.f32 0.0, %v1920
      %v1922 = vpop.f32.mrb[0].mxu0
      %1923 = vmatprep.mubr.bf16.mxu0 0
      %1924 = vmatmul.mubr.bf16.gmra.mrb[0].mxu0 %v1839
      %v1925 = vpop.f32.mrb[0].mxu0
      %v1926 = vadd.f32 0.0, %v1925
      %v1927 = vpop.f32.mrb[0].mxu0
      %v1928 = vpop.f32.mrb[0].mxu0
      %v1929 = vadd.f32 0.0, %v1928
      %v1930 = vpop.f32.mrb[0].mxu0
      %1931 = vmatprep.mubr.bf16.mxu0 0
      %1932 = vmatmul.mubr.bf16.gmra.mrb[0].mxu0 %v1842
      %v1933 = vpop.f32.mrb[0].mxu0
      %v1934 = vadd.f32 0.0, %v1933
      %v1935 = vpop.f32.mrb[0].mxu0
      %v1936 = vpop.f32.mrb[0].mxu0
      %v1937 = vadd.f32 0.0, %v1936
      %v1938 = vpop.f32.mrb[0].mxu0
      %1939 = vmatprep.mubr.bf16.mxu0 0
      %1940 = vmatmul.mubr.bf16.gmra.mrb[0].mxu0 %v1845
      %v1941 = vpop.f32.mrb[0].mxu0
      %v1942 = vadd.f32 0.0, %v1941
      %v1943 = vpop.f32.mrb[0].mxu0
      %v1944 = vpop.f32.mrb[0].mxu0
      %v1945 = vadd.f32 0.0, %v1944
      %v1946 = vpop.f32.mrb[0].mxu0
      %1947 = vmatprep.mubr.bf16.mxu0 0
      %1948 = vmatmul.mubr.bf16.gmra.mrb[0].mxu0 %v1848
      %v1949 = vpop.f32.mrb[0].mxu0
      %v1950 = vadd.f32 0.0, %v1949
      %v1951 = vpop.f32.mrb[0].mxu0
      %v1952 = vpop.f32.mrb[0].mxu0
      %v1953 = vadd.f32 0.0, %v1952
      %v1954 = vpop.f32.mrb[0].mxu0
      %1955 = vmatprep.mubr.bf16.mxu0 0
      %1956 = vmatmul.mubr.bf16.gmra.mrb[0].mxu0 %v1851
      %v1957 = vpop.f32.mrb[0].mxu0
      %v1958 = vadd.f32 0.0, %v1957
      %v1959 = vpop.f32.mrb[0].mxu0
      %v1960 = vpop.f32.mrb[0].mxu0
      %v1961 = vadd.f32 0.0, %v1960
      %v1962 = vpop.f32.mrb[0].mxu0
      %1963 = vmatprep.mubr.bf16.mxu0 0
      %1964 = vmatmul.mubr.bf16.gmra.mrb[0].mxu0 %v1854
      %v1965 = vpop.f32.mrb[0].mxu0
      %v1966 = vadd.f32 0.0, %v1965
      %v1967 = vpop.f32.mrb[0].mxu0
      %v1968 = vpop.f32.mrb[0].mxu0
      %v1969 = vadd.f32 0.0, %v1968
      %v1970 = vpop.f32.mrb[0].mxu0
      %1971 = vmatprep.mubr.bf16.mxu0 0
      %1972 = vmatmul.mubr.bf16.gmra.mrb[0].mxu0 %v1857
      %v1973 = vpop.f32.mrb[0].mxu0
      %v1974 = vadd.f32 0.0, %v1973
      %v1975 = vpop.f32.mrb[0].mxu0
      %v1976 = vpop.f32.mrb[0].mxu0
      %v1977 = vadd.f32 0.0, %v1976
      %v1978 = vpop.f32.mrb[0].mxu0
      %1979 = vdwg.mxu0
      %v1980 = vmul.f32 %v1918, 0.25
      %v1981 = vmul.f32 %v1921, 0.25
      %v1982 = vmul.f32 %v1926, 0.25
      %v1983 = vmul.f32 %v1929, 0.25
      %v1984 = vmul.f32 %v1934, 0.25
      %v1985 = vmul.f32 %v1937, 0.25
      %v1986 = vmul.f32 %v1942, 0.25
      %v1987 = vmul.f32 %v1945, 0.25
      %v1988 = vmul.f32 %v1950, 0.25
      %v1989 = vmul.f32 %v1953, 0.25
      %v1990 = vmul.f32 %v1958, 0.25
      %v1991 = vmul.f32 %v1961, 0.25
      %v1992 = vmul.f32 %v1966, 0.25
      %v1993 = vmul.f32 %v1969, 0.25
      %v1994 = vmul.f32 %v1974, 0.25
      %v1995 = vmul.f32 %v1977, 0.25
      %v1996 = vadd.f32 %v1980, %v829
      %v1997 = vadd.f32 %v1981, %v829
      %v1998 = vadd.f32 %v1982, %v829
      %v1999 = vadd.f32 %v1983, %v829
      %v2000 = vadd.f32 %v1984, %v829
      %v2001 = vadd.f32 %v1985, %v829
      %v2002 = vadd.f32 %v1986, %v829
      %v2003 = vadd.f32 %v1987, %v829
      %v2004 = vadd.f32 %v1988, %v829
      %v2005 = vadd.f32 %v1989, %v829
      %v2006 = vadd.f32 %v1990, %v829
      %v2007 = vadd.f32 %v1991, %v829
      %v2008 = vadd.f32 %v1992, %v829
      %v2009 = vadd.f32 %v1993, %v829
      %v2010 = vadd.f32 %v1994, %v829
      %v2011 = vadd.f32 %v1995, %v829
      %2012 = vmax.xlane.f32.xlu0 %v1996
      %v2013 = vpop.xlane.xlu0 %2012
      %2014 = vmax.xlane.f32.xlu0 %v1997
      %v2015 = vpop.xlane.xlu0 %2014
      %2016 = vmax.xlane.f32.xlu0 %v1998
      %v2017 = vpop.xlane.xlu0 %2016
      %2018 = vmax.xlane.f32.xlu0 %v1999
      %v2019 = vpop.xlane.xlu0 %2018
      %2020 = vmax.xlane.f32.xlu0 %v2000
      %v2021 = vpop.xlane.xlu0 %2020
      %2022 = vmax.xlane.f32.xlu0 %v2001
      %v2023 = vpop.xlane.xlu0 %2022
      %2024 = vmax.xlane.f32.xlu0 %v2002
      %v2025 = vpop.xlane.xlu0 %2024
      %2026 = vmax.xlane.f32.xlu0 %v2003
      %v2027 = vpop.xlane.xlu0 %2026
      %2028 = vmax.xlane.f32.xlu0 %v2004
      %v2029 = vpop.xlane.xlu0 %2028
      %2030 = vmax.xlane.f32.xlu0 %v2005
      %v2031 = vpop.xlane.xlu0 %2030
      %2032 = vmax.xlane.f32.xlu0 %v2006
      %v2033 = vpop.xlane.xlu0 %2032
      %2034 = vmax.xlane.f32.xlu0 %v2007
      %v2035 = vpop.xlane.xlu0 %2034
      %2036 = vmax.xlane.f32.xlu0 %v2008
      %v2037 = vpop.xlane.xlu0 %2036
      %2038 = vmax.xlane.f32.xlu0 %v2009
      %v2039 = vpop.xlane.xlu0 %2038
      %2040 = vmax.xlane.f32.xlu0 %v2010
      %v2041 = vpop.xlane.xlu0 %2040
      %2042 = vmax.xlane.f32.xlu0 %v2011
      %v2043 = vpop.xlane.xlu0 %2042
      %v2044 = vsub.f32 %v1996, %v2013
      %v2045 = vsub.f32 %v1997, %v2015
      %v2046 = vsub.f32 %v1998, %v2017
      %v2047 = vsub.f32 %v1999, %v2019
      %v2048 = vsub.f32 %v2000, %v2021
      %v2049 = vsub.f32 %v2001, %v2023
      %v2050 = vsub.f32 %v2002, %v2025
      %v2051 = vsub.f32 %v2003, %v2027
      %v2052 = vsub.f32 %v2004, %v2029
      %v2053 = vsub.f32 %v2005, %v2031
      %v2054 = vsub.f32 %v2006, %v2033
      %v2055 = vsub.f32 %v2007, %v2035
      %v2056 = vsub.f32 %v2008, %v2037
      %v2057 = vsub.f32 %v2009, %v2039
      %v2058 = vsub.f32 %v2010, %v2041
      %v2059 = vsub.f32 %v2011, %v2043
      %v2060 = vmul.f32 %v2044, 1.442695
      %v2061 = vpow.pop %v2060
      %v2062 = vmul.f32 %v2045, 1.442695
      %v2063 = vpow.pop %v2062
      %v2064 = vmul.f32 %v2046, 1.442695
      %v2065 = vpow.pop %v2064
      %v2066 = vmul.f32 %v2047, 1.442695
      %v2067 = vpow.pop %v2066
      %v2068 = vmul.f32 %v2048, 1.442695
      %v2069 = vpow.pop %v2068
      %v2070 = vmul.f32 %v2049, 1.442695
      %v2071 = vpow.pop %v2070
      %v2072 = vmul.f32 %v2050, 1.442695
      %v2073 = vpow.pop %v2072
      %v2074 = vmul.f32 %v2051, 1.442695
      %v2075 = vpow.pop %v2074
      %v2076 = vmul.f32 %v2052, 1.442695
      %v2077 = vpow.pop %v2076
      %v2078 = vmul.f32 %v2053, 1.442695
      %v2079 = vpow.pop %v2078
      %v2080 = vmul.f32 %v2054, 1.442695
      %v2081 = vpow.pop %v2080
      %v2082 = vmul.f32 %v2055, 1.442695
      %v2083 = vpow.pop %v2082
      %v2084 = vmul.f32 %v2056, 1.442695
      %v2085 = vpow.pop %v2084
      %v2086 = vmul.f32 %v2057, 1.442695
      %v2087 = vpow.pop %v2086
      %v2088 = vmul.f32 %v2058, 1.442695
      %v2089 = vpow.pop %v2088
      %v2090 = vmul.f32 %v2059, 1.442695
      %v2091 = vpow.pop %v2090
      %2092 = vadd.xlane.f32.xlu0 %v2061
      %v2093 = vpop.xlane.xlu0 %2092
      %2094 = vadd.xlane.f32.xlu0 %v2063
      %v2095 = vpop.xlane.xlu0 %2094
      %2096 = vadd.xlane.f32.xlu0 %v2065
      %v2097 = vpop.xlane.xlu0 %2096
      %2098 = vadd.xlane.f32.xlu0 %v2067
      %v2099 = vpop.xlane.xlu0 %2098
      %2100 = vadd.xlane.f32.xlu0 %v2069
      %v2101 = vpop.xlane.xlu0 %2100
      %2102 = vadd.xlane.f32.xlu0 %v2071
      %v2103 = vpop.xlane.xlu0 %2102
      %2104 = vadd.xlane.f32.xlu0 %v2073
      %v2105 = vpop.xlane.xlu0 %2104
      %2106 = vadd.xlane.f32.xlu0 %v2075
      %v2107 = vpop.xlane.xlu0 %2106
      %2108 = vadd.xlane.f32.xlu0 %v2077
      %v2109 = vpop.xlane.xlu0 %2108
      %2110 = vadd.xlane.f32.xlu0 %v2079
      %v2111 = vpop.xlane.xlu0 %2110
      %2112 = vadd.xlane.f32.xlu0 %v2081
      %v2113 = vpop.xlane.xlu0 %2112
      %2114 = vadd.xlane.f32.xlu0 %v2083
      %v2115 = vpop.xlane.xlu0 %2114
      %2116 = vadd.xlane.f32.xlu0 %v2085
      %v2117 = vpop.xlane.xlu0 %2116
      %2118 = vadd.xlane.f32.xlu0 %v2087
      %v2119 = vpop.xlane.xlu0 %2118
      %2120 = vadd.xlane.f32.xlu0 %v2089
      %v2121 = vpop.xlane.xlu0 %2120
      %2122 = vadd.xlane.f32.xlu0 %v2091
      %v2123 = vpop.xlane.xlu0 %2122
      %v2124 = vrcp.pop %v2093
      %v2125 = vrcp.pop %v2095
      %v2126 = vrcp.pop %v2097
      %v2127 = vrcp.pop %v2099
      %v2128 = vrcp.pop %v2101
      %v2129 = vrcp.pop %v2103
      %v2130 = vrcp.pop %v2105
      %v2131 = vrcp.pop %v2107
      %v2132 = vrcp.pop %v2109
      %v2133 = vrcp.pop %v2111
      %v2134 = vrcp.pop %v2113
      %v2135 = vrcp.pop %v2115
      %v2136 = vrcp.pop %v2117
      %v2137 = vrcp.pop %v2119
      %v2138 = vrcp.pop %v2121
      %v2139 = vrcp.pop %v2123
      %v2140 = vmul.f32 %v2061, %v2124
      %v2141 = vmul.f32 %v2063, %v2125
      %v2142 = vmul.f32 %v2065, %v2126
      %v2143 = vmul.f32 %v2067, %v2127
      %v2144 = vmul.f32 %v2069, %v2128
      %v2145 = vmul.f32 %v2071, %v2129
      %v2146 = vmul.f32 %v2073, %v2130
      %v2147 = vmul.f32 %v2075, %v2131
      %v2148 = vmul.f32 %v2077, %v2132
      %v2149 = vmul.f32 %v2079, %v2133
      %v2150 = vmul.f32 %v2081, %v2134
      %v2151 = vmul.f32 %v2083, %v2135
      %v2152 = vmul.f32 %v2085, %v2136
      %v2153 = vmul.f32 %v2087, %v2137
      %v2154 = vmul.f32 %v2089, %v2138
      %v2155 = vmul.f32 %v2091, %v2139
      %v2156 = vpack.c.bf16 %v2141, %v2140
      %v2157 = vpack.c.bf16 %v2143, %v2142
      %v2158 = vpack.c.bf16 %v2145, %v2144
      %v2159 = vpack.c.bf16 %v2147, %v2146
      %v2160 = vpack.c.bf16 %v2149, %v2148
      %v2161 = vpack.c.bf16 %v2151, %v2150
      %v2162 = vpack.c.bf16 %v2153, %v2152
      %v2163 = vpack.c.bf16 %v2155, %v2154
      %2164 = vmatprep.subr.bf16.mxu0 0
      %2165 = vmatpush1.bf16.msra.mxu0 %v1795
      %2166 = vmatprep.subr.bf16.mxu0 0
      %2167 = vmatpush1.bf16.msra.mxu0 %v1796
      %2168 = vmatprep.subr.bf16.mxu0 0
      %2169 = vmatpush1.bf16.msra.mxu0 %v1797
      %2170 = vmatprep.subr.bf16.mxu0 0
      %2171 = vmatpush1.bf16.msra.mxu0 %v1798
      %2172 = vmatprep.subr.bf16.mxu0 0
      %2173 = vmatpush1.bf16.msra.mxu0 %v1799
      %2174 = vmatprep.subr.bf16.mxu0 0
      %2175 = vmatpush1.bf16.msra.mxu0 %v1800
      %2176 = vmatprep.subr.bf16.mxu0 0
      %2177 = vmatpush1.bf16.msra.mxu0 %v1801
      %2178 = vmatprep.subr.bf16.mxu0 0
      %2179 = vmatpush1.bf16.msra.mxu0 %v1802
      %2180 = vmatprep.subr.bf16.mxu0 0
      %2181 = vmatpush1.bf16.msra.mxu0 0
      %2182 = vmatprep.subr.bf16.mxu0 0
      %2183 = vmatpush1.bf16.msra.mxu0 0
      %2184 = vmatprep.subr.bf16.mxu0 0
      %2185 = vmatpush1.bf16.msra.mxu0 0
      %2186 = vmatprep.subr.bf16.mxu0 0
      %2187 = vmatpush1.bf16.msra.mxu0 0
      %2188 = vmatprep.subr.bf16.mxu0 0
      %2189 = vmatpush1.bf16.msra.mxu0 0
      %2190 = vmatprep.subr.bf16.mxu0 0
      %2191 = vmatpush1.bf16.msra.mxu0 0
      %2192 = vmatprep.subr.bf16.mxu0 0
      %2193 = vmatpush1.bf16.msra.mxu0 0
      %2194 = vmatprep.subr.bf16.mxu0 0
      %2195 = vmatpush1.bf16.msra.mxu0 0
      %2196 = vmatprep.mubr.bf16.mxu0 0
      %2197 = vmatmul.mubr.bf16.gmra.mrb[0].mxu0 %v2156
      %v2198 = vpop.f32.mrb[0].mxu0
      %v2199 = vadd.f32 0.0, %v2198
      %v2200 = vpop.f32.mrb[0].mxu0
      %v2201 = vpop.f32.mrb[0].mxu0
      %v2202 = vadd.f32 0.0, %v2201
      %v2203 = vpop.f32.mrb[0].mxu0
      %2204 = vmatprep.mubr.bf16.mxu0 0
      %2205 = vmatmul.mubr.bf16.gmra.mrb[0].mxu0 %v2157
      %v2206 = vpop.f32.mrb[0].mxu0
      %v2207 = vadd.f32 0.0, %v2206
      %v2208 = vpop.f32.mrb[0].mxu0
      %v2209 = vpop.f32.mrb[0].mxu0
      %v2210 = vadd.f32 0.0, %v2209
      %v2211 = vpop.f32.mrb[0].mxu0
      %2212 = vmatprep.mubr.bf16.mxu0 0
      %2213 = vmatmul.mubr.bf16.gmra.mrb[0].mxu0 %v2158
      %v2214 = vpop.f32.mrb[0].mxu0
      %v2215 = vadd.f32 0.0, %v2214
      %v2216 = vpop.f32.mrb[0].mxu0
      %v2217 = vpop.f32.mrb[0].mxu0
      %v2218 = vadd.f32 0.0, %v2217
      %v2219 = vpop.f32.mrb[0].mxu0
      %2220 = vmatprep.mubr.bf16.mxu0 0
      %2221 = vmatmul.mubr.bf16.gmra.mrb[0].mxu0 %v2159
      %v2222 = vpop.f32.mrb[0].mxu0
      %v2223 = vadd.f32 0.0, %v2222
      %v2224 = vpop.f32.mrb[0].mxu0
      %v2225 = vpop.f32.mrb[0].mxu0
      %v2226 = vadd.f32 0.0, %v2225
      %v2227 = vpop.f32.mrb[0].mxu0
      %2228 = vmatprep.mubr.bf16.mxu0 0
      %2229 = vmatmul.mubr.bf16.gmra.mrb[0].mxu0 %v2160
      %v2230 = vpop.f32.mrb[0].mxu0
      %v2231 = vadd.f32 0.0, %v2230
      %v2232 = vpop.f32.mrb[0].mxu0
      %v2233 = vpop.f32.mrb[0].mxu0
      %v2234 = vadd.f32 0.0, %v2233
      %v2235 = vpop.f32.mrb[0].mxu0
      %2236 = vmatprep.mubr.bf16.mxu0 0
      %2237 = vmatmul.mubr.bf16.gmra.mrb[0].mxu0 %v2161
      %v2238 = vpop.f32.mrb[0].mxu0
      %v2239 = vadd.f32 0.0, %v2238
      %v2240 = vpop.f32.mrb[0].mxu0
      %v2241 = vpop.f32.mrb[0].mxu0
      %v2242 = vadd.f32 0.0, %v2241
      %v2243 = vpop.f32.mrb[0].mxu0
      %2244 = vmatprep.mubr.bf16.mxu0 0
      %2245 = vmatmul.mubr.bf16.gmra.mrb[0].mxu0 %v2162
      %v2246 = vpop.f32.mrb[0].mxu0
      %v2247 = vadd.f32 0.0, %v2246
      %v2248 = vpop.f32.mrb[0].mxu0
      %v2249 = vpop.f32.mrb[0].mxu0
      %v2250 = vadd.f32 0.0, %v2249
      %v2251 = vpop.f32.mrb[0].mxu0
      %2252 = vmatprep.mubr.bf16.mxu0 0
      %2253 = vmatmul.mubr.bf16.gmra.mrb[0].mxu0 %v2163
      %v2254 = vpop.f32.mrb[0].mxu0
      %v2255 = vadd.f32 0.0, %v2254
      %v2256 = vpop.f32.mrb[0].mxu0
      %v2257 = vpop.f32.mrb[0].mxu0
      %v2258 = vadd.f32 0.0, %v2257
      %v2259 = vpop.f32.mrb[0].mxu0
      %2260 = vdwg.mxu0
      %2277 = vrot.lane.b32.xlu0 %v1733, 16
      %v2278 = vpop.permute.xlu0 %2277
      %2279 = vrot.lane.b32.xlu0 %v1736, 16
      %v2280 = vpop.permute.xlu0 %2279
      %2281 = vrot.lane.b32.xlu0 %v1741, 16
      %v2282 = vpop.permute.xlu0 %2281
      %2283 = vrot.lane.b32.xlu0 %v1744, 16
      %v2284 = vpop.permute.xlu0 %2283
      %2285 = vrot.lane.b32.xlu0 %v1749, 16
      %v2286 = vpop.permute.xlu0 %2285
      %2287 = vrot.lane.b32.xlu0 %v1752, 16
      %v2288 = vpop.permute.xlu0 %2287
      %2289 = vrot.lane.b32.xlu0 %v1757, 16
      %v2290 = vpop.permute.xlu0 %2289
      %2291 = vrot.lane.b32.xlu0 %v1760, 16
      %v2292 = vpop.permute.xlu0 %2291
      %2293 = vrot.lane.b32.xlu0 %v1765, 16
      %v2294 = vpop.permute.xlu0 %2293
      %2295 = vrot.lane.b32.xlu0 %v1768, 16
      %v2296 = vpop.permute.xlu0 %2295
      %2297 = vrot.lane.b32.xlu0 %v1773, 16
      %v2298 = vpop.permute.xlu0 %2297
      %2299 = vrot.lane.b32.xlu0 %v1776, 16
      %v2300 = vpop.permute.xlu0 %2299
      %2301 = vrot.lane.b32.xlu0 %v1781, 16
      %v2302 = vpop.permute.xlu0 %2301
      %2303 = vrot.lane.b32.xlu0 %v1784, 16
      %v2304 = vpop.permute.xlu0 %2303
      %2305 = vrot.lane.b32.xlu0 %v1789, 16
      %v2306 = vpop.permute.xlu0 %2305
      %2307 = vrot.lane.b32.xlu0 %v1792, 16
      %v2308 = vpop.permute.xlu0 %2307
      %2341 = vrot.lane.b32.xlu0 %v2199, 32
      %v2342 = vpop.permute.xlu0 %2341
      %2343 = vrot.lane.b32.xlu0 %v2202, 32
      %v2344 = vpop.permute.xlu0 %2343
      %2345 = vrot.lane.b32.xlu0 %v2207, 32
      %v2346 = vpop.permute.xlu0 %2345
      %2347 = vrot.lane.b32.xlu0 %v2210, 32
      %v2348 = vpop.permute.xlu0 %2347
      %2349 = vrot.lane.b32.xlu0 %v2215, 32
      %v2350 = vpop.permute.xlu0 %2349
      %2351 = vrot.lane.b32.xlu0 %v2218, 32
      %v2352 = vpop.permute.xlu0 %2351
      %2353 = vrot.lane.b32.xlu0 %v2223, 32
      %v2354 = vpop.permute.xlu0 %2353
      %2355 = vrot.lane.b32.xlu0 %v2226, 32
      %v2356 = vpop.permute.xlu0 %2355
      %2357 = vrot.lane.b32.xlu0 %v2231, 32
      %v2358 = vpop.permute.xlu0 %2357
      %2359 = vrot.lane.b32.xlu0 %v2234, 32
      %v2360 = vpop.permute.xlu0 %2359
      %2361 = vrot.lane.b32.xlu0 %v2239, 32
      %v2362 = vpop.permute.xlu0 %2361
      %2363 = vrot.lane.b32.xlu0 %v2242, 32
      %v2364 = vpop.permute.xlu0 %2363
      %2365 = vrot.lane.b32.xlu0 %v2247, 32
      %v2366 = vpop.permute.xlu0 %2365
      %2367 = vrot.lane.b32.xlu0 %v2250, 32
      %v2368 = vpop.permute.xlu0 %2367
      %2369 = vrot.lane.b32.xlu0 %v2255, 32
      %v2370 = vpop.permute.xlu0 %2369
      %2371 = vrot.lane.b32.xlu0 %v2258, 32
      %v2372 = vpop.permute.xlu0 %2371
      %v2389 = vsel %vm862, %v1251, %v2278
      %v2390 = vsel %vm862, %v1254, %v2280
      %v2391 = vsel %vm862, %v1259, %v2282
      %v2392 = vsel %vm862, %v1262, %v2284
      %v2393 = vsel %vm862, %v1267, %v2286
      %v2394 = vsel %vm862, %v1270, %v2288
      %v2395 = vsel %vm862, %v1275, %v2290
      %v2396 = vsel %vm862, %v1278, %v2292
      %v2397 = vsel %vm862, %v1283, %v2294
      %v2398 = vsel %vm862, %v1286, %v2296
      %v2399 = vsel %vm862, %v1291, %v2298
      %v2400 = vsel %vm862, %v1294, %v2300
      %v2401 = vsel %vm862, %v1299, %v2302
      %v2402 = vsel %vm862, %v1302, %v2304
      %v2403 = vsel %vm862, %v1307, %v2306
      %v2404 = vsel %vm862, %v1310, %v2308
      %vm2405 = vcmask 261120
      %v2406 = vsel %vm2405, %v2389, %v2342
      %v2407 = vsel %vm2405, %v2390, %v2344
      %v2408 = vsel %vm2405, %v2391, %v2346
      %v2409 = vsel %vm2405, %v2392, %v2348
      %v2410 = vsel %vm2405, %v2393, %v2350
      %v2411 = vsel %vm2405, %v2394, %v2352
      %v2412 = vsel %vm2405, %v2395, %v2354
      %v2413 = vsel %vm2405, %v2396, %v2356
      %v2414 = vsel %vm2405, %v2397, %v2358
      %v2415 = vsel %vm2405, %v2398, %v2360
      %v2416 = vsel %vm2405, %v2399, %v2362
      %v2417 = vsel %vm2405, %v2400, %v2364
      %v2418 = vsel %vm2405, %v2401, %v2366
      %v2419 = vsel %vm2405, %v2402, %v2368
      %v2420 = vsel %vm2405, %v2403, %v2370
      %v2421 = vsel %vm2405, %v2404, %v2372
      %v2422 = vpack.c.bf16 %v2407, %v2406
      %v2423 = vpack.c.bf16 %v2409, %v2408
      %v2424 = vpack.c.bf16 %v2411, %v2410
      %v2425 = vpack.c.bf16 %v2413, %v2412
      %v2426 = vpack.c.bf16 %v2415, %v2414
      %v2427 = vpack.c.bf16 %v2417, %v2416
      %v2428 = vpack.c.bf16 %v2419, %v2418
      %v2429 = vpack.c.bf16 %v2421, %v2420
      %s2430 = smul.u32 %s24, 6
      %s2431 = smul.addr %s2430, 4
      %s2432 = scalar_lea.vmem %s4, %s2431
      %v2433 = vld [vmem:[%s2432] sm:$0xf]
      %v2434 = vld [vmem:[%s2432 + $0x4] sm:$0xf]
      %v2435 = vld [vmem:[%s2432 + $0x8] sm:$0xf]
      %v2436 = vld [vmem:[%s2432 + $0xc] sm:$0xf]
      %v2437 = vld [vmem:[%s2432 + $0x10] sm:$0xf]
      %v2438 = vld [vmem:[%s2432 + $0x14] sm:$0xf]
      %v2445 = vunpack.c.l.b16 %v2433
      %v2446 = vunpack.c.l.b16 %v2434
      %v2447 = vunpack.c.l.b16 %v2435
      %v2448 = vunpack.c.l.b16 %v2436
      %v2449 = vunpack.c.l.b16 %v2437
      %v2450 = vunpack.c.l.b16 %v2438
      %v2451 = vpack.c.b16 %v2446, %v2445
      %v2452 = vpack.c.b16 %v2448, %v2447
      %v2453 = vpack.c.b16 %v2450, %v2449
      %v2458 = vsel %vm378, %v2422, 0
      %v2461 = vsel %vm378, %v2423, 0
      %v2464 = vsel %vm378, %v2424, 0
      %v2467 = vsel %vm378, %v2425, 0
      %v2470 = vsel %vm378, %v2426, 0
      %v2473 = vsel %vm378, %v2427, 0
      %v2476 = vsel %vm378, %v2428, 0
      %v2479 = vsel %vm378, %v2429, 0
      %2481 = vmatprep.subr.bf16.mxu0 0
      %2482 = vmatpush1.bf16.msra.mxu0 %v2451
      %2483 = vmatprep.subr.bf16.mxu0 0
      %2484 = vmatpush1.bf16.msra.mxu0 %v2452
      %2485 = vmatprep.subr.bf16.mxu0 0
      %2486 = vmatpush1.bf16.msra.mxu0 %v2453
      %2487 = vmatprep.subr.bf16.mxu0 0
      %2488 = vmatpush1.bf16.msra.mxu0 0
      %2489 = vmatprep.subr.bf16.mxu0 0
      %2490 = vmatpush1.bf16.msra.mxu0 0
      %2491 = vmatprep.subr.bf16.mxu0 0
      %2492 = vmatpush1.bf16.msra.mxu0 0
      %2493 = vmatprep.subr.bf16.mxu0 0
      %2494 = vmatpush1.bf16.msra.mxu0 0
      %2495 = vmatprep.subr.bf16.mxu0 0
      %2496 = vmatpush1.bf16.msra.mxu0 0
      %2497 = vmatprep.subr.bf16.mxu0 0
      %2498 = vmatpush1.bf16.msra.mxu0 0
      %2499 = vmatprep.subr.bf16.mxu0 0
      %2500 = vmatpush1.bf16.msra.mxu0 0
      %2501 = vmatprep.subr.bf16.mxu0 0
      %2502 = vmatpush1.bf16.msra.mxu0 0
      %2503 = vmatprep.subr.bf16.mxu0 0
      %2504 = vmatpush1.bf16.msra.mxu0 0
      %2505 = vmatprep.subr.bf16.mxu0 0
      %2506 = vmatpush1.bf16.msra.mxu0 0
      %2507 = vmatprep.subr.bf16.mxu0 0
      %2508 = vmatpush1.bf16.msra.mxu0 0
      %2509 = vmatprep.subr.bf16.mxu0 0
      %2510 = vmatpush1.bf16.msra.mxu0 0
      %2511 = vmatprep.subr.bf16.mxu0 0
      %2512 = vmatpush1.bf16.msra.mxu0 0
      %2513 = vmatprep.mubr.bf16.mxu0 0
      %2514 = vmatmul.mubr.bf16.gmra.mrb[0].mxu0 %v2458
      %v2515 = vpop.f32.mrb[0].mxu0
      %v2516 = vadd.f32 0.0, %v2515
      %v2517 = vpop.f32.mrb[0].mxu0
      %v2518 = vpop.f32.mrb[0].mxu0
      %v2519 = vadd.f32 0.0, %v2518
      %v2520 = vpop.f32.mrb[0].mxu0
      %2521 = vmatprep.mubr.bf16.mxu0 0
      %2522 = vmatmul.mubr.bf16.gmra.mrb[0].mxu0 %v2461
      %v2523 = vpop.f32.mrb[0].mxu0
      %v2524 = vadd.f32 0.0, %v2523
      %v2525 = vpop.f32.mrb[0].mxu0
      %v2526 = vpop.f32.mrb[0].mxu0
      %v2527 = vadd.f32 0.0, %v2526
      %v2528 = vpop.f32.mrb[0].mxu0
      %2529 = vmatprep.mubr.bf16.mxu0 0
      %2530 = vmatmul.mubr.bf16.gmra.mrb[0].mxu0 %v2464
      %v2531 = vpop.f32.mrb[0].mxu0
      %v2532 = vadd.f32 0.0, %v2531
      %v2533 = vpop.f32.mrb[0].mxu0
      %v2534 = vpop.f32.mrb[0].mxu0
      %v2535 = vadd.f32 0.0, %v2534
      %v2536 = vpop.f32.mrb[0].mxu0
      %2537 = vmatprep.mubr.bf16.mxu0 0
      %2538 = vmatmul.mubr.bf16.gmra.mrb[0].mxu0 %v2467
      %v2539 = vpop.f32.mrb[0].mxu0
      %v2540 = vadd.f32 0.0, %v2539
      %v2541 = vpop.f32.mrb[0].mxu0
      %v2542 = vpop.f32.mrb[0].mxu0
      %v2543 = vadd.f32 0.0, %v2542
      %v2544 = vpop.f32.mrb[0].mxu0
      %2545 = vmatprep.mubr.bf16.mxu0 0
      %2546 = vmatmul.mubr.bf16.gmra.mrb[0].mxu0 %v2470
      %v2547 = vpop.f32.mrb[0].mxu0
      %v2548 = vadd.f32 0.0, %v2547
      %v2549 = vpop.f32.mrb[0].mxu0
      %v2550 = vpop.f32.mrb[0].mxu0
      %v2551 = vadd.f32 0.0, %v2550
      %v2552 = vpop.f32.mrb[0].mxu0
      %2553 = vmatprep.mubr.bf16.mxu0 0
      %2554 = vmatmul.mubr.bf16.gmra.mrb[0].mxu0 %v2473
      %v2555 = vpop.f32.mrb[0].mxu0
      %v2556 = vadd.f32 0.0, %v2555
      %v2557 = vpop.f32.mrb[0].mxu0
      %v2558 = vpop.f32.mrb[0].mxu0
      %v2559 = vadd.f32 0.0, %v2558
      %v2560 = vpop.f32.mrb[0].mxu0
      %2561 = vmatprep.mubr.bf16.mxu0 0
      %2562 = vmatmul.mubr.bf16.gmra.mrb[0].mxu0 %v2476
      %v2563 = vpop.f32.mrb[0].mxu0
      %v2564 = vadd.f32 0.0, %v2563
      %v2565 = vpop.f32.mrb[0].mxu0
      %v2566 = vpop.f32.mrb[0].mxu0
      %v2567 = vadd.f32 0.0, %v2566
      %v2568 = vpop.f32.mrb[0].mxu0
      %2569 = vmatprep.mubr.bf16.mxu0 0
      %2570 = vmatmul.mubr.bf16.gmra.mrb[0].mxu0 %v2479
      %v2571 = vpop.f32.mrb[0].mxu0
      %v2572 = vadd.f32 0.0, %v2571
      %v2573 = vpop.f32.mrb[0].mxu0
      %v2574 = vpop.f32.mrb[0].mxu0
      %v2575 = vadd.f32 0.0, %v2574
      %v2576 = vpop.f32.mrb[0].mxu0
      %2577 = vdwg.mxu0
      %v2578 = vadd.f32 %v359, %v2516
      %v2579 = vadd.f32 %v360, %v2519
      %v2580 = vadd.f32 %v361, %v2524
      %v2581 = vadd.f32 %v362, %v2527
      %v2582 = vadd.f32 %v363, %v2532
      %v2583 = vadd.f32 %v364, %v2535
      %v2584 = vadd.f32 %v365, %v2540
      %v2585 = vadd.f32 %v366, %v2543
      %v2586 = vadd.f32 %v367, %v2548
      %v2587 = vadd.f32 %v368, %v2551
      %v2588 = vadd.f32 %v369, %v2556
      %v2589 = vadd.f32 %v370, %v2559
      %v2590 = vadd.f32 %v371, %v2564
      %v2591 = vadd.f32 %v372, %v2567
      %v2592 = vadd.f32 %v373, %v2572
      %v2593 = vadd.f32 %v374, %v2575
      %v2594 = vlaneseq
      %v2595 = vshrl.u32 %v2594, 7
      %v2596 = vsub.s32 4, %v2595
      %v2597 = vrot.slane %v377, %v2596
      %v2598 = vadd.f32 %v2578, %v2597
      %v2599 = vadd.f32 %v2579, %v2597
      %v2600 = vadd.f32 %v2580, %v2597
      %v2601 = vadd.f32 %v2581, %v2597
      %v2602 = vadd.f32 %v2582, %v2597
      %v2603 = vadd.f32 %v2583, %v2597
      %v2604 = vadd.f32 %v2584, %v2597
      %v2605 = vadd.f32 %v2585, %v2597
      %v2606 = vadd.f32 %v2586, %v2597
      %v2607 = vadd.f32 %v2587, %v2597
      %v2608 = vadd.f32 %v2588, %v2597
      %v2609 = vadd.f32 %v2589, %v2597
      %v2610 = vadd.f32 %v2590, %v2597
      %v2611 = vadd.f32 %v2591, %v2597
      %v2612 = vadd.f32 %v2592, %v2597
      %v2613 = vadd.f32 %v2593, %v2597
      %v2614 = vsel %vm378, %v2598, 0.0
      %2615 = vadd.xlane.f32.xlu0 %v2614
      %v2616 = vpop.xlane.xlu0 %2615
      %v2617 = vsel %vm378, %v2599, 0.0
      %2618 = vadd.xlane.f32.xlu0 %v2617
      %v2619 = vpop.xlane.xlu0 %2618
      %v2620 = vsel %vm378, %v2600, 0.0
      %2621 = vadd.xlane.f32.xlu0 %v2620
      %v2622 = vpop.xlane.xlu0 %2621
      %v2623 = vsel %vm378, %v2601, 0.0
      %2624 = vadd.xlane.f32.xlu0 %v2623
      %v2625 = vpop.xlane.xlu0 %2624
      %v2626 = vsel %vm378, %v2602, 0.0
      %2627 = vadd.xlane.f32.xlu0 %v2626
      %v2628 = vpop.xlane.xlu0 %2627
      %v2629 = vsel %vm378, %v2603, 0.0
      %2630 = vadd.xlane.f32.xlu0 %v2629
      %v2631 = vpop.xlane.xlu0 %2630
      %v2632 = vsel %vm378, %v2604, 0.0
      %2633 = vadd.xlane.f32.xlu0 %v2632
      %v2634 = vpop.xlane.xlu0 %2633
      %v2635 = vsel %vm378, %v2605, 0.0
      %2636 = vadd.xlane.f32.xlu0 %v2635
      %v2637 = vpop.xlane.xlu0 %2636
      %v2638 = vsel %vm378, %v2606, 0.0
      %2639 = vadd.xlane.f32.xlu0 %v2638
      %v2640 = vpop.xlane.xlu0 %2639
      %v2641 = vsel %vm378, %v2607, 0.0
      %2642 = vadd.xlane.f32.xlu0 %v2641
      %v2643 = vpop.xlane.xlu0 %2642
      %v2644 = vsel %vm378, %v2608, 0.0
      %2645 = vadd.xlane.f32.xlu0 %v2644
      %v2646 = vpop.xlane.xlu0 %2645
      %v2647 = vsel %vm378, %v2609, 0.0
      %2648 = vadd.xlane.f32.xlu0 %v2647
      %v2649 = vpop.xlane.xlu0 %2648
      %v2650 = vsel %vm378, %v2610, 0.0
      %2651 = vadd.xlane.f32.xlu0 %v2650
      %v2652 = vpop.xlane.xlu0 %2651
      %v2653 = vsel %vm378, %v2611, 0.0
      %2654 = vadd.xlane.f32.xlu0 %v2653
      %v2655 = vpop.xlane.xlu0 %2654
      %v2656 = vsel %vm378, %v2612, 0.0
      %2657 = vadd.xlane.f32.xlu0 %v2656
      %v2658 = vpop.xlane.xlu0 %2657
      %v2659 = vsel %vm378, %v2613, 0.0
      %2660 = vadd.xlane.f32.xlu0 %v2659
      %v2661 = vpop.xlane.xlu0 %2660
      %v2662 = vmul.f32 %v2616, %v427
      %v2663 = vmul.f32 %v2619, %v427
      %v2664 = vmul.f32 %v2622, %v427
      %v2665 = vmul.f32 %v2625, %v427
      %v2666 = vmul.f32 %v2628, %v427
      %v2667 = vmul.f32 %v2631, %v427
      %v2668 = vmul.f32 %v2634, %v427
      %v2669 = vmul.f32 %v2637, %v427
      %v2670 = vmul.f32 %v2640, %v427
      %v2671 = vmul.f32 %v2643, %v427
      %v2672 = vmul.f32 %v2646, %v427
      %v2673 = vmul.f32 %v2649, %v427
      %v2674 = vmul.f32 %v2652, %v427
      %v2675 = vmul.f32 %v2655, %v427
      %v2676 = vmul.f32 %v2658, %v427
      %v2677 = vmul.f32 %v2661, %v427
      %v2678 = vsub.f32 %v2598, %v2662
      %v2679 = vsub.f32 %v2599, %v2663
      %v2680 = vsub.f32 %v2600, %v2664
      %v2681 = vsub.f32 %v2601, %v2665
      %v2682 = vsub.f32 %v2602, %v2666
      %v2683 = vsub.f32 %v2603, %v2667
      %v2684 = vsub.f32 %v2604, %v2668
      %v2685 = vsub.f32 %v2605, %v2669
      %v2686 = vsub.f32 %v2606, %v2670
      %v2687 = vsub.f32 %v2607, %v2671
      %v2688 = vsub.f32 %v2608, %v2672
      %v2689 = vsub.f32 %v2609, %v2673
      %v2690 = vsub.f32 %v2610, %v2674
      %v2691 = vsub.f32 %v2611, %v2675
      %v2692 = vsub.f32 %v2612, %v2676
      %v2693 = vsub.f32 %v2613, %v2677
      %v2694 = vmul.f32 %v2678, %v2678
      %v2695 = vmul.f32 %v2679, %v2679
      %v2696 = vmul.f32 %v2680, %v2680
      %v2697 = vmul.f32 %v2681, %v2681
      %v2698 = vmul.f32 %v2682, %v2682
      %v2699 = vmul.f32 %v2683, %v2683
      %v2700 = vmul.f32 %v2684, %v2684
      %v2701 = vmul.f32 %v2685, %v2685
      %v2702 = vmul.f32 %v2686, %v2686
      %v2703 = vmul.f32 %v2687, %v2687
      %v2704 = vmul.f32 %v2688, %v2688
      %v2705 = vmul.f32 %v2689, %v2689
      %v2706 = vmul.f32 %v2690, %v2690
      %v2707 = vmul.f32 %v2691, %v2691
      %v2708 = vmul.f32 %v2692, %v2692
      %v2709 = vmul.f32 %v2693, %v2693
      %v2710 = vsel %vm378, %v2694, 0.0
      %2711 = vadd.xlane.f32.xlu0 %v2710
      %v2712 = vpop.xlane.xlu0 %2711
      %v2713 = vsel %vm378, %v2695, 0.0
      %2714 = vadd.xlane.f32.xlu0 %v2713
      %v2715 = vpop.xlane.xlu0 %2714
      %v2716 = vsel %vm378, %v2696, 0.0
      %2717 = vadd.xlane.f32.xlu0 %v2716
      %v2718 = vpop.xlane.xlu0 %2717
      %v2719 = vsel %vm378, %v2697, 0.0
      %2720 = vadd.xlane.f32.xlu0 %v2719
      %v2721 = vpop.xlane.xlu0 %2720
      %v2722 = vsel %vm378, %v2698, 0.0
      %2723 = vadd.xlane.f32.xlu0 %v2722
      %v2724 = vpop.xlane.xlu0 %2723
      %v2725 = vsel %vm378, %v2699, 0.0
      %2726 = vadd.xlane.f32.xlu0 %v2725
      %v2727 = vpop.xlane.xlu0 %2726
      %v2728 = vsel %vm378, %v2700, 0.0
      %2729 = vadd.xlane.f32.xlu0 %v2728
      %v2730 = vpop.xlane.xlu0 %2729
      %v2731 = vsel %vm378, %v2701, 0.0
      %2732 = vadd.xlane.f32.xlu0 %v2731
      %v2733 = vpop.xlane.xlu0 %2732
      %v2734 = vsel %vm378, %v2702, 0.0
      %2735 = vadd.xlane.f32.xlu0 %v2734
      %v2736 = vpop.xlane.xlu0 %2735
      %v2737 = vsel %vm378, %v2703, 0.0
      %2738 = vadd.xlane.f32.xlu0 %v2737
      %v2739 = vpop.xlane.xlu0 %2738
      %v2740 = vsel %vm378, %v2704, 0.0
      %2741 = vadd.xlane.f32.xlu0 %v2740
      %v2742 = vpop.xlane.xlu0 %2741
      %v2743 = vsel %vm378, %v2705, 0.0
      %2744 = vadd.xlane.f32.xlu0 %v2743
      %v2745 = vpop.xlane.xlu0 %2744
      %v2746 = vsel %vm378, %v2706, 0.0
      %2747 = vadd.xlane.f32.xlu0 %v2746
      %v2748 = vpop.xlane.xlu0 %2747
      %v2749 = vsel %vm378, %v2707, 0.0
      %2750 = vadd.xlane.f32.xlu0 %v2749
      %v2751 = vpop.xlane.xlu0 %2750
      %v2752 = vsel %vm378, %v2708, 0.0
      %2753 = vadd.xlane.f32.xlu0 %v2752
      %v2754 = vpop.xlane.xlu0 %2753
      %v2755 = vsel %vm378, %v2709, 0.0
      %2756 = vadd.xlane.f32.xlu0 %v2755
      %v2757 = vpop.xlane.xlu0 %2756
      %v2758 = vmul.f32 %v2712, %v427
      %v2759 = vmul.f32 %v2715, %v427
      %v2760 = vmul.f32 %v2718, %v427
      %v2761 = vmul.f32 %v2721, %v427
      %v2762 = vmul.f32 %v2724, %v427
      %v2763 = vmul.f32 %v2727, %v427
      %v2764 = vmul.f32 %v2730, %v427
      %v2765 = vmul.f32 %v2733, %v427
      %v2766 = vmul.f32 %v2736, %v427
      %v2767 = vmul.f32 %v2739, %v427
      %v2768 = vmul.f32 %v2742, %v427
      %v2769 = vmul.f32 %v2745, %v427
      %v2770 = vmul.f32 %v2748, %v427
      %v2771 = vmul.f32 %v2751, %v427
      %v2772 = vmul.f32 %v2754, %v427
      %v2773 = vmul.f32 %v2757, %v427
      %v2774 = vadd.f32 %v2758, 1e-06
      %v2775 = vadd.f32 %v2759, 1e-06
      %v2776 = vadd.f32 %v2760, 1e-06
      %v2777 = vadd.f32 %v2761, 1e-06
      %v2778 = vadd.f32 %v2762, 1e-06
      %v2779 = vadd.f32 %v2763, 1e-06
      %v2780 = vadd.f32 %v2764, 1e-06
      %v2781 = vadd.f32 %v2765, 1e-06
      %v2782 = vadd.f32 %v2766, 1e-06
      %v2783 = vadd.f32 %v2767, 1e-06
      %v2784 = vadd.f32 %v2768, 1e-06
      %v2785 = vadd.f32 %v2769, 1e-06
      %v2786 = vadd.f32 %v2770, 1e-06
      %v2787 = vadd.f32 %v2771, 1e-06
      %v2788 = vadd.f32 %v2772, 1e-06
      %v2789 = vadd.f32 %v2773, 1e-06
      %v2790 = vrsqrt.pop %v2774
      %v2791 = vrsqrt.pop %v2775
      %v2792 = vrsqrt.pop %v2776
      %v2793 = vrsqrt.pop %v2777
      %v2794 = vrsqrt.pop %v2778
      %v2795 = vrsqrt.pop %v2779
      %v2796 = vrsqrt.pop %v2780
      %v2797 = vrsqrt.pop %v2781
      %v2798 = vrsqrt.pop %v2782
      %v2799 = vrsqrt.pop %v2783
      %v2800 = vrsqrt.pop %v2784
      %v2801 = vrsqrt.pop %v2785
      %v2802 = vrsqrt.pop %v2786
      %v2803 = vrsqrt.pop %v2787
      %v2804 = vrsqrt.pop %v2788
      %v2805 = vrsqrt.pop %v2789
      %v2806 = vmul.f32 %v2678, %v2790
      %v2807 = vmul.f32 %v2679, %v2791
      %v2808 = vmul.f32 %v2680, %v2792
      %v2809 = vmul.f32 %v2681, %v2793
      %v2810 = vmul.f32 %v2682, %v2794
      %v2811 = vmul.f32 %v2683, %v2795
      %v2812 = vmul.f32 %v2684, %v2796
      %v2813 = vmul.f32 %v2685, %v2797
      %v2814 = vmul.f32 %v2686, %v2798
      %v2815 = vmul.f32 %v2687, %v2799
      %v2816 = vmul.f32 %v2688, %v2800
      %v2817 = vmul.f32 %v2689, %v2801
      %v2818 = vmul.f32 %v2690, %v2802
      %v2819 = vmul.f32 %v2691, %v2803
      %v2820 = vmul.f32 %v2692, %v2804
      %v2821 = vmul.f32 %v2693, %v2805
      %v2822 = vlaneseq
      %v2823 = vshrl.u32 %v2822, 7
      %v2824 = vsub.s32 2, %v2823
      %v2825 = vrot.slane %v377, %v2824
      %v2826 = vmul.f32 %v2806, %v2825
      %v2827 = vmul.f32 %v2807, %v2825
      %v2828 = vmul.f32 %v2808, %v2825
      %v2829 = vmul.f32 %v2809, %v2825
      %v2830 = vmul.f32 %v2810, %v2825
      %v2831 = vmul.f32 %v2811, %v2825
      %v2832 = vmul.f32 %v2812, %v2825
      %v2833 = vmul.f32 %v2813, %v2825
      %v2834 = vmul.f32 %v2814, %v2825
      %v2835 = vmul.f32 %v2815, %v2825
      %v2836 = vmul.f32 %v2816, %v2825
      %v2837 = vmul.f32 %v2817, %v2825
      %v2838 = vmul.f32 %v2818, %v2825
      %v2839 = vmul.f32 %v2819, %v2825
      %v2840 = vmul.f32 %v2820, %v2825
      %v2841 = vmul.f32 %v2821, %v2825
      %v2842 = vlaneseq
      %v2843 = vshrl.u32 %v2842, 7
      %v2844 = vsub.s32 3, %v2843
      %v2845 = vrot.slane %v377, %v2844
      %v2846 = vadd.f32 %v2826, %v2845
      %v2847 = vadd.f32 %v2827, %v2845
      %v2848 = vadd.f32 %v2828, %v2845
      %v2849 = vadd.f32 %v2829, %v2845
      %v2850 = vadd.f32 %v2830, %v2845
      %v2851 = vadd.f32 %v2831, %v2845
      %v2852 = vadd.f32 %v2832, %v2845
      %v2853 = vadd.f32 %v2833, %v2845
      %v2854 = vadd.f32 %v2834, %v2845
      %v2855 = vadd.f32 %v2835, %v2845
      %v2856 = vadd.f32 %v2836, %v2845
      %v2857 = vadd.f32 %v2837, %v2845
      %v2858 = vadd.f32 %v2838, %v2845
      %v2859 = vadd.f32 %v2839, %v2845
      %v2860 = vadd.f32 %v2840, %v2845
      %v2861 = vadd.f32 %v2841, %v2845
      %v2862 = vpack.c.bf16 %v2847, %v2846
      %v2863 = vpack.c.bf16 %v2849, %v2848
      %v2864 = vpack.c.bf16 %v2851, %v2850
      %v2865 = vpack.c.bf16 %v2853, %v2852
      %v2866 = vpack.c.bf16 %v2855, %v2854
      %v2867 = vpack.c.bf16 %v2857, %v2856
      %v2868 = vpack.c.bf16 %v2859, %v2858
      %v2869 = vpack.c.bf16 %v2861, %v2860
      %s2870 = smul.addr %s636, 4
      %s2871 = scalar_lea.vmem %s5, %s2870
      %v2872 = vld [vmem:[%s2871] sm:$0xff]
      %v2873 = vld [vmem:[%s2871 + $0x8] sm:$0xff]
      %v2874 = vld [vmem:[%s2871 + $0x10] sm:$0xff]
      %v2875 = vld [vmem:[%s2871 + $0x18] sm:$0xff]
      %v2876 = vld [vmem:[%s2871 + $0x20] sm:$0xff]
      %v2877 = vld [vmem:[%s2871 + $0x28] sm:$0xff]
      %s2878 = scalar_lea.vmem %s6, %s645
      %v2879 = vld [vmem:[%s2878] sm:$0x3]
      %v2881 = vlaneseq
      %v2882 = vshrl.u32 %v2881, 7
      %v2883 = vsub.s32 0, %v2882
      %v2884 = vrot.slane %v2879, %v2883
      %v2885 = vlaneseq
      %v2886 = vshrl.u32 %v2885, 7
      %v2887 = vsub.s32 1, %v2886
      %v2888 = vrot.slane %v2879, %v2887
      %v2897 = vunpack.c.l.b16 %v2872
      %v2898 = vunpack.c.h.b16 %v2872
      %v2899 = vunpack.c.l.b16 %v2873
      %v2900 = vunpack.c.h.b16 %v2873
      %v2901 = vunpack.c.l.b16 %v2874
      %v2902 = vunpack.c.h.b16 %v2874
      %v2903 = vunpack.c.l.b16 %v2875
      %v2904 = vunpack.c.h.b16 %v2875
      %v2905 = vunpack.c.l.b16 %v2876
      %v2906 = vunpack.c.h.b16 %v2876
      %v2907 = vunpack.c.l.b16 %v2877
      %v2908 = vunpack.c.h.b16 %v2877
      %v2909 = vpack.c.b16 %v2899, %v2897
      %v2910 = vpack.c.b16 %v2900, %v2898
      %v2911 = vpack.c.b16 %v2903, %v2901
      %v2912 = vpack.c.b16 %v2904, %v2902
      %v2913 = vpack.c.b16 %v2907, %v2905
      %v2914 = vpack.c.b16 %v2908, %v2906
      %v2922 = vsel %vm378, %v2862, 0
      %v2925 = vsel %vm378, %v2863, 0
      %v2928 = vsel %vm378, %v2864, 0
      %v2931 = vsel %vm378, %v2865, 0
      %v2934 = vsel %vm378, %v2866, 0
      %v2937 = vsel %vm378, %v2867, 0
      %v2940 = vsel %vm378, %v2868, 0
      %v2943 = vsel %vm378, %v2869, 0
      %2945 = vmatprep.subr.bf16.mxu0 %v2910
      %2946 = vmatpush1.bf16.msra.mxu0 %v2909
      %2947 = vmatprep.subr.bf16.mxu0 %v2912
      %2948 = vmatpush1.bf16.msra.mxu0 %v2911
      %2949 = vmatprep.subr.bf16.mxu0 %v2914
      %2950 = vmatpush1.bf16.msra.mxu0 %v2913
      %2951 = vmatprep.subr.bf16.mxu0 0
      %2952 = vmatpush1.bf16.msra.mxu0 0
      %2953 = vmatprep.subr.bf16.mxu0 0
      %2954 = vmatpush1.bf16.msra.mxu0 0
      %2955 = vmatprep.subr.bf16.mxu0 0
      %2956 = vmatpush1.bf16.msra.mxu0 0
      %2957 = vmatprep.subr.bf16.mxu0 0
      %2958 = vmatpush1.bf16.msra.mxu0 0
      %2959 = vmatprep.subr.bf16.mxu0 0
      %2960 = vmatpush1.bf16.msra.mxu0 0
      %2961 = vmatprep.subr.bf16.mxu0 0
      %2962 = vmatpush1.bf16.msra.mxu0 0
      %2963 = vmatprep.subr.bf16.mxu0 0
      %2964 = vmatpush1.bf16.msra.mxu0 0
      %2965 = vmatprep.subr.bf16.mxu0 0
      %2966 = vmatpush1.bf16.msra.mxu0 0
      %2967 = vmatprep.subr.bf16.mxu0 0
      %2968 = vmatpush1.bf16.msra.mxu0 0
      %2969 = vmatprep.subr.bf16.mxu0 0
      %2970 = vmatpush1.bf16.msra.mxu0 0
      %2971 = vmatprep.subr.bf16.mxu0 0
      %2972 = vmatpush1.bf16.msra.mxu0 0
      %2973 = vmatprep.subr.bf16.mxu0 0
      %2974 = vmatpush1.bf16.msra.mxu0 0
      %2975 = vmatprep.subr.bf16.mxu0 0
      %2976 = vmatpush1.bf16.msra.mxu0 0
      %2977 = vmatprep.mubr.bf16.mxu0 0
      %2978 = vmatmul.mubr.bf16.gmra.mrb[0].mxu0 %v2922
      %v2979 = vpop.f32.mrb[0].mxu0
      %v2980 = vadd.f32 %v2884, %v2979
      %v2981 = vpop.f32.mrb[0].mxu0
      %v2982 = vadd.f32 %v2888, %v2981
      %v2983 = vpop.f32.mrb[0].mxu0
      %v2984 = vadd.f32 %v2884, %v2983
      %v2985 = vpop.f32.mrb[0].mxu0
      %v2986 = vadd.f32 %v2888, %v2985
      %2987 = vmatprep.mubr.bf16.mxu0 0
      %2988 = vmatmul.mubr.bf16.gmra.mrb[0].mxu0 %v2925
      %v2989 = vpop.f32.mrb[0].mxu0
      %v2990 = vadd.f32 %v2884, %v2989
      %v2991 = vpop.f32.mrb[0].mxu0
      %v2992 = vadd.f32 %v2888, %v2991
      %v2993 = vpop.f32.mrb[0].mxu0
      %v2994 = vadd.f32 %v2884, %v2993
      %v2995 = vpop.f32.mrb[0].mxu0
      %v2996 = vadd.f32 %v2888, %v2995
      %2997 = vmatprep.mubr.bf16.mxu0 0
      %2998 = vmatmul.mubr.bf16.gmra.mrb[0].mxu0 %v2928
      %v2999 = vpop.f32.mrb[0].mxu0
      %v3000 = vadd.f32 %v2884, %v2999
      %v3001 = vpop.f32.mrb[0].mxu0
      %v3002 = vadd.f32 %v2888, %v3001
      %v3003 = vpop.f32.mrb[0].mxu0
      %v3004 = vadd.f32 %v2884, %v3003
      %v3005 = vpop.f32.mrb[0].mxu0
      %v3006 = vadd.f32 %v2888, %v3005
      %3007 = vmatprep.mubr.bf16.mxu0 0
      %3008 = vmatmul.mubr.bf16.gmra.mrb[0].mxu0 %v2931
      %v3009 = vpop.f32.mrb[0].mxu0
      %v3010 = vadd.f32 %v2884, %v3009
      %v3011 = vpop.f32.mrb[0].mxu0
      %v3012 = vadd.f32 %v2888, %v3011
      %v3013 = vpop.f32.mrb[0].mxu0
      %v3014 = vadd.f32 %v2884, %v3013
      %v3015 = vpop.f32.mrb[0].mxu0
      %v3016 = vadd.f32 %v2888, %v3015
      %3017 = vmatprep.mubr.bf16.mxu0 0
      %3018 = vmatmul.mubr.bf16.gmra.mrb[0].mxu0 %v2934
      %v3019 = vpop.f32.mrb[0].mxu0
      %v3020 = vadd.f32 %v2884, %v3019
      %v3021 = vpop.f32.mrb[0].mxu0
      %v3022 = vadd.f32 %v2888, %v3021
      %v3023 = vpop.f32.mrb[0].mxu0
      %v3024 = vadd.f32 %v2884, %v3023
      %v3025 = vpop.f32.mrb[0].mxu0
      %v3026 = vadd.f32 %v2888, %v3025
      %3027 = vmatprep.mubr.bf16.mxu0 0
      %3028 = vmatmul.mubr.bf16.gmra.mrb[0].mxu0 %v2937
      %v3029 = vpop.f32.mrb[0].mxu0
      %v3030 = vadd.f32 %v2884, %v3029
      %v3031 = vpop.f32.mrb[0].mxu0
      %v3032 = vadd.f32 %v2888, %v3031
      %v3033 = vpop.f32.mrb[0].mxu0
      %v3034 = vadd.f32 %v2884, %v3033
      %v3035 = vpop.f32.mrb[0].mxu0
      %v3036 = vadd.f32 %v2888, %v3035
      %3037 = vmatprep.mubr.bf16.mxu0 0
      %3038 = vmatmul.mubr.bf16.gmra.mrb[0].mxu0 %v2940
      %v3039 = vpop.f32.mrb[0].mxu0
      %v3040 = vadd.f32 %v2884, %v3039
      %v3041 = vpop.f32.mrb[0].mxu0
      %v3042 = vadd.f32 %v2888, %v3041
      %v3043 = vpop.f32.mrb[0].mxu0
      %v3044 = vadd.f32 %v2884, %v3043
      %v3045 = vpop.f32.mrb[0].mxu0
      %v3046 = vadd.f32 %v2888, %v3045
      %3047 = vmatprep.mubr.bf16.mxu0 0
      %3048 = vmatmul.mubr.bf16.gmra.mrb[0].mxu0 %v2943
      %v3049 = vpop.f32.mrb[0].mxu0
      %v3050 = vadd.f32 %v2884, %v3049
      %v3051 = vpop.f32.mrb[0].mxu0
      %v3052 = vadd.f32 %v2888, %v3051
      %v3053 = vpop.f32.mrb[0].mxu0
      %v3054 = vadd.f32 %v2884, %v3053
      %v3055 = vpop.f32.mrb[0].mxu0
      %v3056 = vadd.f32 %v2888, %v3055
      %3057 = vdwg.mxu0
      %v3058 = vmul.f32 %v2980, 0.5
      %v3059 = vmul.f32 %v2982, 0.5
      %v3060 = vmul.f32 %v2984, 0.5
      %v3061 = vmul.f32 %v2986, 0.5
      %v3062 = vmul.f32 %v2990, 0.5
      %v3063 = vmul.f32 %v2992, 0.5
      %v3064 = vmul.f32 %v2994, 0.5
      %v3065 = vmul.f32 %v2996, 0.5
      %v3066 = vmul.f32 %v3000, 0.5
      %v3067 = vmul.f32 %v3002, 0.5
      %v3068 = vmul.f32 %v3004, 0.5
      %v3069 = vmul.f32 %v3006, 0.5
      %v3070 = vmul.f32 %v3010, 0.5
      %v3071 = vmul.f32 %v3012, 0.5
      %v3072 = vmul.f32 %v3014, 0.5
      %v3073 = vmul.f32 %v3016, 0.5
      %v3074 = vmul.f32 %v3020, 0.5
      %v3075 = vmul.f32 %v3022, 0.5
      %v3076 = vmul.f32 %v3024, 0.5
      %v3077 = vmul.f32 %v3026, 0.5
      %v3078 = vmul.f32 %v3030, 0.5
      %v3079 = vmul.f32 %v3032, 0.5
      %v3080 = vmul.f32 %v3034, 0.5
      %v3081 = vmul.f32 %v3036, 0.5
      %v3082 = vmul.f32 %v3040, 0.5
      %v3083 = vmul.f32 %v3042, 0.5
      %v3084 = vmul.f32 %v3044, 0.5
      %v3085 = vmul.f32 %v3046, 0.5
      %v3086 = vmul.f32 %v3050, 0.5
      %v3087 = vmul.f32 %v3052, 0.5
      %v3088 = vmul.f32 %v3054, 0.5
      %v3089 = vmul.f32 %v3056, 0.5
      %v3090 = vmul.f32 %v2980, 0.70710677
      %v3091 = vmul.f32 %v2982, 0.70710677
      %v3092 = vmul.f32 %v2984, 0.70710677
      %v3093 = vmul.f32 %v2986, 0.70710677
      %v3094 = vmul.f32 %v2990, 0.70710677
      %v3095 = vmul.f32 %v2992, 0.70710677
      %v3096 = vmul.f32 %v2994, 0.70710677
      %v3097 = vmul.f32 %v2996, 0.70710677
      %v3098 = vmul.f32 %v3000, 0.70710677
      %v3099 = vmul.f32 %v3002, 0.70710677
      %v3100 = vmul.f32 %v3004, 0.70710677
      %v3101 = vmul.f32 %v3006, 0.70710677
      %v3102 = vmul.f32 %v3010, 0.70710677
      %v3103 = vmul.f32 %v3012, 0.70710677
      %v3104 = vmul.f32 %v3014, 0.70710677
      %v3105 = vmul.f32 %v3016, 0.70710677
      %v3106 = vmul.f32 %v3020, 0.70710677
      %v3107 = vmul.f32 %v3022, 0.70710677
      %v3108 = vmul.f32 %v3024, 0.70710677
      %v3109 = vmul.f32 %v3026, 0.70710677
      %v3110 = vmul.f32 %v3030, 0.70710677
      %v3111 = vmul.f32 %v3032, 0.70710677
      %v3112 = vmul.f32 %v3034, 0.70710677
      %v3113 = vmul.f32 %v3036, 0.70710677
      %v3114 = vmul.f32 %v3040, 0.70710677
      %v3115 = vmul.f32 %v3042, 0.70710677
      %v3116 = vmul.f32 %v3044, 0.70710677
      %v3117 = vmul.f32 %v3046, 0.70710677
      %v3118 = vmul.f32 %v3050, 0.70710677
      %v3119 = vmul.f32 %v3052, 0.70710677
      %v3120 = vmul.f32 %v3054, 0.70710677
      %v3121 = vmul.f32 %v3056, 0.70710677
      %v3122 = verf.f32.pop %v3090
      %v3123 = verf.f32.pop %v3091
      %v3124 = verf.f32.pop %v3092
      %v3125 = verf.f32.pop %v3093
      %v3126 = verf.f32.pop %v3094
      %v3127 = verf.f32.pop %v3095
      %v3128 = verf.f32.pop %v3096
      %v3129 = verf.f32.pop %v3097
      %v3130 = verf.f32.pop %v3098
      %v3131 = verf.f32.pop %v3099
      %v3132 = verf.f32.pop %v3100
      %v3133 = verf.f32.pop %v3101
      %v3134 = verf.f32.pop %v3102
      %v3135 = verf.f32.pop %v3103
      %v3136 = verf.f32.pop %v3104
      %v3137 = verf.f32.pop %v3105
      %v3138 = verf.f32.pop %v3106
      %v3139 = verf.f32.pop %v3107
      %v3140 = verf.f32.pop %v3108
      %v3141 = verf.f32.pop %v3109
      %v3142 = verf.f32.pop %v3110
      %v3143 = verf.f32.pop %v3111
      %v3144 = verf.f32.pop %v3112
      %v3145 = verf.f32.pop %v3113
      %v3146 = verf.f32.pop %v3114
      %v3147 = verf.f32.pop %v3115
      %v3148 = verf.f32.pop %v3116
      %v3149 = verf.f32.pop %v3117
      %v3150 = verf.f32.pop %v3118
      %v3151 = verf.f32.pop %v3119
      %v3152 = verf.f32.pop %v3120
      %v3153 = verf.f32.pop %v3121
      %v3154 = vadd.f32 %v3122, 1.0
      %v3155 = vadd.f32 %v3123, 1.0
      %v3156 = vadd.f32 %v3124, 1.0
      %v3157 = vadd.f32 %v3125, 1.0
      %v3158 = vadd.f32 %v3126, 1.0
      %v3159 = vadd.f32 %v3127, 1.0
      %v3160 = vadd.f32 %v3128, 1.0
      %v3161 = vadd.f32 %v3129, 1.0
      %v3162 = vadd.f32 %v3130, 1.0
      %v3163 = vadd.f32 %v3131, 1.0
      %v3164 = vadd.f32 %v3132, 1.0
      %v3165 = vadd.f32 %v3133, 1.0
      %v3166 = vadd.f32 %v3134, 1.0
      %v3167 = vadd.f32 %v3135, 1.0
      %v3168 = vadd.f32 %v3136, 1.0
      %v3169 = vadd.f32 %v3137, 1.0
      %v3170 = vadd.f32 %v3138, 1.0
      %v3171 = vadd.f32 %v3139, 1.0
      %v3172 = vadd.f32 %v3140, 1.0
      %v3173 = vadd.f32 %v3141, 1.0
      %v3174 = vadd.f32 %v3142, 1.0
      %v3175 = vadd.f32 %v3143, 1.0
      %v3176 = vadd.f32 %v3144, 1.0
      %v3177 = vadd.f32 %v3145, 1.0
      %v3178 = vadd.f32 %v3146, 1.0
      %v3179 = vadd.f32 %v3147, 1.0
      %v3180 = vadd.f32 %v3148, 1.0
      %v3181 = vadd.f32 %v3149, 1.0
      %v3182 = vadd.f32 %v3150, 1.0
      %v3183 = vadd.f32 %v3151, 1.0
      %v3184 = vadd.f32 %v3152, 1.0
      %v3185 = vadd.f32 %v3153, 1.0
      %v3186 = vmul.f32 %v3058, %v3154
      %v3187 = vmul.f32 %v3059, %v3155
      %v3188 = vmul.f32 %v3060, %v3156
      %v3189 = vmul.f32 %v3061, %v3157
      %v3190 = vmul.f32 %v3062, %v3158
      %v3191 = vmul.f32 %v3063, %v3159
      %v3192 = vmul.f32 %v3064, %v3160
      %v3193 = vmul.f32 %v3065, %v3161
      %v3194 = vmul.f32 %v3066, %v3162
      %v3195 = vmul.f32 %v3067, %v3163
      %v3196 = vmul.f32 %v3068, %v3164
      %v3197 = vmul.f32 %v3069, %v3165
      %v3198 = vmul.f32 %v3070, %v3166
      %v3199 = vmul.f32 %v3071, %v3167
      %v3200 = vmul.f32 %v3072, %v3168
      %v3201 = vmul.f32 %v3073, %v3169
      %v3202 = vmul.f32 %v3074, %v3170
      %v3203 = vmul.f32 %v3075, %v3171
      %v3204 = vmul.f32 %v3076, %v3172
      %v3205 = vmul.f32 %v3077, %v3173
      %v3206 = vmul.f32 %v3078, %v3174
      %v3207 = vmul.f32 %v3079, %v3175
      %v3208 = vmul.f32 %v3080, %v3176
      %v3209 = vmul.f32 %v3081, %v3177
      %v3210 = vmul.f32 %v3082, %v3178
      %v3211 = vmul.f32 %v3083, %v3179
      %v3212 = vmul.f32 %v3084, %v3180
      %v3213 = vmul.f32 %v3085, %v3181
      %v3214 = vmul.f32 %v3086, %v3182
      %v3215 = vmul.f32 %v3087, %v3183
      %v3216 = vmul.f32 %v3088, %v3184
      %v3217 = vmul.f32 %v3089, %v3185
      %v3218 = vpack.c.bf16 %v3188, %v3186
      %v3219 = vpack.c.bf16 %v3189, %v3187
      %v3220 = vpack.c.bf16 %v3192, %v3190
      %v3221 = vpack.c.bf16 %v3193, %v3191
      %v3222 = vpack.c.bf16 %v3196, %v3194
      %v3223 = vpack.c.bf16 %v3197, %v3195
      %v3224 = vpack.c.bf16 %v3200, %v3198
      %v3225 = vpack.c.bf16 %v3201, %v3199
      %v3226 = vpack.c.bf16 %v3204, %v3202
      %v3227 = vpack.c.bf16 %v3205, %v3203
      %v3228 = vpack.c.bf16 %v3208, %v3206
      %v3229 = vpack.c.bf16 %v3209, %v3207
      %v3230 = vpack.c.bf16 %v3212, %v3210
      %v3231 = vpack.c.bf16 %v3213, %v3211
      %v3232 = vpack.c.bf16 %v3216, %v3214
      %v3233 = vpack.c.bf16 %v3217, %v3215
      %s3234 = smul.u32 %s24, 24
      %s3235 = smul.addr %s3234, 4
      %s3236 = scalar_lea.vmem %s7, %s3235
      %v3237 = vld [vmem:[%s3236] sm:$0xf]
      %v3238 = vld [vmem:[%s3236 + $0x4] sm:$0xf]
      %v3239 = vld [vmem:[%s3236 + $0x8] sm:$0xf]
      %v3240 = vld [vmem:[%s3236 + $0xc] sm:$0xf]
      %v3241 = vld [vmem:[%s3236 + $0x10] sm:$0xf]
      %v3242 = vld [vmem:[%s3236 + $0x14] sm:$0xf]
      %v3243 = vld [vmem:[%s3236 + $0x18] sm:$0xf]
      %v3244 = vld [vmem:[%s3236 + $0x1c] sm:$0xf]
      %v3245 = vld [vmem:[%s3236 + $0x20] sm:$0xf]
      %v3246 = vld [vmem:[%s3236 + $0x24] sm:$0xf]
      %v3247 = vld [vmem:[%s3236 + $0x28] sm:$0xf]
      %v3248 = vld [vmem:[%s3236 + $0x2c] sm:$0xf]
      %v3249 = vld [vmem:[%s3236 + $0x30] sm:$0xf]
      %v3250 = vld [vmem:[%s3236 + $0x34] sm:$0xf]
      %v3251 = vld [vmem:[%s3236 + $0x38] sm:$0xf]
      %v3252 = vld [vmem:[%s3236 + $0x3c] sm:$0xf]
      %v3253 = vld [vmem:[%s3236 + $0x40] sm:$0xf]
      %v3254 = vld [vmem:[%s3236 + $0x44] sm:$0xf]
      %v3255 = vld [vmem:[%s3236 + $0x48] sm:$0xf]
      %v3256 = vld [vmem:[%s3236 + $0x4c] sm:$0xf]
      %v3257 = vld [vmem:[%s3236 + $0x50] sm:$0xf]
      %v3258 = vld [vmem:[%s3236 + $0x54] sm:$0xf]
      %v3259 = vld [vmem:[%s3236 + $0x58] sm:$0xf]
      %v3260 = vld [vmem:[%s3236 + $0x5c] sm:$0xf]
      %v3261 = vlaneseq
      %v3262 = vshrl.u32 %v3261, 7
      %v3263 = vsub.s32 5, %v3262
      %v3264 = vrot.slane %v377, %v3263
      %v3289 = vunpack.c.l.b16 %v3237
      %v3290 = vunpack.c.l.b16 %v3238
      %v3291 = vunpack.c.l.b16 %v3239
      %v3292 = vunpack.c.l.b16 %v3240
      %v3293 = vunpack.c.l.b16 %v3241
      %v3294 = vunpack.c.l.b16 %v3242
      %v3295 = vunpack.c.l.b16 %v3243
      %v3296 = vunpack.c.l.b16 %v3244
      %v3297 = vunpack.c.l.b16 %v3245
      %v3298 = vunpack.c.l.b16 %v3246
      %v3299 = vunpack.c.l.b16 %v3247
      %v3300 = vunpack.c.l.b16 %v3248
      %v3301 = vunpack.c.l.b16 %v3249
      %v3302 = vunpack.c.l.b16 %v3250
      %v3303 = vunpack.c.l.b16 %v3251
      %v3304 = vunpack.c.l.b16 %v3252
      %v3305 = vunpack.c.l.b16 %v3253
      %v3306 = vunpack.c.l.b16 %v3254
      %v3307 = vunpack.c.l.b16 %v3255
      %v3308 = vunpack.c.l.b16 %v3256
      %v3309 = vunpack.c.l.b16 %v3257
      %v3310 = vunpack.c.l.b16 %v3258
      %v3311 = vunpack.c.l.b16 %v3259
      %v3312 = vunpack.c.l.b16 %v3260
      %v3313 = vpack.c.b16 %v3290, %v3289
      %v3314 = vpack.c.b16 %v3292, %v3291
      %v3315 = vpack.c.b16 %v3294, %v3293
      %v3316 = vpack.c.b16 %v3296, %v3295
      %v3317 = vpack.c.b16 %v3298, %v3297
      %v3318 = vpack.c.b16 %v3300, %v3299
      %v3319 = vpack.c.b16 %v3302, %v3301
      %v3320 = vpack.c.b16 %v3304, %v3303
      %v3321 = vpack.c.b16 %v3306, %v3305
      %v3322 = vpack.c.b16 %v3308, %v3307
      %v3323 = vpack.c.b16 %v3310, %v3309
      %v3324 = vpack.c.b16 %v3312, %v3311
      %vm3337 = vcmask 523264
      %v3339 = vsel %vm3337, %v3219, 0
      %v3342 = vsel %vm3337, %v3221, 0
      %v3345 = vsel %vm3337, %v3223, 0
      %v3348 = vsel %vm3337, %v3225, 0
      %v3351 = vsel %vm3337, %v3227, 0
      %v3354 = vsel %vm3337, %v3229, 0
      %v3357 = vsel %vm3337, %v3231, 0
      %v3360 = vsel %vm3337, %v3233, 0
      %3362 = vmatprep.subr.bf16.mxu0 0
      %3363 = vmatpush1.bf16.msra.mxu0 %v3313
      %3364 = vmatprep.subr.bf16.mxu0 0
      %3365 = vmatpush1.bf16.msra.mxu0 %v3314
      %3366 = vmatprep.subr.bf16.mxu0 0
      %3367 = vmatpush1.bf16.msra.mxu0 %v3315
      %3368 = vmatprep.subr.bf16.mxu0 0
      %3369 = vmatpush1.bf16.msra.mxu0 %v3316
      %3370 = vmatprep.subr.bf16.mxu0 0
      %3371 = vmatpush1.bf16.msra.mxu0 %v3317
      %3372 = vmatprep.subr.bf16.mxu0 0
      %3373 = vmatpush1.bf16.msra.mxu0 %v3318
      %3374 = vmatprep.subr.bf16.mxu0 0
      %3375 = vmatpush1.bf16.msra.mxu0 %v3319
      %3376 = vmatprep.subr.bf16.mxu0 0
      %3377 = vmatpush1.bf16.msra.mxu0 %v3320
      %3378 = vmatprep.subr.bf16.mxu0 0
      %3379 = vmatpush1.bf16.msra.mxu0 %v3321
      %3380 = vmatprep.subr.bf16.mxu0 0
      %3381 = vmatpush1.bf16.msra.mxu0 %v3322
      %3382 = vmatprep.subr.bf16.mxu0 0
      %3383 = vmatpush1.bf16.msra.mxu0 %v3323
      %3384 = vmatprep.subr.bf16.mxu0 0
      %3385 = vmatpush1.bf16.msra.mxu0 %v3324
      %3386 = vmatprep.subr.bf16.mxu0 0
      %3387 = vmatpush1.bf16.msra.mxu0 0
      %3388 = vmatprep.subr.bf16.mxu0 0
      %3389 = vmatpush1.bf16.msra.mxu0 0
      %3390 = vmatprep.subr.bf16.mxu0 0
      %3391 = vmatpush1.bf16.msra.mxu0 0
      %3392 = vmatprep.subr.bf16.mxu0 0
      %3393 = vmatpush1.bf16.msra.mxu0 0
      %3394 = vmatprep.mubr.bf16.mxu0 %v3339
      %3395 = vmatmul.mubr.bf16.gmra.mrb[0].mxu0 %v3218
      %v3396 = vpop.f32.mrb[0].mxu0
      %v3397 = vadd.f32 %v3264, %v3396
      %v3398 = vpop.f32.mrb[0].mxu0
      %v3399 = vpop.f32.mrb[0].mxu0
      %v3400 = vadd.f32 %v3264, %v3399
      %v3401 = vpop.f32.mrb[0].mxu0
      %3402 = vmatprep.mubr.bf16.mxu0 %v3342
      %3403 = vmatmul.mubr.bf16.gmra.mrb[0].mxu0 %v3220
      %v3404 = vpop.f32.mrb[0].mxu0
      %v3405 = vadd.f32 %v3264, %v3404
      %v3406 = vpop.f32.mrb[0].mxu0
      %v3407 = vpop.f32.mrb[0].mxu0
      %v3408 = vadd.f32 %v3264, %v3407
      %v3409 = vpop.f32.mrb[0].mxu0
      %3410 = vmatprep.mubr.bf16.mxu0 %v3345
      %3411 = vmatmul.mubr.bf16.gmra.mrb[0].mxu0 %v3222
      %v3412 = vpop.f32.mrb[0].mxu0
      %v3413 = vadd.f32 %v3264, %v3412
      %v3414 = vpop.f32.mrb[0].mxu0
      %v3415 = vpop.f32.mrb[0].mxu0
      %v3416 = vadd.f32 %v3264, %v3415
      %v3417 = vpop.f32.mrb[0].mxu0
      %3418 = vmatprep.mubr.bf16.mxu0 %v3348
      %3419 = vmatmul.mubr.bf16.gmra.mrb[0].mxu0 %v3224
      %v3420 = vpop.f32.mrb[0].mxu0
      %v3421 = vadd.f32 %v3264, %v3420
      %v3422 = vpop.f32.mrb[0].mxu0
      %v3423 = vpop.f32.mrb[0].mxu0
      %v3424 = vadd.f32 %v3264, %v3423
      %v3425 = vpop.f32.mrb[0].mxu0
      %3426 = vmatprep.mubr.bf16.mxu0 %v3351
      %3427 = vmatmul.mubr.bf16.gmra.mrb[0].mxu0 %v3226
      %v3428 = vpop.f32.mrb[0].mxu0
      %v3429 = vadd.f32 %v3264, %v3428
      %v3430 = vpop.f32.mrb[0].mxu0
      %v3431 = vpop.f32.mrb[0].mxu0
      %v3432 = vadd.f32 %v3264, %v3431
      %v3433 = vpop.f32.mrb[0].mxu0
      %3434 = vmatprep.mubr.bf16.mxu0 %v3354
      %3435 = vmatmul.mubr.bf16.gmra.mrb[0].mxu0 %v3228
      %v3436 = vpop.f32.mrb[0].mxu0
      %v3437 = vadd.f32 %v3264, %v3436
      %v3438 = vpop.f32.mrb[0].mxu0
      %v3439 = vpop.f32.mrb[0].mxu0
      %v3440 = vadd.f32 %v3264, %v3439
      %v3441 = vpop.f32.mrb[0].mxu0
      %3442 = vmatprep.mubr.bf16.mxu0 %v3357
      %3443 = vmatmul.mubr.bf16.gmra.mrb[0].mxu0 %v3230
      %v3444 = vpop.f32.mrb[0].mxu0
      %v3445 = vadd.f32 %v3264, %v3444
      %v3446 = vpop.f32.mrb[0].mxu0
      %v3447 = vpop.f32.mrb[0].mxu0
      %v3448 = vadd.f32 %v3264, %v3447
      %v3449 = vpop.f32.mrb[0].mxu0
      %3450 = vmatprep.mubr.bf16.mxu0 %v3360
      %3451 = vmatmul.mubr.bf16.gmra.mrb[0].mxu0 %v3232
      %v3452 = vpop.f32.mrb[0].mxu0
      %v3453 = vadd.f32 %v3264, %v3452
      %v3454 = vpop.f32.mrb[0].mxu0
      %v3455 = vpop.f32.mrb[0].mxu0
      %v3456 = vadd.f32 %v3264, %v3455
      %v3457 = vpop.f32.mrb[0].mxu0
      %3458 = vdwg.mxu0
      %v3459 = vadd.f32 %v2598, %v3397
      %v3460 = vadd.f32 %v2599, %v3400
      %v3461 = vadd.f32 %v2600, %v3405
      %v3462 = vadd.f32 %v2601, %v3408
      %v3463 = vadd.f32 %v2602, %v3413
      %v3464 = vadd.f32 %v2603, %v3416
      %v3465 = vadd.f32 %v2604, %v3421
      %v3466 = vadd.f32 %v2605, %v3424
      %v3467 = vadd.f32 %v2606, %v3429
      %v3468 = vadd.f32 %v2607, %v3432
      %v3469 = vadd.f32 %v2608, %v3437
      %v3470 = vadd.f32 %v2609, %v3440
      %v3471 = vadd.f32 %v2610, %v3445
      %v3472 = vadd.f32 %v2611, %v3448
      %v3473 = vadd.f32 %v2612, %v3453
      %v3474 = vadd.f32 %v2613, %v3456
      %3475 = vst.msk [vmem:[%s319] sm:$0xff] %vm378, %v3459
      %3476 = vst.msk [vmem:[%s319 + $0x8] sm:$0xff] %vm378, %v3460
      %3477 = vst.msk [vmem:[%s319 + $0x10] sm:$0xff] %vm378, %v3461
      %3478 = vst.msk [vmem:[%s319 + $0x18] sm:$0xff] %vm378, %v3462
      %3479 = vst.msk [vmem:[%s319 + $0x20] sm:$0xff] %vm378, %v3463
      %3480 = vst.msk [vmem:[%s319 + $0x28] sm:$0xff] %vm378, %v3464
      %3481 = vst.msk [vmem:[%s319 + $0x30] sm:$0xff] %vm378, %v3465
      %3482 = vst.msk [vmem:[%s319 + $0x38] sm:$0xff] %vm378, %v3466
      %3483 = vst.msk [vmem:[%s319 + $0x40] sm:$0xff] %vm378, %v3467
      %3484 = vst.msk [vmem:[%s319 + $0x48] sm:$0xff] %vm378, %v3468
      %3485 = vst.msk [vmem:[%s319 + $0x50] sm:$0xff] %vm378, %v3469
      %3486 = vst.msk [vmem:[%s319 + $0x58] sm:$0xff] %vm378, %v3470
      %3487 = vst.msk [vmem:[%s319 + $0x60] sm:$0xff] %vm378, %v3471
      %3488 = vst.msk [vmem:[%s319 + $0x68] sm:$0xff] %vm378, %v3472
      %3489 = vst.msk [vmem:[%s319 + $0x70] sm:$0xff] %vm378, %v3473
      %3490 = vst.msk [vmem:[%s319 + $0x78] sm:$0xff] %vm378, %v3474
      %s3491 = smul.u32 16, %s23
      %p3492 = scmp.lt.s32.totalorder %s3491, 31
      %s3493 = scalar_select %p3492, %s3491, 31
      %s3494 = smul.addr %s3493, 8
      %s3495 = scalar_lea.vmem %s8, %s3494
      // Predicated region
      $region57: #{vit_forward.4} parent=51 // pred_check
        %p3496 = pneg %p222
      $region58: #{vit_forward.4} parent=51 // pred_check_branch
        %3498 = sbr.rel (%p3496) target = $region60
      $region59: #{vit_forward.4} parent=51 // pred_region
        %s3499 = smul.u32 16, %s23
      $region60: #{vit_forward.4} parent=51 // pred_fallthru
        _
    $region52: #{vit_forward.4} parent=5 // pred_fallthru
      _
    %p3500 = scmp.le.s32.totalorder 2, %s14
    // Predicated region
    $region61: #{vit_forward.4} parent=5 // pred_check
      %p3501 = pneg %p3500
    $region62: #{vit_forward.4} parent=5 // pred_check_branch
      %3503 = sbr.rel (%p3501) target = $region64
    $region63: #{vit_forward.4} parent=5 // pred_region
      %s3504 = ssub.s32 %s14, 2
      // Predicated region
      $region65: #{vit_forward.4} parent=63 // pred_check
        %p3505 = pneg %p228
      $region66: #{vit_forward.4} parent=63 // pred_check_branch
        %3507 = sbr.rel (%p3505) target = $region68
      $region67: #{vit_forward.4} parent=63 // pred_region
        %s3508 = smul.u32 16, %s25
        %p3509 = scmp.lt.s32.totalorder %s3508, 31
        %s3510 = scalar_select %p3509, %s3508, 31
        %s3511 = smul.addr %s3510, 8
        %s3512 = scalar_lea.vmem %s8, %s3511
      $region68: #{vit_forward.4} parent=63 // pred_fallthru
        _
    $region64: #{vit_forward.4} parent=5 // pred_fallthru
      _
  $region6: #{vit_forward.4} parent=0 // loop_footer
    %s18 = sadd.s32 1, %s14
  $region7: #{vit_forward.4} parent=0 // loop_footer_branch
    %13 = sbr.rel target = $region3
  $region8: #{vit_forward.4} parent=0 // loop_exit
    _

</llo_original>
